<compile_context>
chip_gen: v5e
topology: v5e:2x2
jax: 0.10.0
libtpu: 0.0.40
codegen_flags: <defaults>
</compile_context>

<pallas_src>
import jax
import jax.numpy as jnp
from jax import lax
from jax.experimental import pallas as pl
from jax.experimental.pallas import tpu as pltpu


def _round_up(x, m):
    return (x + m - 1) // m * m


def _make_bottleneck_kernel(H, W, P, stride, has_downsample):
    """Fused: conv1(1x1)+bn1+relu -> conv2(3x3,pad1)+bn2+relu -> avgpool(stride)
    -> conv3(1x1)+bn3 -> (+ downsample identity) -> relu.  One image per grid step.
    BN scales are pre-folded into the weights; only bias+relu happen here."""
    HW = H * W
    Ho, Wo = H // stride, W // stride
    HoWo = Ho * Wo

    def kernel(*refs):
        idx = 0
        x_ref = refs[idx]; idx += 1
        w1_ref = refs[idx]; idx += 1
        b1_ref = refs[idx]; idx += 1
        w2_ref = refs[idx]; idx += 1
        b2_ref = refs[idx]; idx += 1
        w3_ref = refs[idx]; idx += 1
        b3_ref = refs[idx]; idx += 1
        xp_ref = None
        if stride > 1:
            xp_ref = refs[idx]; idx += 1
        wd_ref = bd_ref = None
        if has_downsample:
            wd_ref = refs[idx]; idx += 1
            bd_ref = refs[idx]; idx += 1
        o_ref = refs[idx]; idx += 1
        pad_ref = refs[idx]; idx += 1
        pool_ref = refs[idx] if stride > 1 else None

        x2d = x_ref[0]                                            # (HW, Cx) bf16

        # ---- conv1 (1x1, bn1 scale folded) + bias + relu ----
        h1 = jnp.dot(x2d, w1_ref[...], preferred_element_type=jnp.float32)
        h1 = jnp.maximum(h1 + b1_ref[...], 0.0)                   # (HW, P) f32

        # ---- conv2 (3x3, padding=1) via im2col + one K=9P matmul ----
        pad_ref[...] = jnp.zeros((H + 2, W + 2, P), jnp.bfloat16)
        pad_ref[1:H + 1, 1:W + 1, :] = h1.reshape(H, W, P).astype(jnp.bfloat16)
        taps = [pad_ref[ky:ky + H, kx:kx + W, :].reshape(HW, P)
                for ky in range(3) for kx in range(3)]
        stacked = jnp.concatenate(taps, axis=1)                   # (HW, 9P) bf16
        h2 = jnp.dot(stacked, w2_ref[...], preferred_element_type=jnp.float32)
        h2 = jnp.maximum(h2 + b2_ref[...], 0.0)                   # (HW, P) f32

        # ---- avgpool(stride) on the main path (no pooling matrix) ----
        if stride > 1:
            # pool along H: contiguous row-block adds
            h2r = h2.reshape(Ho, stride * W, P)
            hp = h2r[:, 0:W, :]
            for sy in range(1, stride):
                hp = hp + h2r[:, sy * W:(sy + 1) * W, :]
            # pool along W: store then sublane-strided reads (flat stride = stride)
            pool_ref[...] = hp.reshape(Ho * W, P)
            pooled = pool_ref[pl.ds(0, HoWo, stride), :]
            for sx in range(1, stride):
                pooled = pooled + pool_ref[pl.ds(sx, HoWo, stride), :]
            h2p = (pooled * (1.0 / (stride * stride))).astype(jnp.bfloat16)
        else:
            h2p = h2.astype(jnp.bfloat16)                         # (HoWo, P)

        # ---- conv3 (1x1, bn3 scale folded) + bias ----
        h3 = jnp.dot(h2p, w3_ref[...], preferred_element_type=jnp.float32)
        h3 = h3 + b3_ref[...]                                     # (HoWo, C4p)

        # ---- identity / downsample branch ----
        if has_downsample:
            idn_in = xp_ref[0] if stride > 1 else x2d             # pooled x or x
            idn = jnp.dot(idn_in, wd_ref[...], preferred_element_type=jnp.float32)
            idn = idn + bd_ref[...]
        else:
            idn = x2d.astype(jnp.float32)                         # Cin == C4 (padded)

        o_ref[0] = jnp.maximum(h3 + idn, 0.0)

    return kernel


def _fold_bn(params, prefix, eps=1e-5):
    g = params[prefix + "_gamma"]
    b = params[prefix + "_beta"]
    m = params[prefix + "_mean"]
    v = params[prefix + "_var"]
    s = g / jnp.sqrt(v + eps)
    return s, b - m * s


def bottleneck_forward(x_nchw, params, stride):
    N, Cin, H, W = x_nchw.shape
    P = params["conv1_w"].shape[0]
    C4 = 4 * P
    assert H % stride == 0 and W % stride == 0, "spatial dims must divide stride"
    Ho, Wo = H // stride, W // stride
    HW, HoWo = H * W, Ho * Wo
    has_downsample = (stride > 1) or (Cin != C4)
    C4p = _round_up(C4, 128)            # lane-dense output stores
    Cx = Cin if has_downsample else C4p  # pad x channels when it is the residual

    s1, b1 = _fold_bn(params, "bn1")
    s2, b2 = _fold_bn(params, "bn2")
    s3, b3 = _fold_bn(params, "bn3")

    # fold BN scales into conv weights host-side, cast to bf16 for the MXU
    w1 = (params["conv1_w"][:, :, 0, 0] * s1[:, None]).T                    # (Cin, P)
    if Cx != Cin:
        w1 = jnp.pad(w1, ((0, Cx - Cin), (0, 0)))
    w2 = jnp.transpose(params["conv2_w"], (2, 3, 1, 0)).reshape(9 * P, P)   # (9P, P)
    w2 = w2 * s2[None, :]
    w3 = params["conv3_w"][:, :, 0, 0].T * s3[None, :]                      # (P, C4)
    w3 = jnp.pad(w3, ((0, 0), (0, C4p - C4)))
    b3p = jnp.pad(b3, (0, C4p - C4))
    w1 = w1.astype(jnp.bfloat16)
    w2 = w2.astype(jnp.bfloat16)
    w3 = w3.astype(jnp.bfloat16)

    x_nhwc = jnp.transpose(x_nchw, (0, 2, 3, 1))                            # (N, H, W, Cin)
    x_flat = x_nhwc.reshape(N, HW, Cin)
    if Cx != Cin:
        x_flat = jnp.pad(x_flat, ((0, 0), (0, 0), (0, Cx - Cin)))
    x_flat = x_flat.astype(jnp.bfloat16)

    inputs = [x_flat, w1, b1.reshape(1, P), w2, b2.reshape(1, P),
              w3, b3p.reshape(1, C4p)]
    in_specs = [
        pl.BlockSpec((1, HW, Cx), lambda n: (n, 0, 0)),
        pl.BlockSpec((Cx, P), lambda n: (0, 0)),
        pl.BlockSpec((1, P), lambda n: (0, 0)),
        pl.BlockSpec((9 * P, P), lambda n: (0, 0)),
        pl.BlockSpec((1, P), lambda n: (0, 0)),
        pl.BlockSpec((P, C4p), lambda n: (0, 0)),
        pl.BlockSpec((1, C4p), lambda n: (0, 0)),
    ]

    if stride > 1:
        # identity-branch avgpool: tiny memory-bound reshape-mean, done in the wrapper
        xp = x_nhwc.reshape(N, Ho, stride, Wo, stride, Cin).mean(axis=(2, 4))
        xp = xp.reshape(N, HoWo, Cin).astype(jnp.bfloat16)
        inputs.append(xp)
        in_specs.append(pl.BlockSpec((1, HoWo, Cin), lambda n: (n, 0, 0)))

    if has_downsample:
        sd, bd = _fold_bn(params, "bnd")
        wd = (params["convd_w"][:, :, 0, 0] * sd[:, None]).T                # (Cin, C4)
        wd = jnp.pad(wd, ((0, 0), (0, C4p - C4))).astype(jnp.bfloat16)
        bdp = jnp.pad(bd, (0, C4p - C4))
        inputs += [wd, bdp.reshape(1, C4p)]
        in_specs += [pl.BlockSpec((Cin, C4p), lambda n: (0, 0)),
                     pl.BlockSpec((1, C4p), lambda n: (0, 0))]

    scratch_shapes = [pltpu.VMEM((H + 2, W + 2, P), jnp.bfloat16)]
    if stride > 1:
        scratch_shapes.append(pltpu.VMEM((Ho * W, P), jnp.float32))

    # explicit VMEM budget: block double-buffering + weights + scratch + live temps
    est = 2 * (HW * Cx * 2 + HoWo * C4p * 4)
    est += 2 * ((Cx * P + 9 * P * P + P * C4p) * 2 + (2 * P + C4p) * 4)
    if stride > 1:
        est += 2 * HoWo * Cin * 2 + Ho * W * P * 4
    if has_downsample:
        est += 2 * (Cin * C4p * 2 + C4p * 4)
    est += (H + 2) * (W + 2) * P * 2
    est += HW * (4 * P + 2 * 9 * P + 4 * P) + 2 * HoWo * C4p * 4
    vmem_limit = int(min(64 * 2 ** 20, max(32 * 2 ** 20, 2 * est)))

    kernel = _make_bottleneck_kernel(H, W, P, stride, has_downsample)

    out_flat = pl.pallas_call(
        kernel,
        out_shape=jax.ShapeDtypeStruct((N, HoWo, C4p), jnp.float32),
        grid_spec=pltpu.PrefetchScalarGridSpec(
            num_scalar_prefetch=0,
            grid=(N,),
            in_specs=in_specs,
            out_specs=pl.BlockSpec((1, HoWo, C4p), lambda n: (n, 0, 0)),
            scratch_shapes=scratch_shapes,
        ),
        compiler_params=pltpu.CompilerParams(
            dimension_semantics=("parallel",),
            vmem_limit_bytes=vmem_limit,
        ),
    )(*inputs)

    out = out_flat[:, :, :C4].reshape(N, Ho, Wo, C4)
    return jnp.transpose(out, (0, 3, 1, 2))                                 # back to NCHW


# ------------------------- pure-JAX reference (for checking) -------------------------
def bottleneck_reference(x, params, stride, eps=1e-5):
    def bn(h, prefix):
        g = params[prefix + "_gamma"].reshape(1, -1, 1, 1)
        b = params[prefix + "_beta"].reshape(1, -1, 1, 1)
        m = params[prefix + "_mean"].reshape(1, -1, 1, 1)
        v = params[prefix + "_var"].reshape(1, -1, 1, 1)
        s = g / jnp.sqrt(v + eps)
        return h * s + (b - m * s)

    def conv(h, w, padding):
        return lax.conv_general_dilated(h, w, (1, 1), padding,
                                        dimension_numbers=("NCHW", "OIHW", "NCHW"))

    def avgpool(h, s):
        if s == 1:
            return h
        n, c, hh, ww = h.shape
        return h.reshape(n, c, hh // s, s, ww // s, s).mean(axis=(3, 5))

    out = jax.nn.relu(bn(conv(x, params["conv1_w"], "VALID"), "bn1"))
    out = jax.nn.relu(bn(conv(out, params["conv2_w"], ((1, 1), (1, 1))), "bn2"))
    out = avgpool(out, stride)
    out = bn(conv(out, params["conv3_w"], "VALID"), "bn3")
    if stride > 1 or x.shape[1] != params["conv3_w"].shape[0]:
        idn = bn(conv(avgpool(x, stride), params["convd_w"], "VALID"), "bnd")
    else:
        idn = x
    return jax.nn.relu(out + idn)


# ------------------------------ deterministic parameters ------------------------------
def init_params(key, inplanes, planes, stride):
    C4 = 4 * planes
    has_downsample = (stride > 1) or (inplanes != C4)
    keys = iter(jax.random.split(key, 32))
    p = {}

    def conv_w(shape):
        return 0.1 * jax.random.normal(next(keys), shape, jnp.float32)

    def bn(prefix, c):
        p[prefix + "_gamma"] = 1.0 + 0.1 * jax.random.normal(next(keys), (c,), jnp.float32)
        p[prefix + "_beta"] = 0.1 * jax.random.normal(next(keys), (c,), jnp.float32)
        p[prefix + "_mean"] = 0.1 * jax.random.normal(next(keys), (c,), jnp.float32)
        p[prefix + "_var"] = jax.random.uniform(next(keys), (c,), jnp.float32, 0.5, 1.5)

    p["conv1_w"] = conv_w((planes, inplanes, 1, 1)); bn("bn1", planes)
    p["conv2_w"] = conv_w((planes, planes, 3, 3));   bn("bn2", planes)
    p["conv3_w"] = conv_w((C4, planes, 1, 1));       bn("bn3", C4)
    if has_downsample:
        p["convd_w"] = conv_w((C4, inplanes, 1, 1)); bn("bnd", C4)
    return p


if __name__ == "__main__":
    key = jax.random.PRNGKey(0)
    kx1, kp1, kx2, kp2, kx3, kp3 = jax.random.split(key, 6)

    # tolerances are loose because the kernel runs its matmuls in bf16 on the MXU
    ATOL = RTOL = 5e-2

    # config 1: stride=1, downsample triggered by channel mismatch (inplanes != 4*planes)
    N, Cin, H, W, planes, stride = 2, 8, 16, 16, 4, 1
    x = jax.random.normal(kx1, (N, Cin, H, W), jnp.float32)
    params = init_params(kp1, Cin, planes, stride)
    out = jax.block_until_ready(bottleneck_forward(x, params, stride))
    ref = bottleneck_reference(x, params, stride)
    assert out.shape == (N, 4 * planes, H, W), out.shape
    assert jnp.allclose(out, ref, atol=ATOL, rtol=RTOL), float(jnp.max(jnp.abs(out - ref)))

    # config 2: stride=2 (avgpool in the main path and in the downsample branch)
    N, Cin, H, W, planes, stride = 2, 16, 16, 16, 4, 2
    x = jax.random.normal(kx2, (N, Cin, H, W), jnp.float32)
    params = init_params(kp2, Cin, planes, stride)
    out = jax.block_until_ready(bottleneck_forward(x, params, stride))
    ref = bottleneck_reference(x, params, stride)
    assert out.shape == (N, 4 * planes, H // 2, W // 2), out.shape
    assert jnp.allclose(out, ref, atol=ATOL, rtol=RTOL), float(jnp.max(jnp.abs(out - ref)))

    # config 3: stride=1, no downsample (inplanes == 4*planes) -> raw residual add
    N, Cin, H, W, planes, stride = 2, 16, 16, 16, 4, 1
    x = jax.random.normal(kx3, (N, Cin, H, W), jnp.float32)
    params = init_params(kp3, Cin, planes, stride)
    out = jax.block_until_ready(bottleneck_forward(x, params, stride))
    ref = bottleneck_reference(x, params, stride)
    assert out.shape == (N, 4 * planes, H, W), out.shape
    assert jnp.allclose(out, ref, atol=ATOL, rtol=RTOL), float(jnp.max(jnp.abs(out - ref)))

    print("KERNEL_OK")
</pallas_src>

<mosaic_0001>
module attributes {stable_mosaic.version = 11 : i64} {
  func.func @kernel(%arg0: i32, %arg1: memref<1x256x8xbf16, #tpu.memory_space<vmem>>, %arg2: memref<8x4xbf16, #tpu.memory_space<vmem>>, %arg3: memref<1x4xf32, #tpu.memory_space<vmem>>, %arg4: memref<36x4xbf16, #tpu.memory_space<vmem>>, %arg5: memref<1x4xf32, #tpu.memory_space<vmem>>, %arg6: memref<4x128xbf16, #tpu.memory_space<vmem>>, %arg7: memref<1x128xf32, #tpu.memory_space<vmem>>, %arg8: memref<8x128xbf16, #tpu.memory_space<vmem>>, %arg9: memref<1x128xf32, #tpu.memory_space<vmem>>, %arg10: memref<1x256x128xf32, #tpu.memory_space<vmem>>, %arg11: memref<18x18x4xbf16, #tpu.memory_space<vmem>>) attributes {dimension_semantics = [#tpu.dimension_semantics<parallel>], iteration_bounds = array<i64: 2>, scalar_prefetch = 0 : i64, scratch_operands = 1 : i64, tpu.core_type = #tpu.core_type<tc>, window_params = [{transform_indices = @transform_0, window_bounds = array<i64: 1, 256, 8>}, {pipeline_mode = #tpu.pipeline_mode<synchronous>, transform_indices = @transform_1, window_bounds = array<i64: 8, 4>}, {pipeline_mode = #tpu.pipeline_mode<synchronous>, transform_indices = @transform_2, window_bounds = array<i64: 1, 4>}, {pipeline_mode = #tpu.pipeline_mode<synchronous>, transform_indices = @transform_3, window_bounds = array<i64: 36, 4>}, {pipeline_mode = #tpu.pipeline_mode<synchronous>, transform_indices = @transform_4, window_bounds = array<i64: 1, 4>}, {pipeline_mode = #tpu.pipeline_mode<synchronous>, transform_indices = @transform_5, window_bounds = array<i64: 4, 128>}, {pipeline_mode = #tpu.pipeline_mode<synchronous>, transform_indices = @transform_6, window_bounds = array<i64: 1, 128>}, {pipeline_mode = #tpu.pipeline_mode<synchronous>, transform_indices = @transform_7, window_bounds = array<i64: 8, 128>}, {pipeline_mode = #tpu.pipeline_mode<synchronous>, transform_indices = @transform_8, window_bounds = array<i64: 1, 128>}, {transform_indices = @transform_9, window_bounds = array<i64: 1, 256, 128>}]} {
    %c0 = arith.constant 0 : index
    %c0_0 = arith.constant 0 : index
    %c0_1 = arith.constant 0 : index
    %0 = vector.load %arg1[%c0, %c0_0, %c0_1] : memref<1x256x8xbf16, #tpu.memory_space<vmem>>, vector<1x256x8xbf16>
    %1 = vector.shape_cast %0 : vector<1x256x8xbf16> to vector<256x8xbf16>
    %c0_2 = arith.constant 0 : index
    %c0_3 = arith.constant 0 : index
    %2 = vector.load %arg2[%c0_2, %c0_3] : memref<8x4xbf16, #tpu.memory_space<vmem>>, vector<8x4xbf16>
    %cst = arith.constant dense<0.000000e+00> : vector<256x4xf32>
    %3 = tpu.matmul %1, %2, %cst {dimension_numbers = #tpu.dot_dimension_numbers<[1], [0], [0], [1], [0, 0, 1, 1], [], []>} : vector<256x8xbf16>, vector<8x4xbf16>, vector<256x4xf32> -> vector<256x4xf32>
    %c0_4 = arith.constant 0 : index
    %c0_5 = arith.constant 0 : index
    %4 = vector.load %arg3[%c0_4, %c0_5] : memref<1x4xf32, #tpu.memory_space<vmem>>, vector<1x4xf32>
    %5 = vector.broadcast %4 : vector<1x4xf32> to vector<256x4xf32>
    %6 = arith.addf %3, %5 : vector<256x4xf32>
    %cst_6 = arith.constant 0.000000e+00 : f32
    %7 = vector.broadcast %cst_6 : f32 to vector<256x4xf32>
    %8 = arith.maximumf %6, %7 : vector<256x4xf32>
    %cst_7 = arith.constant 0.000000e+00 : bf16
    %9 = vector.broadcast %cst_7 : bf16 to vector<18x18x4xbf16>
    %c0_8 = arith.constant 0 : index
    %c0_9 = arith.constant 0 : index
    %c0_10 = arith.constant 0 : index
    %10 = vector.load %arg11[%c0_8, %c0_9, %c0_10] : memref<18x18x4xbf16, #tpu.memory_space<vmem>>, vector<18x18x4xbf16>
    tpu.vector_store %arg11[%c0_8, %c0_9, %c0_10], %9 {strides = array<i32>} : memref<18x18x4xbf16, #tpu.memory_space<vmem>>, vector<18x18x4xbf16>,
    %11 = vector.shape_cast %8 : vector<256x4xf32> to vector<16x16x4xf32>
    %12 = arith.truncf %11 : vector<16x16x4xf32> to vector<16x16x4xbf16>
    %c1 = arith.constant 1 : index
    %c1_11 = arith.constant 1 : index
    %c0_12 = arith.constant 0 : index
    %13 = vector.load %arg11[%c1, %c1_11, %c0_12] : memref<18x18x4xbf16, #tpu.memory_space<vmem>>, vector<16x16x4xbf16>
    tpu.vector_store %arg11[%c1, %c1_11, %c0_12], %12 {strides = array<i32>} : memref<18x18x4xbf16, #tpu.memory_space<vmem>>, vector<16x16x4xbf16>,
    %c0_13 = arith.constant 0 : index
    %c0_14 = arith.constant 0 : index
    %c0_15 = arith.constant 0 : index
    %14 = vector.load %arg11[%c0_13, %c0_14, %c0_15] : memref<18x18x4xbf16, #tpu.memory_space<vmem>>, vector<16x16x4xbf16>
    %15 = vector.shape_cast %14 : vector<16x16x4xbf16> to vector<256x4xbf16>
    %c0_16 = arith.constant 0 : index
    %c1_17 = arith.constant 1 : index
    %c0_18 = arith.constant 0 : index
    %16 = vector.load %arg11[%c0_16, %c1_17, %c0_18] : memref<18x18x4xbf16, #tpu.memory_space<vmem>>, vector<16x16x4xbf16>
    %17 = vector.shape_cast %16 : vector<16x16x4xbf16> to vector<256x4xbf16>
    %c0_19 = arith.constant 0 : index
    %c2 = arith.constant 2 : index
    %c0_20 = arith.constant 0 : index
    %18 = vector.load %arg11[%c0_19, %c2, %c0_20] : memref<18x18x4xbf16, #tpu.memory_space<vmem>>, vector<16x16x4xbf16>
    %19 = vector.shape_cast %18 : vector<16x16x4xbf16> to vector<256x4xbf16>
    %c1_21 = arith.constant 1 : index
    %c0_22 = arith.constant 0 : index
    %c0_23 = arith.constant 0 : index
    %20 = vector.load %arg11[%c1_21, %c0_22, %c0_23] : memref<18x18x4xbf16, #tpu.memory_space<vmem>>, vector<16x16x4xbf16>
    %21 = vector.shape_cast %20 : vector<16x16x4xbf16> to vector<256x4xbf16>
    %c1_24 = arith.constant 1 : index
    %c1_25 = arith.constant 1 : index
    %c0_26 = arith.constant 0 : index
    %22 = vector.load %arg11[%c1_24, %c1_25, %c0_26] : memref<18x18x4xbf16, #tpu.memory_space<vmem>>, vector<16x16x4xbf16>
    %23 = vector.shape_cast %22 : vector<16x16x4xbf16> to vector<256x4xbf16>
    %c1_27 = arith.constant 1 : index
    %c2_28 = arith.constant 2 : index
    %c0_29 = arith.constant 0 : index
    %24 = vector.load %arg11[%c1_27, %c2_28, %c0_29] : memref<18x18x4xbf16, #tpu.memory_space<vmem>>, vector<16x16x4xbf16>
    %25 = vector.shape_cast %24 : vector<16x16x4xbf16> to vector<256x4xbf16>
    %c2_30 = arith.constant 2 : index
    %c0_31 = arith.constant 0 : index
    %c0_32 = arith.constant 0 : index
    %26 = vector.load %arg11[%c2_30, %c0_31, %c0_32] : memref<18x18x4xbf16, #tpu.memory_space<vmem>>, vector<16x16x4xbf16>
    %27 = vector.shape_cast %26 : vector<16x16x4xbf16> to vector<256x4xbf16>
    %c2_33 = arith.constant 2 : index
    %c1_34 = arith.constant 1 : index
    %c0_35 = arith.constant 0 : index
    %28 = vector.load %arg11[%c2_33, %c1_34, %c0_35] : memref<18x18x4xbf16, #tpu.memory_space<vmem>>, vector<16x16x4xbf16>
    %29 = vector.shape_cast %28 : vector<16x16x4xbf16> to vector<256x4xbf16>
    %c2_36 = arith.constant 2 : index
    %c2_37 = arith.constant 2 : index
    %c0_38 = arith.constant 0 : index
    %30 = vector.load %arg11[%c2_36, %c2_37, %c0_38] : memref<18x18x4xbf16, #tpu.memory_space<vmem>>, vector<16x16x4xbf16>
    %31 = vector.shape_cast %30 : vector<16x16x4xbf16> to vector<256x4xbf16>
    %32 = tpu.concatenate %15, %17, %19, %21, %23, %25, %27, %29, %31 in 1 : vector<256x4xbf16>, vector<256x4xbf16>, vector<256x4xbf16>, vector<256x4xbf16>, vector<256x4xbf16>, vector<256x4xbf16>, vector<256x4xbf16>, vector<256x4xbf16>, vector<256x4xbf16> -> vector<256x36xbf16>
    %c0_39 = arith.constant 0 : index
    %c0_40 = arith.constant 0 : index
    %33 = vector.load %arg4[%c0_39, %c0_40] : memref<36x4xbf16, #tpu.memory_space<vmem>>, vector<36x4xbf16>
    %cst_41 = arith.constant dense<0.000000e+00> : vector<256x4xf32>
    %34 = tpu.matmul %32, %33, %cst_41 {dimension_numbers = #tpu.dot_dimension_numbers<[1], [0], [0], [1], [0, 0, 1, 1], [], []>} : vector<256x36xbf16>, vector<36x4xbf16>, vector<256x4xf32> -> vector<256x4xf32>
    %c0_42 = arith.constant 0 : index
    %c0_43 = arith.constant 0 : index
    %35 = vector.load %arg5[%c0_42, %c0_43] : memref<1x4xf32, #tpu.memory_space<vmem>>, vector<1x4xf32>
    %36 = vector.broadcast %35 : vector<1x4xf32> to vector<256x4xf32>
    %37 = arith.addf %34, %36 : vector<256x4xf32>
    %cst_44 = arith.constant 0.000000e+00 : f32
    %38 = vector.broadcast %cst_44 : f32 to vector<256x4xf32>
    %39 = arith.maximumf %37, %38 : vector<256x4xf32>
    %40 = arith.truncf %39 : vector<256x4xf32> to vector<256x4xbf16>
    %c0_45 = arith.constant 0 : index
    %c0_46 = arith.constant 0 : index
    %41 = vector.load %arg6[%c0_45, %c0_46] : memref<4x128xbf16, #tpu.memory_space<vmem>>, vector<4x128xbf16>
    %cst_47 = arith.constant dense<0.000000e+00> : vector<256x128xf32>
    %42 = tpu.matmul %40, %41, %cst_47 {dimension_numbers = #tpu.dot_dimension_numbers<[1], [0], [0], [1], [0, 0, 1, 1], [], []>} : vector<256x4xbf16>, vector<4x128xbf16>, vector<256x128xf32> -> vector<256x128xf32>
    %c0_48 = arith.constant 0 : index
    %c0_49 = arith.constant 0 : index
    %43 = vector.load %arg7[%c0_48, %c0_49] : memref<1x128xf32, #tpu.memory_space<vmem>>, vector<1x128xf32>
    %44 = vector.broadcast %43 : vector<1x128xf32> to vector<256x128xf32>
    %45 = arith.addf %42, %44 : vector<256x128xf32>
    %c0_50 = arith.constant 0 : index
    %c0_51 = arith.constant 0 : index
    %46 = vector.load %arg8[%c0_50, %c0_51] : memref<8x128xbf16, #tpu.memory_space<vmem>>, vector<8x128xbf16>
    %cst_52 = arith.constant dense<0.000000e+00> : vector<256x128xf32>
    %47 = tpu.matmul %1, %46, %cst_52 {dimension_numbers = #tpu.dot_dimension_numbers<[1], [0], [0], [1], [0, 0, 1, 1], [], []>} : vector<256x8xbf16>, vector<8x128xbf16>, vector<256x128xf32> -> vector<256x128xf32>
    %c0_53 = arith.constant 0 : index
    %c0_54 = arith.constant 0 : index
    %48 = vector.load %arg9[%c0_53, %c0_54] : memref<1x128xf32, #tpu.memory_space<vmem>>, vector<1x128xf32>
    %49 = vector.broadcast %48 : vector<1x128xf32> to vector<256x128xf32>
    %50 = arith.addf %47, %49 : vector<256x128xf32>
    %51 = arith.addf %45, %50 : vector<256x128xf32>
    %cst_55 = arith.constant 0.000000e+00 : f32
    %52 = vector.broadcast %cst_55 : f32 to vector<256x128xf32>
    %53 = arith.maximumf %51, %52 : vector<256x128xf32>
    %c0_56 = arith.constant 0 : index
    %c0_57 = arith.constant 0 : index
    %c0_58 = arith.constant 0 : index
    %54 = vector.load %arg10[%c0_56, %c0_57, %c0_58] : memref<1x256x128xf32, #tpu.memory_space<vmem>>, vector<1x256x128xf32>
    %55 = vector.shape_cast %54 : vector<1x256x128xf32> to vector<256x128xf32>
    %56 = vector.shape_cast %53 : vector<256x128xf32> to vector<1x256x128xf32>
    tpu.vector_store %arg10[%c0_56, %c0_57, %c0_58], %56 {strides = array<i32>} : memref<1x256x128xf32, #tpu.memory_space<vmem>>, vector<1x256x128xf32>,
    return
  }
  func.func @transform_0(%arg0: i32) -> (i32, i32, i32) {
    %c0_i32 = arith.constant 0 : i32
    %c0_i32_0 = arith.constant 0 : i32
    %c0_i32_1 = arith.constant 0 : i32
    return %arg0, %c0_i32, %c0_i32_0 : i32, i32, i32
  }
  func.func @transform_1(%arg0: i32) -> (i32, i32) {
    %c0_i32 = arith.constant 0 : i32
    %c0_i32_0 = arith.constant 0 : i32
    %c0_i32_1 = arith.constant 0 : i32
    return %c0_i32, %c0_i32_0 : i32, i32
  }
  func.func @transform_2(%arg0: i32) -> (i32, i32) {
    %c0_i32 = arith.constant 0 : i32
    %c0_i32_0 = arith.constant 0 : i32
    %c0_i32_1 = arith.constant 0 : i32
    return %c0_i32, %c0_i32_0 : i32, i32
  }
  func.func @transform_3(%arg0: i32) -> (i32, i32) {
    %c0_i32 = arith.constant 0 : i32
    %c0_i32_0 = arith.constant 0 : i32
    %c0_i32_1 = arith.constant 0 : i32
    return %c0_i32, %c0_i32_0 : i32, i32
  }
  func.func @transform_4(%arg0: i32) -> (i32, i32) {
    %c0_i32 = arith.constant 0 : i32
    %c0_i32_0 = arith.constant 0 : i32
    %c0_i32_1 = arith.constant 0 : i32
    return %c0_i32, %c0_i32_0 : i32, i32
  }
  func.func @transform_5(%arg0: i32) -> (i32, i32) {
    %c0_i32 = arith.constant 0 : i32
    %c0_i32_0 = arith.constant 0 : i32
    %c0_i32_1 = arith.constant 0 : i32
    return %c0_i32, %c0_i32_0 : i32, i32
  }
  func.func @transform_6(%arg0: i32) -> (i32, i32) {
    %c0_i32 = arith.constant 0 : i32
    %c0_i32_0 = arith.constant 0 : i32
    %c0_i32_1 = arith.constant 0 : i32
    return %c0_i32, %c0_i32_0 : i32, i32
  }
  func.func @transform_7(%arg0: i32) -> (i32, i32) {
    %c0_i32 = arith.constant 0 : i32
    %c0_i32_0 = arith.constant 0 : i32
    %c0_i32_1 = arith.constant 0 : i32
    return %c0_i32, %c0_i32_0 : i32, i32
  }
  func.func @transform_8(%arg0: i32) -> (i32, i32) {
    %c0_i32 = arith.constant 0 : i32
    %c0_i32_0 = arith.constant 0 : i32
    %c0_i32_1 = arith.constant 0 : i32
    return %c0_i32, %c0_i32_0 : i32, i32
  }
  func.func @transform_9(%arg0: i32) -> (i32, i32, i32) {
    %c0_i32 = arith.constant 0 : i32
    %c0_i32_0 = arith.constant 0 : i32
    %c0_i32_1 = arith.constant 0 : i32
    return %arg0, %c0_i32, %c0_i32_0 : i32, i32, i32
  }
}

</mosaic_0001>

<llo_original>
// kernel: tpu_custom_call.1
$region0: #{tpu_custom_call.1}
  #allocation0 [shape = 'u32[]', space=smem, size = 0x4, offset = 0x4, fixed_abs, tag = 'smem constant byte address 0x4 - core index']
  #allocation1 [shape = 'u32[72,128]{1,0:T(1,128)}', space=vmem, size = 0x9000, scoped, tag = 'internal scratch']
  #allocation2 [shape = 'bf16[18,18,4]{2,1,0:T(8,128)(2,1)}', space=vmem, size = 0x1b000, scoped, tag = 'scratch operand']
  %s0 = inlined_call_operand.vmem [shape: bf16[2,256,8], index: 0, kind: input, shape index: {}]
  %s1 = inlined_call_operand.vmem [shape: bf16[8,4], index: 1, kind: input, shape index: {}]
  %s2 = inlined_call_operand.vmem [shape: f32[1,4], index: 2, kind: input, shape index: {}]
  %s3 = inlined_call_operand.vmem [shape: bf16[36,4], index: 3, kind: input, shape index: {}]
  %s4 = inlined_call_operand.vmem [shape: f32[1,4], index: 4, kind: input, shape index: {}]
  %s5 = inlined_call_operand.vmem [shape: bf16[4,128], index: 5, kind: input, shape index: {}]
  %s6 = inlined_call_operand.vmem [shape: f32[1,128], index: 6, kind: input, shape index: {}]
  %s7 = inlined_call_operand.vmem [shape: bf16[8,128], index: 7, kind: input, shape index: {}]
  %s8 = inlined_call_operand.vmem [shape: f32[1,128], index: 8, kind: input, shape index: {}]
  %s9 = inlined_call_operand.hbm [shape: f32[2,256,128], index: 9, kind: output, shape index: {}]
  %s10 = sld [smem:[#allocation0]]
  $region69: #{tpu_custom_call.1} parent=0
    _
  %s12 = ssub.s32 1, %s10
  %s13 = scalar_select 0, %s12, %s10
  $region1: #{tpu_custom_call.1} parent=0
    #allocation3 [shape = 'u8[262144]{0}', space=vmem, size = 0x40000, scoped, tag = 'output window, operand 0']
    #allocation4 [shape = 's32[2]{0}', space=sflag, size = 0x8, scoped, tag = 'scoped memory for tpu_custom_call.1']
    %14 = vsyncpa [#allocation4], 0
    %s15 = scalar_lea.sflag [#allocation4], 1
    %16 = vsyncpa %s15, 0
    loop: start=0, step=1, limit=4
    $region2: #{tpu_custom_call.1} parent=1 // loop_pre_header
      _
    $region3: #{tpu_custom_call.1} parent=1 // loop_header
      %s18 = sphi 0, %s22
      %p19 = scmp.ge.s32.totalorder %s18, 4
      %s28 = sphi 0, %s30
      %s31 = sphi 0, %s28
      %s32 = sphi 0, %s31
      %s48 = sphi 0, %s32
      %s52 = sphi 0, %s52
      %s54 = sphi 0, %s52
      %s55 = sphi 0, %s54
      %s69 = sphi 0, %s55
      %s73 = sphi 0, %s73
      %s75 = sphi 0, %s73
      %s76 = sphi 0, %s75
      %s90 = sphi 0, %s76
      %s94 = sphi 0, %s94
      %s96 = sphi 0, %s94
      %s97 = sphi 0, %s96
      %s111 = sphi 0, %s97
      %s115 = sphi 0, %s115
      %s117 = sphi 0, %s115
      %s118 = sphi 0, %s117
      %s132 = sphi 0, %s118
      %s136 = sphi 0, %s136
      %s138 = sphi 0, %s136
      %s139 = sphi 0, %s138
      %s153 = sphi 0, %s139
      %s157 = sphi 0, %s157
      %s159 = sphi 0, %s157
      %s160 = sphi 0, %s159
      %s174 = sphi 0, %s160
      %s178 = sphi 0, %s178
      %s180 = sphi 0, %s178
      %s181 = sphi 0, %s180
      %s195 = sphi 0, %s181
      %s199 = sphi 0, %s199
      %s201 = sphi 0, %s199
      %s202 = sphi 0, %s201
      %s216 = sphi 0, %s202
      %s222 = sphi 0, %s224
      %s225 = sphi 0, %s222
      %s226 = sphi 0, %s225
      %s242 = sphi 0, %s226
    $region4: #{tpu_custom_call.1} parent=1 // loop_header_branch
      %21 = sbr.rel (%p19) target = $region8
    $region5: #{tpu_custom_call.1} parent=1 // loop_body
      %s23 = ssub.s32 %s18, 1
      %s24 = ssub.s32 %s18, 2
      %s25 = sadd.s32 %s18, 1
      %s26 = ssub.s32 %s18, %s25
      %p27 = scmp.eq.s32.totalorder %s26, 0
      %s29 = sadd.s32 %s28, 1
      %s30 = scalar_select %p27, %s28, %s29
      %p33 = pneg %p27
      %p34 = scmp.eq.s32.totalorder %s18, 1
      %p35 = por %p33, %p34
      %p36 = scmp.ne.s32.totalorder %s28, %s31
      %p37 = scmp.eq.s32.totalorder %s18, 0
      %p38 = por %p36, %p37
      %p39 = scmp.ne.s32.totalorder %s28, %s31
      %p40 = scmp.eq.s32.totalorder %s23, 1
      %p41 = por %p39, %p40
      %p42 = scmp.ne.s32.totalorder %s31, %s32
      %p43 = scmp.eq.s32.totalorder %s23, 0
      %p44 = por %p42, %p43
      %p45 = scmp.ne.s32.totalorder %s31, %s32
      %p46 = scmp.eq.s32.totalorder %s24, 1
      %p47 = por %p45, %p46
      %p49 = scmp.ne.s32.totalorder %s32, %s48
      %p50 = scmp.eq.s32.totalorder %s24, 0
      %p51 = por %p49, %p50
      %s53 = sadd.s32 %s52, 1
      %p56 = scmp.eq.s32.totalorder %s18, 1
      %p57 = scmp.ne.s32.totalorder %s52, %s54
      %p58 = scmp.eq.s32.totalorder %s18, 0
      %p59 = por %p57, %p58
      %p60 = scmp.ne.s32.totalorder %s52, %s54
      %p61 = scmp.eq.s32.totalorder %s23, 1
      %p62 = por %p60, %p61
      %p63 = scmp.ne.s32.totalorder %s54, %s55
      %p64 = scmp.eq.s32.totalorder %s23, 0
      %p65 = por %p63, %p64
      %p66 = scmp.ne.s32.totalorder %s54, %s55
      %p67 = scmp.eq.s32.totalorder %s24, 1
      %p68 = por %p66, %p67
      %p70 = scmp.ne.s32.totalorder %s55, %s69
      %p71 = scmp.eq.s32.totalorder %s24, 0
      %p72 = por %p70, %p71
      %s74 = sadd.s32 %s73, 1
      %p77 = scmp.eq.s32.totalorder %s18, 1
      %p78 = scmp.ne.s32.totalorder %s73, %s75
      %p79 = scmp.eq.s32.totalorder %s18, 0
      %p80 = por %p78, %p79
      %p81 = scmp.ne.s32.totalorder %s73, %s75
      %p82 = scmp.eq.s32.totalorder %s23, 1
      %p83 = por %p81, %p82
      %p84 = scmp.ne.s32.totalorder %s75, %s76
      %p85 = scmp.eq.s32.totalorder %s23, 0
      %p86 = por %p84, %p85
      %p87 = scmp.ne.s32.totalorder %s75, %s76
      %p88 = scmp.eq.s32.totalorder %s24, 1
      %p89 = por %p87, %p88
      %p91 = scmp.ne.s32.totalorder %s76, %s90
      %p92 = scmp.eq.s32.totalorder %s24, 0
      %p93 = por %p91, %p92
      %s95 = sadd.s32 %s94, 1
      %p98 = scmp.eq.s32.totalorder %s18, 1
      %p99 = scmp.ne.s32.totalorder %s94, %s96
      %p100 = scmp.eq.s32.totalorder %s18, 0
      %p101 = por %p99, %p100
      %p102 = scmp.ne.s32.totalorder %s94, %s96
      %p103 = scmp.eq.s32.totalorder %s23, 1
      %p104 = por %p102, %p103
      %p105 = scmp.ne.s32.totalorder %s96, %s97
      %p106 = scmp.eq.s32.totalorder %s23, 0
      %p107 = por %p105, %p106
      %p108 = scmp.ne.s32.totalorder %s96, %s97
      %p109 = scmp.eq.s32.totalorder %s24, 1
      %p110 = por %p108, %p109
      %p112 = scmp.ne.s32.totalorder %s97, %s111
      %p113 = scmp.eq.s32.totalorder %s24, 0
      %p114 = por %p112, %p113
      %s116 = sadd.s32 %s115, 1
      %p119 = scmp.eq.s32.totalorder %s18, 1
      %p120 = scmp.ne.s32.totalorder %s115, %s117
      %p121 = scmp.eq.s32.totalorder %s18, 0
      %p122 = por %p120, %p121
      %p123 = scmp.ne.s32.totalorder %s115, %s117
      %p124 = scmp.eq.s32.totalorder %s23, 1
      %p125 = por %p123, %p124
      %p126 = scmp.ne.s32.totalorder %s117, %s118
      %p127 = scmp.eq.s32.totalorder %s23, 0
      %p128 = por %p126, %p127
      %p129 = scmp.ne.s32.totalorder %s117, %s118
      %p130 = scmp.eq.s32.totalorder %s24, 1
      %p131 = por %p129, %p130
      %p133 = scmp.ne.s32.totalorder %s118, %s132
      %p134 = scmp.eq.s32.totalorder %s24, 0
      %p135 = por %p133, %p134
      %s137 = sadd.s32 %s136, 1
      %p140 = scmp.eq.s32.totalorder %s18, 1
      %p141 = scmp.ne.s32.totalorder %s136, %s138
      %p142 = scmp.eq.s32.totalorder %s18, 0
      %p143 = por %p141, %p142
      %p144 = scmp.ne.s32.totalorder %s136, %s138
      %p145 = scmp.eq.s32.totalorder %s23, 1
      %p146 = por %p144, %p145
      %p147 = scmp.ne.s32.totalorder %s138, %s139
      %p148 = scmp.eq.s32.totalorder %s23, 0
      %p149 = por %p147, %p148
      %p150 = scmp.ne.s32.totalorder %s138, %s139
      %p151 = scmp.eq.s32.totalorder %s24, 1
      %p152 = por %p150, %p151
      %p154 = scmp.ne.s32.totalorder %s139, %s153
      %p155 = scmp.eq.s32.totalorder %s24, 0
      %p156 = por %p154, %p155
      %s158 = sadd.s32 %s157, 1
      %p161 = scmp.eq.s32.totalorder %s18, 1
      %p162 = scmp.ne.s32.totalorder %s157, %s159
      %p163 = scmp.eq.s32.totalorder %s18, 0
      %p164 = por %p162, %p163
      %p165 = scmp.ne.s32.totalorder %s157, %s159
      %p166 = scmp.eq.s32.totalorder %s23, 1
      %p167 = por %p165, %p166
      %p168 = scmp.ne.s32.totalorder %s159, %s160
      %p169 = scmp.eq.s32.totalorder %s23, 0
      %p170 = por %p168, %p169
      %p171 = scmp.ne.s32.totalorder %s159, %s160
      %p172 = scmp.eq.s32.totalorder %s24, 1
      %p173 = por %p171, %p172
      %p175 = scmp.ne.s32.totalorder %s160, %s174
      %p176 = scmp.eq.s32.totalorder %s24, 0
      %p177 = por %p175, %p176
      %s179 = sadd.s32 %s178, 1
      %p182 = scmp.eq.s32.totalorder %s18, 1
      %p183 = scmp.ne.s32.totalorder %s178, %s180
      %p184 = scmp.eq.s32.totalorder %s18, 0
      %p185 = por %p183, %p184
      %p186 = scmp.ne.s32.totalorder %s178, %s180
      %p187 = scmp.eq.s32.totalorder %s23, 1
      %p188 = por %p186, %p187
      %p189 = scmp.ne.s32.totalorder %s180, %s181
      %p190 = scmp.eq.s32.totalorder %s23, 0
      %p191 = por %p189, %p190
      %p192 = scmp.ne.s32.totalorder %s180, %s181
      %p193 = scmp.eq.s32.totalorder %s24, 1
      %p194 = por %p192, %p193
      %p196 = scmp.ne.s32.totalorder %s181, %s195
      %p197 = scmp.eq.s32.totalorder %s24, 0
      %p198 = por %p196, %p197
      %s200 = sadd.s32 %s199, 1
      %p203 = scmp.eq.s32.totalorder %s18, 1
      %p204 = scmp.ne.s32.totalorder %s199, %s201
      %p205 = scmp.eq.s32.totalorder %s18, 0
      %p206 = por %p204, %p205
      %p207 = scmp.ne.s32.totalorder %s199, %s201
      %p208 = scmp.eq.s32.totalorder %s23, 1
      %p209 = por %p207, %p208
      %p210 = scmp.ne.s32.totalorder %s201, %s202
      %p211 = scmp.eq.s32.totalorder %s23, 0
      %p212 = por %p210, %p211
      %p213 = scmp.ne.s32.totalorder %s201, %s202
      %p214 = scmp.eq.s32.totalorder %s24, 1
      %p215 = por %p213, %p214
      %p217 = scmp.ne.s32.totalorder %s202, %s216
      %p218 = scmp.eq.s32.totalorder %s24, 0
      %p219 = por %p217, %p218
      %s220 = ssub.s32 %s18, %s25
      %p221 = scmp.eq.s32.totalorder %s220, 0
      %s223 = sadd.s32 %s222, 1
      %s224 = scalar_select %p221, %s222, %s223
      %p227 = pneg %p221
      %p228 = scmp.eq.s32.totalorder %s18, 1
      %p229 = por %p227, %p228
      %p230 = scmp.ne.s32.totalorder %s222, %s225
      %p231 = scmp.eq.s32.totalorder %s18, 0
      %p232 = por %p230, %p231
      %p233 = scmp.ne.s32.totalorder %s222, %s225
      %p234 = scmp.eq.s32.totalorder %s23, 1
      %p235 = por %p233, %p234
      %p236 = scmp.ne.s32.totalorder %s225, %s226
      %p237 = scmp.eq.s32.totalorder %s23, 0
      %p238 = por %p236, %p237
      %p239 = scmp.ne.s32.totalorder %s225, %s226
      %p240 = scmp.eq.s32.totalorder %s24, 1
      %p241 = por %p239, %p240
      %p243 = scmp.ne.s32.totalorder %s226, %s242
      %p244 = scmp.eq.s32.totalorder %s24, 0
      %p245 = por %p243, %p244
      %p246 = scmp.le.s32.totalorder 1, %s18
      %p247 = scmp.lt.s32.totalorder %s18, 3
      %p248 = pnand %p246, %p247
      %p249 = pneg %p248
      // Predicated region
      $region9: #{tpu_custom_call.1} parent=5 // pred_check
        _
      $region10: #{tpu_custom_call.1} parent=5 // pred_check_branch
        %251 = sbr.rel (%p248) target = $region12
      $region11: #{tpu_custom_call.1} parent=5 // pred_region
        %s252 = ssub.s32 %s18, 1
        // Predicated region
        $region13: #{tpu_custom_call.1} parent=11 // pred_check
          %p253 = pneg %p65
        $region14: #{tpu_custom_call.1} parent=11 // pred_check_branch
          %255 = sbr.rel (%p253) target = $region16
        $region15: #{tpu_custom_call.1} parent=11 // pred_region
          _
        $region16: #{tpu_custom_call.1} parent=11 // pred_fallthru
          _
        // Predicated region
        $region17: #{tpu_custom_call.1} parent=11 // pred_check
          %p256 = pneg %p86
        $region18: #{tpu_custom_call.1} parent=11 // pred_check_branch
          %258 = sbr.rel (%p256) target = $region20
        $region19: #{tpu_custom_call.1} parent=11 // pred_region
          _
        $region20: #{tpu_custom_call.1} parent=11 // pred_fallthru
          _
        // Predicated region
        $region21: #{tpu_custom_call.1} parent=11 // pred_check
          %p259 = pneg %p107
        $region22: #{tpu_custom_call.1} parent=11 // pred_check_branch
          %261 = sbr.rel (%p259) target = $region24
        $region23: #{tpu_custom_call.1} parent=11 // pred_region
          _
        $region24: #{tpu_custom_call.1} parent=11 // pred_fallthru
          _
        // Predicated region
        $region25: #{tpu_custom_call.1} parent=11 // pred_check
          %p262 = pneg %p128
        $region26: #{tpu_custom_call.1} parent=11 // pred_check_branch
          %264 = sbr.rel (%p262) target = $region28
        $region27: #{tpu_custom_call.1} parent=11 // pred_region
          _
        $region28: #{tpu_custom_call.1} parent=11 // pred_fallthru
          _
        // Predicated region
        $region29: #{tpu_custom_call.1} parent=11 // pred_check
          %p265 = pneg %p149
        $region30: #{tpu_custom_call.1} parent=11 // pred_check_branch
          %267 = sbr.rel (%p265) target = $region32
        $region31: #{tpu_custom_call.1} parent=11 // pred_region
          _
        $region32: #{tpu_custom_call.1} parent=11 // pred_fallthru
          _
        // Predicated region
        $region33: #{tpu_custom_call.1} parent=11 // pred_check
          %p268 = pneg %p170
        $region34: #{tpu_custom_call.1} parent=11 // pred_check_branch
          %270 = sbr.rel (%p268) target = $region36
        $region35: #{tpu_custom_call.1} parent=11 // pred_region
          _
        $region36: #{tpu_custom_call.1} parent=11 // pred_fallthru
          _
        // Predicated region
        $region37: #{tpu_custom_call.1} parent=11 // pred_check
          %p271 = pneg %p191
        $region38: #{tpu_custom_call.1} parent=11 // pred_check_branch
          %273 = sbr.rel (%p271) target = $region40
        $region39: #{tpu_custom_call.1} parent=11 // pred_region
          _
        $region40: #{tpu_custom_call.1} parent=11 // pred_fallthru
          _
        // Predicated region
        $region41: #{tpu_custom_call.1} parent=11 // pred_check
          %p274 = pneg %p212
        $region42: #{tpu_custom_call.1} parent=11 // pred_check_branch
          %276 = sbr.rel (%p274) target = $region44
        $region43: #{tpu_custom_call.1} parent=11 // pred_region
          _
        $region44: #{tpu_custom_call.1} parent=11 // pred_fallthru
          _
      $region12: #{tpu_custom_call.1} parent=5 // pred_fallthru
        _
      %p277 = scmp.lt.s32.totalorder %s18, 2
      // Predicated region
      $region45: #{tpu_custom_call.1} parent=5 // pred_check
        %p278 = pneg %p277
      $region46: #{tpu_custom_call.1} parent=5 // pred_check_branch
        %280 = sbr.rel (%p278) target = $region48
      $region47: #{tpu_custom_call.1} parent=5 // pred_region
        // Predicated region
        $region49: #{tpu_custom_call.1} parent=47 // pred_check
          %p281 = pneg %p38
        $region50: #{tpu_custom_call.1} parent=47 // pred_check_branch
          %283 = sbr.rel (%p281) target = $region52
        $region51: #{tpu_custom_call.1} parent=47 // pred_region
          %p284 = scmp.lt.s32.totalorder %s18, 1
          %s285 = scalar_select %p284, %s18, 1
          %s286 = smul.addr %s285, 32
          %s287 = smul.addr %s286, 4
          %s288 = scalar_lea.vmem %s0, %s287
        $region52: #{tpu_custom_call.1} parent=47 // pred_fallthru
          _
      $region48: #{tpu_custom_call.1} parent=5 // pred_fallthru
        _
      %p289 = scmp.le.s32.totalorder 1, %s18
      %p290 = scmp.lt.s32.totalorder %s18, 3
      %p291 = pnand %p289, %p290
      %p292 = pneg %p291
      // Predicated region
      $region53: #{tpu_custom_call.1} parent=5 // pred_check
        _
      $region54: #{tpu_custom_call.1} parent=5 // pred_check_branch
        %294 = sbr.rel (%p291) target = $region56
      $region55: #{tpu_custom_call.1} parent=5 // pred_region
        %s295 = ssub.s32 %s18, 1
        %p296 = scmp.lt.s32.totalorder %s23, 1
        %s297 = scalar_select %p296, %s23, 1
        %s298 = smul.addr %s297, 32
        %s299 = smul.addr %s298, 4
        %s300 = scalar_lea.vmem %s0, %s299
        %p301 = pneg %p44
        %p302 = pneg %p41
        %p303 = pneg %p65
        %p304 = pneg %p62
        %p305 = pneg %p86
        %p306 = pneg %p83
        %p307 = pneg %p107
        %p308 = pneg %p104
        %p309 = pneg %p128
        %p310 = pneg %p125
        %p311 = pneg %p149
        %p312 = pneg %p146
        %p313 = pneg %p170
        %p314 = pneg %p167
        %p315 = pneg %p191
        %p316 = pneg %p188
        %p317 = pneg %p212
        %p318 = pneg %p209
        %p319 = pneg %p238
        %p320 = pneg %p235
        %s321 = sand.u32 %s225, 1
        %s322 = scalar_lea.sflag [#allocation4], %s321
        %s323 = sand.u32 %s225, 1
        %s324 = smul.addr %s323, 256
        %s325 = scalar_lea.vmem [#allocation3], %s324
        %p326 = scmp.lt.s32.totalorder %s23, 1
        %s327 = scalar_select %p326, %s23, 1
        %s328 = smul.addr %s327, 32
        %s329 = smul.addr %s328, 4
        %s330 = scalar_lea.vmem %s0, %s329
        %v332 = vld [vmem:[%s330] sm:$0xf]
        %v333 = vld [vmem:[%s330 + $0x4] sm:$0xf]
        %v334 = vld [vmem:[%s330 + $0x8] sm:$0xf]
        %v335 = vld [vmem:[%s330 + $0xc] sm:$0xf]
        %v336 = vld [vmem:[%s330 + $0x10] sm:$0xf]
        %v337 = vld [vmem:[%s330 + $0x14] sm:$0xf]
        %v338 = vld [vmem:[%s330 + $0x18] sm:$0xf]
        %v339 = vld [vmem:[%s330 + $0x1c] sm:$0xf]
        %v340 = vld [vmem:[%s330 + $0x20] sm:$0xf]
        %v341 = vld [vmem:[%s330 + $0x24] sm:$0xf]
        %v342 = vld [vmem:[%s330 + $0x28] sm:$0xf]
        %v343 = vld [vmem:[%s330 + $0x2c] sm:$0xf]
        %v344 = vld [vmem:[%s330 + $0x30] sm:$0xf]
        %v345 = vld [vmem:[%s330 + $0x34] sm:$0xf]
        %v346 = vld [vmem:[%s330 + $0x38] sm:$0xf]
        %v347 = vld [vmem:[%s330 + $0x3c] sm:$0xf]
        %v348 = vld [vmem:[%s330 + $0x40] sm:$0xf]
        %v349 = vld [vmem:[%s330 + $0x44] sm:$0xf]
        %v350 = vld [vmem:[%s330 + $0x48] sm:$0xf]
        %v351 = vld [vmem:[%s330 + $0x4c] sm:$0xf]
        %v352 = vld [vmem:[%s330 + $0x50] sm:$0xf]
        %v353 = vld [vmem:[%s330 + $0x54] sm:$0xf]
        %v354 = vld [vmem:[%s330 + $0x58] sm:$0xf]
        %v355 = vld [vmem:[%s330 + $0x5c] sm:$0xf]
        %v356 = vld [vmem:[%s330 + $0x60] sm:$0xf]
        %v357 = vld [vmem:[%s330 + $0x64] sm:$0xf]
        %v358 = vld [vmem:[%s330 + $0x68] sm:$0xf]
        %v359 = vld [vmem:[%s330 + $0x6c] sm:$0xf]
        %v360 = vld [vmem:[%s330 + $0x70] sm:$0xf]
        %v361 = vld [vmem:[%s330 + $0x74] sm:$0xf]
        %v362 = vld [vmem:[%s330 + $0x78] sm:$0xf]
        %v363 = vld [vmem:[%s330 + $0x7c] sm:$0xf]
        %v364 = vld [vmem:[%s1] sm:$0xf]
        %v365 = vld [vmem:[%s2] sm:$0x1]
        %v367 = vperm.slane %v365, 0
        %v401 = vunpack.c.l.b16 %v332
        %v402 = vunpack.c.l.b16 %v333
        %v403 = vunpack.c.l.b16 %v334
        %v404 = vunpack.c.l.b16 %v335
        %v405 = vunpack.c.l.b16 %v336
        %v406 = vunpack.c.l.b16 %v337
        %v407 = vunpack.c.l.b16 %v338
        %v408 = vunpack.c.l.b16 %v339
        %v409 = vunpack.c.l.b16 %v340
        %v410 = vunpack.c.l.b16 %v341
        %v411 = vunpack.c.l.b16 %v342
        %v412 = vunpack.c.l.b16 %v343
        %v413 = vunpack.c.l.b16 %v344
        %v414 = vunpack.c.l.b16 %v345
        %v415 = vunpack.c.l.b16 %v346
        %v416 = vunpack.c.l.b16 %v347
        %v417 = vunpack.c.l.b16 %v348
        %v418 = vunpack.c.l.b16 %v349
        %v419 = vunpack.c.l.b16 %v350
        %v420 = vunpack.c.l.b16 %v351
        %v421 = vunpack.c.l.b16 %v352
        %v422 = vunpack.c.l.b16 %v353
        %v423 = vunpack.c.l.b16 %v354
        %v424 = vunpack.c.l.b16 %v355
        %v425 = vunpack.c.l.b16 %v356
        %v426 = vunpack.c.l.b16 %v357
        %v427 = vunpack.c.l.b16 %v358
        %v428 = vunpack.c.l.b16 %v359
        %v429 = vunpack.c.l.b16 %v360
        %v430 = vunpack.c.l.b16 %v361
        %v431 = vunpack.c.l.b16 %v362
        %v432 = vunpack.c.l.b16 %v363
        %v433 = vpack.c.b16 %v402, %v401
        %v434 = vpack.c.b16 %v404, %v403
        %v435 = vpack.c.b16 %v406, %v405
        %v436 = vpack.c.b16 %v408, %v407
        %v437 = vpack.c.b16 %v410, %v409
        %v438 = vpack.c.b16 %v412, %v411
        %v439 = vpack.c.b16 %v414, %v413
        %v440 = vpack.c.b16 %v416, %v415
        %v441 = vpack.c.b16 %v418, %v417
        %v442 = vpack.c.b16 %v420, %v419
        %v443 = vpack.c.b16 %v422, %v421
        %v444 = vpack.c.b16 %v424, %v423
        %v445 = vpack.c.b16 %v426, %v425
        %v446 = vpack.c.b16 %v428, %v427
        %v447 = vpack.c.b16 %v430, %v429
        %v448 = vpack.c.b16 %v432, %v431
        %vm449 = vcmask 64512
        %v451 = vsel %vm449, %v433, 0
        %v454 = vsel %vm449, %v434, 0
        %v457 = vsel %vm449, %v435, 0
        %v460 = vsel %vm449, %v436, 0
        %v463 = vsel %vm449, %v437, 0
        %v466 = vsel %vm449, %v438, 0
        %v469 = vsel %vm449, %v439, 0
        %v472 = vsel %vm449, %v440, 0
        %v475 = vsel %vm449, %v441, 0
        %v478 = vsel %vm449, %v442, 0
        %v481 = vsel %vm449, %v443, 0
        %v484 = vsel %vm449, %v444, 0
        %v487 = vsel %vm449, %v445, 0
        %v490 = vsel %vm449, %v446, 0
        %v493 = vsel %vm449, %v447, 0
        %v496 = vsel %vm449, %v448, 0
        %vm498 = vcmask 1043456
        %v500 = vsel %vm498, %v364, 0
        %502 = vmatpush.bf16.msra.mxu0 0
        %503 = vmatpush.bf16.msra.mxu0 0
        %504 = vmatpush.bf16.msra.mxu0 0
        %505 = vmatpush.bf16.msra.mxu0 0
        %506 = vmatpush.bf16.msra.mxu0 0
        %507 = vmatpush.bf16.msra.mxu0 0
        %508 = vmatpush.bf16.msra.mxu0 0
        %509 = vmatpush.bf16.msra.mxu0 %v500
        %510 = vmatmul.bf16.gmra.mxu0 %v451
        %v511 = vpop.f32.mrf.mxu0
        %v512 = vadd.f32 %v367, %v511
        %v513 = vpop.f32.mrf.mxu0
        %v514 = vadd.f32 %v367, %v513
        %515 = vmatmul.bf16.gmra.mxu0 %v454
        %v516 = vpop.f32.mrf.mxu0
        %v517 = vadd.f32 %v367, %v516
        %v518 = vpop.f32.mrf.mxu0
        %v519 = vadd.f32 %v367, %v518
        %520 = vmatmul.bf16.gmra.mxu0 %v457
        %v521 = vpop.f32.mrf.mxu0
        %v522 = vadd.f32 %v367, %v521
        %v523 = vpop.f32.mrf.mxu0
        %v524 = vadd.f32 %v367, %v523
        %525 = vmatmul.bf16.gmra.mxu0 %v460
        %v526 = vpop.f32.mrf.mxu0
        %v527 = vadd.f32 %v367, %v526
        %v528 = vpop.f32.mrf.mxu0
        %v529 = vadd.f32 %v367, %v528
        %530 = vmatmul.bf16.gmra.mxu0 %v463
        %v531 = vpop.f32.mrf.mxu0
        %v532 = vadd.f32 %v367, %v531
        %v533 = vpop.f32.mrf.mxu0
        %v534 = vadd.f32 %v367, %v533
        %535 = vmatmul.bf16.gmra.mxu0 %v466
        %v536 = vpop.f32.mrf.mxu0
        %v537 = vadd.f32 %v367, %v536
        %v538 = vpop.f32.mrf.mxu0
        %v539 = vadd.f32 %v367, %v538
        %540 = vmatmul.bf16.gmra.mxu0 %v469
        %v541 = vpop.f32.mrf.mxu0
        %v542 = vadd.f32 %v367, %v541
        %v543 = vpop.f32.mrf.mxu0
        %v544 = vadd.f32 %v367, %v543
        %545 = vmatmul.bf16.gmra.mxu0 %v472
        %v546 = vpop.f32.mrf.mxu0
        %v547 = vadd.f32 %v367, %v546
        %v548 = vpop.f32.mrf.mxu0
        %v549 = vadd.f32 %v367, %v548
        %550 = vmatmul.bf16.gmra.mxu0 %v475
        %v551 = vpop.f32.mrf.mxu0
        %v552 = vadd.f32 %v367, %v551
        %v553 = vpop.f32.mrf.mxu0
        %v554 = vadd.f32 %v367, %v553
        %555 = vmatmul.bf16.gmra.mxu0 %v478
        %v556 = vpop.f32.mrf.mxu0
        %v557 = vadd.f32 %v367, %v556
        %v558 = vpop.f32.mrf.mxu0
        %v559 = vadd.f32 %v367, %v558
        %560 = vmatmul.bf16.gmra.mxu0 %v481
        %v561 = vpop.f32.mrf.mxu0
        %v562 = vadd.f32 %v367, %v561
        %v563 = vpop.f32.mrf.mxu0
        %v564 = vadd.f32 %v367, %v563
        %565 = vmatmul.bf16.gmra.mxu0 %v484
        %v566 = vpop.f32.mrf.mxu0
        %v567 = vadd.f32 %v367, %v566
        %v568 = vpop.f32.mrf.mxu0
        %v569 = vadd.f32 %v367, %v568
        %570 = vmatmul.bf16.gmra.mxu0 %v487
        %v571 = vpop.f32.mrf.mxu0
        %v572 = vadd.f32 %v367, %v571
        %v573 = vpop.f32.mrf.mxu0
        %v574 = vadd.f32 %v367, %v573
        %575 = vmatmul.bf16.gmra.mxu0 %v490
        %v576 = vpop.f32.mrf.mxu0
        %v577 = vadd.f32 %v367, %v576
        %v578 = vpop.f32.mrf.mxu0
        %v579 = vadd.f32 %v367, %v578
        %580 = vmatmul.bf16.gmra.mxu0 %v493
        %v581 = vpop.f32.mrf.mxu0
        %v582 = vadd.f32 %v367, %v581
        %v583 = vpop.f32.mrf.mxu0
        %v584 = vadd.f32 %v367, %v583
        %585 = vmatmul.bf16.gmra.mxu0 %v496
        %v586 = vpop.f32.mrf.mxu0
        %v587 = vadd.f32 %v367, %v586
        %v588 = vpop.f32.mrf.mxu0
        %v589 = vadd.f32 %v367, %v588
        %590 = vdwg.mxu0
        %v591 = vmax.f32 %v512, 0.0
        %v592 = vmax.f32 %v514, 0.0
        %v593 = vmax.f32 %v517, 0.0
        %v594 = vmax.f32 %v519, 0.0
        %v595 = vmax.f32 %v522, 0.0
        %v596 = vmax.f32 %v524, 0.0
        %v597 = vmax.f32 %v527, 0.0
        %v598 = vmax.f32 %v529, 0.0
        %v599 = vmax.f32 %v532, 0.0
        %v600 = vmax.f32 %v534, 0.0
        %v601 = vmax.f32 %v537, 0.0
        %v602 = vmax.f32 %v539, 0.0
        %v603 = vmax.f32 %v542, 0.0
        %v604 = vmax.f32 %v544, 0.0
        %v605 = vmax.f32 %v547, 0.0
        %v606 = vmax.f32 %v549, 0.0
        %v607 = vmax.f32 %v552, 0.0
        %v608 = vmax.f32 %v554, 0.0
        %v609 = vmax.f32 %v557, 0.0
        %v610 = vmax.f32 %v559, 0.0
        %v611 = vmax.f32 %v562, 0.0
        %v612 = vmax.f32 %v564, 0.0
        %v613 = vmax.f32 %v567, 0.0
        %v614 = vmax.f32 %v569, 0.0
        %v615 = vmax.f32 %v572, 0.0
        %v616 = vmax.f32 %v574, 0.0
        %v617 = vmax.f32 %v577, 0.0
        %v618 = vmax.f32 %v579, 0.0
        %v619 = vmax.f32 %v582, 0.0
        %v620 = vmax.f32 %v584, 0.0
        %v621 = vmax.f32 %v587, 0.0
        %v622 = vmax.f32 %v589, 0.0
        %vm623 = vcmask 27648
        %624 = vst.msk [vmem:[#allocation2] sm:$0xf] %vm623, 0
        %625 = vst.msk [vmem:[#allocation2 + $0x4] sm:$0xf] %vm623, 0
        %vm626 = vcmask 24576
        %627 = vst.msk [vmem:[#allocation2 + $0x8] sm:$0x1] %vm626, 0
        %628 = vst.msk [vmem:[#allocation2 + $0xc] sm:$0xf] %vm623, 0
        %629 = vst.msk [vmem:[#allocation2 + $0x10] sm:$0xf] %vm623, 0
        %630 = vst.msk [vmem:[#allocation2 + $0x14] sm:$0x1] %vm626, 0
        %631 = vst.msk [vmem:[#allocation2 + $0x18] sm:$0xf] %vm623, 0
        %632 = vst.msk [vmem:[#allocation2 + $0x1c] sm:$0xf] %vm623, 0
        %633 = vst.msk [vmem:[#allocation2 + $0x20] sm:$0x1] %vm626, 0
        %634 = vst.msk [vmem:[#allocation2 + $0x24] sm:$0xf] %vm623, 0
        %635 = vst.msk [vmem:[#allocation2 + $0x28] sm:$0xf] %vm623, 0
        %636 = vst.msk [vmem:[#allocation2 + $0x2c] sm:$0x1] %vm626, 0
        %637 = vst.msk [vmem:[#allocation2 + $0x30] sm:$0xf] %vm623, 0
        %638 = vst.msk [vmem:[#allocation2 + $0x34] sm:$0xf] %vm623, 0
        %639 = vst.msk [vmem:[#allocation2 + $0x38] sm:$0x1] %vm626, 0
        %640 = vst.msk [vmem:[#allocation2 + $0x3c] sm:$0xf] %vm623, 0
        %641 = vst.msk [vmem:[#allocation2 + $0x40] sm:$0xf] %vm623, 0
        %642 = vst.msk [vmem:[#allocation2 + $0x44] sm:$0x1] %vm626, 0
        %643 = vst.msk [vmem:[#allocation2 + $0x48] sm:$0xf] %vm623, 0
        %644 = vst.msk [vmem:[#allocation2 + $0x4c] sm:$0xf] %vm623, 0
        %645 = vst.msk [vmem:[#allocation2 + $0x50] sm:$0x1] %vm626, 0
        %646 = vst.msk [vmem:[#allocation2 + $0x54] sm:$0xf] %vm623, 0
        %647 = vst.msk [vmem:[#allocation2 + $0x58] sm:$0xf] %vm623, 0
        %648 = vst.msk [vmem:[#allocation2 + $0x5c] sm:$0x1] %vm626, 0
        %649 = vst.msk [vmem:[#allocation2 + $0x60] sm:$0xf] %vm623, 0
        %650 = vst.msk [vmem:[#allocation2 + $0x64] sm:$0xf] %vm623, 0
        %651 = vst.msk [vmem:[#allocation2 + $0x68] sm:$0x1] %vm626, 0
        %652 = vst.msk [vmem:[#allocation2 + $0x6c] sm:$0xf] %vm623, 0
        %653 = vst.msk [vmem:[#allocation2 + $0x70] sm:$0xf] %vm623, 0
        %654 = vst.msk [vmem:[#allocation2 + $0x74] sm:$0x1] %vm626, 0
        %655 = vst.msk [vmem:[#allocation2 + $0x78] sm:$0xf] %vm623, 0
        %656 = vst.msk [vmem:[#allocation2 + $0x7c] sm:$0xf] %vm623, 0
        %657 = vst.msk [vmem:[#allocation2 + $0x80] sm:$0x1] %vm626, 0
        %658 = vst.msk [vmem:[#allocation2 + $0x84] sm:$0xf] %vm623, 0
        %659 = vst.msk [vmem:[#allocation2 + $0x88] sm:$0xf] %vm623, 0
        %660 = vst.msk [vmem:[#allocation2 + $0x8c] sm:$0x1] %vm626, 0
        %661 = vst.msk [vmem:[#allocation2 + $0x90] sm:$0xf] %vm623, 0
        %662 = vst.msk [vmem:[#allocation2 + $0x94] sm:$0xf] %vm623, 0
        %663 = vst.msk [vmem:[#allocation2 + $0x98] sm:$0x1] %vm626, 0
        %664 = vst.msk [vmem:[#allocation2 + $0x9c] sm:$0xf] %vm623, 0
        %665 = vst.msk [vmem:[#allocation2 + $0xa0] sm:$0xf] %vm623, 0
        %666 = vst.msk [vmem:[#allocation2 + $0xa4] sm:$0x1] %vm626, 0
        %667 = vst.msk [vmem:[#allocation2 + $0xa8] sm:$0xf] %vm623, 0
        %668 = vst.msk [vmem:[#allocation2 + $0xac] sm:$0xf] %vm623, 0
        %669 = vst.msk [vmem:[#allocation2 + $0xb0] sm:$0x1] %vm626, 0
        %670 = vst.msk [vmem:[#allocation2 + $0xb4] sm:$0xf] %vm623, 0
        %671 = vst.msk [vmem:[#allocation2 + $0xb8] sm:$0xf] %vm623, 0
        %672 = vst.msk [vmem:[#allocation2 + $0xbc] sm:$0x1] %vm626, 0
        %673 = vst.msk [vmem:[#allocation2 + $0xc0] sm:$0xf] %vm623, 0
        %674 = vst.msk [vmem:[#allocation2 + $0xc4] sm:$0xf] %vm623, 0
        %675 = vst.msk [vmem:[#allocation2 + $0xc8] sm:$0x1] %vm626, 0
        %676 = vst.msk [vmem:[#allocation2 + $0xcc] sm:$0xf] %vm623, 0
        %677 = vst.msk [vmem:[#allocation2 + $0xd0] sm:$0xf] %vm623, 0
        %678 = vst.msk [vmem:[#allocation2 + $0xd4] sm:$0x1] %vm626, 0
        %v679 = vpack.c.bf16 %v591, %v591
        %v680 = vpack.c.bf16 %v592, %v592
        %v681 = vpack.c.bf16 %v593, %v593
        %v682 = vpack.c.bf16 %v594, %v594
        %v683 = vpack.c.bf16 %v595, %v595
        %v684 = vpack.c.bf16 %v596, %v596
        %v685 = vpack.c.bf16 %v597, %v597
        %v686 = vpack.c.bf16 %v598, %v598
        %v687 = vpack.c.bf16 %v599, %v599
        %v688 = vpack.c.bf16 %v600, %v600
        %v689 = vpack.c.bf16 %v601, %v601
        %v690 = vpack.c.bf16 %v602, %v602
        %v691 = vpack.c.bf16 %v603, %v603
        %v692 = vpack.c.bf16 %v604, %v604
        %v693 = vpack.c.bf16 %v605, %v605
        %v694 = vpack.c.bf16 %v606, %v606
        %v695 = vpack.c.bf16 %v607, %v607
        %v696 = vpack.c.bf16 %v608, %v608
        %v697 = vpack.c.bf16 %v609, %v609
        %v698 = vpack.c.bf16 %v610, %v610
        %v699 = vpack.c.bf16 %v611, %v611
        %v700 = vpack.c.bf16 %v612, %v612
        %v701 = vpack.c.bf16 %v613, %v613
        %v702 = vpack.c.bf16 %v614, %v614
        %v703 = vpack.c.bf16 %v615, %v615
        %v704 = vpack.c.bf16 %v616, %v616
        %v705 = vpack.c.bf16 %v617, %v617
        %v706 = vpack.c.bf16 %v618, %v618
        %v707 = vpack.c.bf16 %v619, %v619
        %v708 = vpack.c.bf16 %v620, %v620
        %v709 = vpack.c.bf16 %v621, %v621
        %v710 = vpack.c.bf16 %v622, %v622
        %vm711 = vsmask.f32 256
        %vm712 = vsmask.f32 4368
        %vm713 = vmor %vm711, %vm712
        %v715 = vshrl.u32 %v679, 16
        %v717 = vrot.slane %v715, 7
        %v718 = vshll.u32 %v679, 16
        %v720 = vor.u32 %v717, %v718
        %v721 = vrot.slane %v717, 4
        %v723 = vshrl.u32 %v680, 16
        %v725 = vrot.slane %v723, 7
        %v726 = vshll.u32 %v680, 16
        %v728 = vor.u32 %v725, %v726
        %v729 = vsel %vm713, %v721, %v728
        %v730 = vrot.slane %v725, 4
        %v732 = vshrl.u32 %v681, 16
        %v734 = vrot.slane %v732, 7
        %v735 = vshll.u32 %v681, 16
        %v737 = vor.u32 %v734, %v735
        %v738 = vrot.slane %v734, 4
        %v740 = vshrl.u32 %v682, 16
        %v742 = vrot.slane %v740, 7
        %v743 = vshll.u32 %v682, 16
        %v745 = vor.u32 %v742, %v743
        %v746 = vsel %vm713, %v738, %v745
        %v747 = vrot.slane %v742, 4
        %v749 = vshrl.u32 %v683, 16
        %v751 = vrot.slane %v749, 7
        %v752 = vshll.u32 %v683, 16
        %v754 = vor.u32 %v751, %v752
        %v755 = vrot.slane %v751, 4
        %v757 = vshrl.u32 %v684, 16
        %v759 = vrot.slane %v757, 7
        %v760 = vshll.u32 %v684, 16
        %v762 = vor.u32 %v759, %v760
        %v763 = vsel %vm713, %v755, %v762
        %v764 = vrot.slane %v759, 4
        %v766 = vshrl.u32 %v685, 16
        %v768 = vrot.slane %v766, 7
        %v769 = vshll.u32 %v685, 16
        %v771 = vor.u32 %v768, %v769
        %v772 = vrot.slane %v768, 4
        %v774 = vshrl.u32 %v686, 16
        %v776 = vrot.slane %v774, 7
        %v777 = vshll.u32 %v686, 16
        %v779 = vor.u32 %v776, %v777
        %v780 = vsel %vm713, %v772, %v779
        %v781 = vrot.slane %v776, 4
        %v783 = vshrl.u32 %v687, 16
        %v785 = vrot.slane %v783, 7
        %v786 = vshll.u32 %v687, 16
        %v788 = vor.u32 %v785, %v786
        %v789 = vrot.slane %v785, 4
        %v791 = vshrl.u32 %v688, 16
        %v793 = vrot.slane %v791, 7
        %v794 = vshll.u32 %v688, 16
        %v796 = vor.u32 %v793, %v794
        %v797 = vsel %vm713, %v789, %v796
        %v798 = vrot.slane %v793, 4
        %v800 = vshrl.u32 %v689, 16
        %v802 = vrot.slane %v800, 7
        %v803 = vshll.u32 %v689, 16
        %v805 = vor.u32 %v802, %v803
        %v806 = vrot.slane %v802, 4
        %v808 = vshrl.u32 %v690, 16
        %v810 = vrot.slane %v808, 7
        %v811 = vshll.u32 %v690, 16
        %v813 = vor.u32 %v810, %v811
        %v814 = vsel %vm713, %v806, %v813
        %v815 = vrot.slane %v810, 4
        %v817 = vshrl.u32 %v691, 16
        %v819 = vrot.slane %v817, 7
        %v820 = vshll.u32 %v691, 16
        %v822 = vor.u32 %v819, %v820
        %v823 = vrot.slane %v819, 4
        %v825 = vshrl.u32 %v692, 16
        %v827 = vrot.slane %v825, 7
        %v828 = vshll.u32 %v692, 16
        %v830 = vor.u32 %v827, %v828
        %v831 = vsel %vm713, %v823, %v830
        %v832 = vrot.slane %v827, 4
        %v834 = vshrl.u32 %v693, 16
        %v836 = vrot.slane %v834, 7
        %v837 = vshll.u32 %v693, 16
        %v839 = vor.u32 %v836, %v837
        %v840 = vrot.slane %v836, 4
        %v842 = vshrl.u32 %v694, 16
        %v844 = vrot.slane %v842, 7
        %v845 = vshll.u32 %v694, 16
        %v847 = vor.u32 %v844, %v845
        %v848 = vsel %vm713, %v840, %v847
        %v849 = vrot.slane %v844, 4
        %v851 = vshrl.u32 %v695, 16
        %v853 = vrot.slane %v851, 7
        %v854 = vshll.u32 %v695, 16
        %v856 = vor.u32 %v853, %v854
        %v857 = vrot.slane %v853, 4
        %v859 = vshrl.u32 %v696, 16
        %v861 = vrot.slane %v859, 7
        %v862 = vshll.u32 %v696, 16
        %v864 = vor.u32 %v861, %v862
        %v865 = vsel %vm713, %v857, %v864
        %v866 = vrot.slane %v861, 4
        %v868 = vshrl.u32 %v697, 16
        %v870 = vrot.slane %v868, 7
        %v871 = vshll.u32 %v697, 16
        %v873 = vor.u32 %v870, %v871
        %v874 = vrot.slane %v870, 4
        %v876 = vshrl.u32 %v698, 16
        %v878 = vrot.slane %v876, 7
        %v879 = vshll.u32 %v698, 16
        %v881 = vor.u32 %v878, %v879
        %v882 = vsel %vm713, %v874, %v881
        %v883 = vrot.slane %v878, 4
        %v885 = vshrl.u32 %v699, 16
        %v887 = vrot.slane %v885, 7
        %v888 = vshll.u32 %v699, 16
        %v890 = vor.u32 %v887, %v888
        %v891 = vrot.slane %v887, 4
        %v893 = vshrl.u32 %v700, 16
        %v895 = vrot.slane %v893, 7
        %v896 = vshll.u32 %v700, 16
        %v898 = vor.u32 %v895, %v896
        %v899 = vsel %vm713, %v891, %v898
        %v900 = vrot.slane %v895, 4
        %v902 = vshrl.u32 %v701, 16
        %v904 = vrot.slane %v902, 7
        %v905 = vshll.u32 %v701, 16
        %v907 = vor.u32 %v904, %v905
        %v908 = vrot.slane %v904, 4
        %v910 = vshrl.u32 %v702, 16
        %v912 = vrot.slane %v910, 7
        %v913 = vshll.u32 %v702, 16
        %v915 = vor.u32 %v912, %v913
        %v916 = vsel %vm713, %v908, %v915
        %v917 = vrot.slane %v912, 4
        %v919 = vshrl.u32 %v703, 16
        %v921 = vrot.slane %v919, 7
        %v922 = vshll.u32 %v703, 16
        %v924 = vor.u32 %v921, %v922
        %v925 = vrot.slane %v921, 4
        %v927 = vshrl.u32 %v704, 16
        %v929 = vrot.slane %v927, 7
        %v930 = vshll.u32 %v704, 16
        %v932 = vor.u32 %v929, %v930
        %v933 = vsel %vm713, %v925, %v932
        %v934 = vrot.slane %v929, 4
        %v936 = vshrl.u32 %v705, 16
        %v938 = vrot.slane %v936, 7
        %v939 = vshll.u32 %v705, 16
        %v941 = vor.u32 %v938, %v939
        %v942 = vrot.slane %v938, 4
        %v944 = vshrl.u32 %v706, 16
        %v946 = vrot.slane %v944, 7
        %v947 = vshll.u32 %v706, 16
        %v949 = vor.u32 %v946, %v947
        %v950 = vsel %vm713, %v942, %v949
        %v951 = vrot.slane %v946, 4
        %v953 = vshrl.u32 %v707, 16
        %v955 = vrot.slane %v953, 7
        %v956 = vshll.u32 %v707, 16
        %v958 = vor.u32 %v955, %v956
        %v959 = vrot.slane %v955, 4
        %v961 = vshrl.u32 %v708, 16
        %v963 = vrot.slane %v961, 7
        %v964 = vshll.u32 %v708, 16
        %v966 = vor.u32 %v963, %v964
        %v967 = vsel %vm713, %v959, %v966
        %v968 = vrot.slane %v963, 4
        %v970 = vshrl.u32 %v709, 16
        %v972 = vrot.slane %v970, 7
        %v973 = vshll.u32 %v709, 16
        %v975 = vor.u32 %v972, %v973
        %v976 = vrot.slane %v972, 4
        %v978 = vshrl.u32 %v710, 16
        %v980 = vrot.slane %v978, 7
        %v981 = vshll.u32 %v710, 16
        %v983 = vor.u32 %v980, %v981
        %v984 = vsel %vm713, %v976, %v983
        %v985 = vrot.slane %v980, 4
        %s1034 = scalar_lea.vmem [#allocation2], 12
        %vm1035 = vcmask 27648
        %vm1036 = vsmask.f32 7938
        %vm1037 = vmand %vm1035, %vm1036
        %v1038 = vld [vmem:[%s1034] sm:$0xf]
        %v1039 = vsel %vm1037, %v720, %v1038
        %1040 = vst [vmem:[%s1034] sm:$0xf] %v1039
        %1041 = vst.msk [vmem:[%s1034 + $0x4] sm:$0xf] %vm623, %v729
        %vm1042 = vcmask 24576
        %vm1043 = vmand %vm1042, %vm711
        %v1044 = vld [vmem:[%s1034 + $0x8] sm:$0x1]
        %v1045 = vsel %vm1043, %v730, %v1044
        %1046 = vst [vmem:[%s1034 + $0x8] sm:$0x1] %v1045
        %v1047 = vld [vmem:[%s1034 + $0xc] sm:$0xf]
        %v1048 = vsel %vm1037, %v737, %v1047
        %1049 = vst [vmem:[%s1034 + $0xc] sm:$0xf] %v1048
        %1050 = vst.msk [vmem:[%s1034 + $0x10] sm:$0xf] %vm623, %v746
        %v1051 = vld [vmem:[%s1034 + $0x14] sm:$0x1]
        %v1052 = vsel %vm1043, %v747, %v1051
        %1053 = vst [vmem:[%s1034 + $0x14] sm:$0x1] %v1052
        %v1054 = vld [vmem:[%s1034 + $0x18] sm:$0xf]
        %v1055 = vsel %vm1037, %v754, %v1054
        %1056 = vst [vmem:[%s1034 + $0x18] sm:$0xf] %v1055
        %1057 = vst.msk [vmem:[%s1034 + $0x1c] sm:$0xf] %vm623, %v763
        %v1058 = vld [vmem:[%s1034 + $0x20] sm:$0x1]
        %v1059 = vsel %vm1043, %v764, %v1058
        %1060 = vst [vmem:[%s1034 + $0x20] sm:$0x1] %v1059
        %v1061 = vld [vmem:[%s1034 + $0x24] sm:$0xf]
        %v1062 = vsel %vm1037, %v771, %v1061
        %1063 = vst [vmem:[%s1034 + $0x24] sm:$0xf] %v1062
        %1064 = vst.msk [vmem:[%s1034 + $0x28] sm:$0xf] %vm623, %v780
        %v1065 = vld [vmem:[%s1034 + $0x2c] sm:$0x1]
        %v1066 = vsel %vm1043, %v781, %v1065
        %1067 = vst [vmem:[%s1034 + $0x2c] sm:$0x1] %v1066
        %v1068 = vld [vmem:[%s1034 + $0x30] sm:$0xf]
        %v1069 = vsel %vm1037, %v788, %v1068
        %1070 = vst [vmem:[%s1034 + $0x30] sm:$0xf] %v1069
        %1071 = vst.msk [vmem:[%s1034 + $0x34] sm:$0xf] %vm623, %v797
        %v1072 = vld [vmem:[%s1034 + $0x38] sm:$0x1]
        %v1073 = vsel %vm1043, %v798, %v1072
        %1074 = vst [vmem:[%s1034 + $0x38] sm:$0x1] %v1073
        %v1075 = vld [vmem:[%s1034 + $0x3c] sm:$0xf]
        %v1076 = vsel %vm1037, %v805, %v1075
        %1077 = vst [vmem:[%s1034 + $0x3c] sm:$0xf] %v1076
        %1078 = vst.msk [vmem:[%s1034 + $0x40] sm:$0xf] %vm623, %v814
        %v1079 = vld [vmem:[%s1034 + $0x44] sm:$0x1]
        %v1080 = vsel %vm1043, %v815, %v1079
        %1081 = vst [vmem:[%s1034 + $0x44] sm:$0x1] %v1080
        %v1082 = vld [vmem:[%s1034 + $0x48] sm:$0xf]
        %v1083 = vsel %vm1037, %v822, %v1082
        %1084 = vst [vmem:[%s1034 + $0x48] sm:$0xf] %v1083
        %1085 = vst.msk [vmem:[%s1034 + $0x4c] sm:$0xf] %vm623, %v831
        %v1086 = vld [vmem:[%s1034 + $0x50] sm:$0x1]
        %v1087 = vsel %vm1043, %v832, %v1086
        %1088 = vst [vmem:[%s1034 + $0x50] sm:$0x1] %v1087
        %v1089 = vld [vmem:[%s1034 + $0x54] sm:$0xf]
        %v1090 = vsel %vm1037, %v839, %v1089
        %1091 = vst [vmem:[%s1034 + $0x54] sm:$0xf] %v1090
        %1092 = vst.msk [vmem:[%s1034 + $0x58] sm:$0xf] %vm623, %v848
        %v1093 = vld [vmem:[%s1034 + $0x5c] sm:$0x1]
        %v1094 = vsel %vm1043, %v849, %v1093
        %1095 = vst [vmem:[%s1034 + $0x5c] sm:$0x1] %v1094
        %v1096 = vld [vmem:[%s1034 + $0x60] sm:$0xf]
        %v1097 = vsel %vm1037, %v856, %v1096
        %1098 = vst [vmem:[%s1034 + $0x60] sm:$0xf] %v1097
        %1099 = vst.msk [vmem:[%s1034 + $0x64] sm:$0xf] %vm623, %v865
        %v1100 = vld [vmem:[%s1034 + $0x68] sm:$0x1]
        %v1101 = vsel %vm1043, %v866, %v1100
        %1102 = vst [vmem:[%s1034 + $0x68] sm:$0x1] %v1101
        %v1103 = vld [vmem:[%s1034 + $0x6c] sm:$0xf]
        %v1104 = vsel %vm1037, %v873, %v1103
        %1105 = vst [vmem:[%s1034 + $0x6c] sm:$0xf] %v1104
        %1106 = vst.msk [vmem:[%s1034 + $0x70] sm:$0xf] %vm623, %v882
        %v1107 = vld [vmem:[%s1034 + $0x74] sm:$0x1]
        %v1108 = vsel %vm1043, %v883, %v1107
        %1109 = vst [vmem:[%s1034 + $0x74] sm:$0x1] %v1108
        %v1110 = vld [vmem:[%s1034 + $0x78] sm:$0xf]
        %v1111 = vsel %vm1037, %v890, %v1110
        %1112 = vst [vmem:[%s1034 + $0x78] sm:$0xf] %v1111
        %1113 = vst.msk [vmem:[%s1034 + $0x7c] sm:$0xf] %vm623, %v899
        %v1114 = vld [vmem:[%s1034 + $0x80] sm:$0x1]
        %v1115 = vsel %vm1043, %v900, %v1114
        %1116 = vst [vmem:[%s1034 + $0x80] sm:$0x1] %v1115
        %v1117 = vld [vmem:[%s1034 + $0x84] sm:$0xf]
        %v1118 = vsel %vm1037, %v907, %v1117
        %1119 = vst [vmem:[%s1034 + $0x84] sm:$0xf] %v1118
        %1120 = vst.msk [vmem:[%s1034 + $0x88] sm:$0xf] %vm623, %v916
        %v1121 = vld [vmem:[%s1034 + $0x8c] sm:$0x1]
        %v1122 = vsel %vm1043, %v917, %v1121
        %1123 = vst [vmem:[%s1034 + $0x8c] sm:$0x1] %v1122
        %v1124 = vld [vmem:[%s1034 + $0x90] sm:$0xf]
        %v1125 = vsel %vm1037, %v924, %v1124
        %1126 = vst [vmem:[%s1034 + $0x90] sm:$0xf] %v1125
        %1127 = vst.msk [vmem:[%s1034 + $0x94] sm:$0xf] %vm623, %v933
        %v1128 = vld [vmem:[%s1034 + $0x98] sm:$0x1]
        %v1129 = vsel %vm1043, %v934, %v1128
        %1130 = vst [vmem:[%s1034 + $0x98] sm:$0x1] %v1129
        %v1131 = vld [vmem:[%s1034 + $0x9c] sm:$0xf]
        %v1132 = vsel %vm1037, %v941, %v1131
        %1133 = vst [vmem:[%s1034 + $0x9c] sm:$0xf] %v1132
        %1134 = vst.msk [vmem:[%s1034 + $0xa0] sm:$0xf] %vm623, %v950
        %v1135 = vld [vmem:[%s1034 + $0xa4] sm:$0x1]
        %v1136 = vsel %vm1043, %v951, %v1135
        %1137 = vst [vmem:[%s1034 + $0xa4] sm:$0x1] %v1136
        %v1138 = vld [vmem:[%s1034 + $0xa8] sm:$0xf]
        %v1139 = vsel %vm1037, %v958, %v1138
        %1140 = vst [vmem:[%s1034 + $0xa8] sm:$0xf] %v1139
        %1141 = vst.msk [vmem:[%s1034 + $0xac] sm:$0xf] %vm623, %v967
        %v1142 = vld [vmem:[%s1034 + $0xb0] sm:$0x1]
        %v1143 = vsel %vm1043, %v968, %v1142
        %1144 = vst [vmem:[%s1034 + $0xb0] sm:$0x1] %v1143
        %v1145 = vld [vmem:[%s1034 + $0xb4] sm:$0xf]
        %v1146 = vsel %vm1037, %v975, %v1145
        %1147 = vst [vmem:[%s1034 + $0xb4] sm:$0xf] %v1146
        %1148 = vst.msk [vmem:[%s1034 + $0xb8] sm:$0xf] %vm623, %v984
        %v1149 = vld [vmem:[%s1034 + $0xbc] sm:$0x1]
        %v1150 = vsel %vm1043, %v985, %v1149
        %1151 = vst [vmem:[%s1034 + $0xbc] sm:$0x1] %v1150
        %v1152 = vld [vmem:[#allocation2] sm:$0xf]
        %v1153 = vld [vmem:[#allocation2 + $0x4] sm:$0xf]
        %v1154 = vld [vmem:[#allocation2 + $0xc] sm:$0xf]
        %v1155 = vld [vmem:[#allocation2 + $0x10] sm:$0xf]
        %v1156 = vld [vmem:[#allocation2 + $0x18] sm:$0xf]
        %v1157 = vld [vmem:[#allocation2 + $0x1c] sm:$0xf]
        %v1158 = vld [vmem:[#allocation2 + $0x24] sm:$0xf]
        %v1159 = vld [vmem:[#allocation2 + $0x28] sm:$0xf]
        %v1160 = vld [vmem:[#allocation2 + $0x30] sm:$0xf]
        %v1161 = vld [vmem:[#allocation2 + $0x34] sm:$0xf]
        %v1162 = vld [vmem:[#allocation2 + $0x3c] sm:$0xf]
        %v1163 = vld [vmem:[#allocation2 + $0x40] sm:$0xf]
        %v1164 = vld [vmem:[#allocation2 + $0x48] sm:$0xf]
        %v1165 = vld [vmem:[#allocation2 + $0x4c] sm:$0xf]
        %v1166 = vld [vmem:[#allocation2 + $0x54] sm:$0xf]
        %v1167 = vld [vmem:[#allocation2 + $0x58] sm:$0xf]
        %v1168 = vld [vmem:[#allocation2 + $0x60] sm:$0xf]
        %v1169 = vld [vmem:[#allocation2 + $0x64] sm:$0xf]
        %v1170 = vld [vmem:[#allocation2 + $0x6c] sm:$0xf]
        %v1171 = vld [vmem:[#allocation2 + $0x70] sm:$0xf]
        %v1172 = vld [vmem:[#allocation2 + $0x78] sm:$0xf]
        %v1173 = vld [vmem:[#allocation2 + $0x7c] sm:$0xf]
        %v1174 = vld [vmem:[#allocation2 + $0x84] sm:$0xf]
        %v1175 = vld [vmem:[#allocation2 + $0x88] sm:$0xf]
        %v1176 = vld [vmem:[#allocation2 + $0x90] sm:$0xf]
        %v1177 = vld [vmem:[#allocation2 + $0x94] sm:$0xf]
        %v1178 = vld [vmem:[#allocation2 + $0x9c] sm:$0xf]
        %v1179 = vld [vmem:[#allocation2 + $0xa0] sm:$0xf]
        %v1180 = vld [vmem:[#allocation2 + $0xa8] sm:$0xf]
        %v1181 = vld [vmem:[#allocation2 + $0xac] sm:$0xf]
        %v1182 = vld [vmem:[#allocation2 + $0xb4] sm:$0xf]
        %v1183 = vld [vmem:[#allocation2 + $0xb8] sm:$0xf]
        %v1184 = vld [vmem:[#allocation2 + $0x8] sm:$0x1]
        %v1185 = vld [vmem:[#allocation2 + $0x14] sm:$0x1]
        %v1186 = vld [vmem:[#allocation2 + $0x20] sm:$0x1]
        %v1187 = vld [vmem:[#allocation2 + $0x2c] sm:$0x1]
        %v1188 = vld [vmem:[#allocation2 + $0x38] sm:$0x1]
        %v1189 = vld [vmem:[#allocation2 + $0x44] sm:$0x1]
        %v1190 = vld [vmem:[#allocation2 + $0x50] sm:$0x1]
        %v1191 = vld [vmem:[#allocation2 + $0x5c] sm:$0x1]
        %v1192 = vld [vmem:[#allocation2 + $0x68] sm:$0x1]
        %v1193 = vld [vmem:[#allocation2 + $0x74] sm:$0x1]
        %v1194 = vld [vmem:[#allocation2 + $0x80] sm:$0x1]
        %v1195 = vld [vmem:[#allocation2 + $0x8c] sm:$0x1]
        %v1196 = vld [vmem:[#allocation2 + $0x98] sm:$0x1]
        %v1197 = vld [vmem:[#allocation2 + $0xa4] sm:$0x1]
        %v1198 = vld [vmem:[#allocation2 + $0xb0] sm:$0x1]
        %v1199 = vld [vmem:[#allocation2 + $0xbc] sm:$0x1]
        %vm1200 = vsmask.f32 3328
        %vm1201 = vsmask.f32 7440
        %vm1202 = vmor %vm1200, %vm1201
        %v1204 = vshrl.u32 %v1152, 16
        %v1206 = vrot.slane %v1204, 4
        %v1207 = vshll.u32 %v1152, 16
        %v1209 = vrot.slane %v1207, 5
        %v1210 = vor.u32 %v1206, %v1209
        %v1211 = vrot.slane %v1210, 4
        %v1213 = vshll.u32 %v1153, 16
        %v1215 = vrot.slane %v1213, 5
        %v1216 = vsel %vm1202, %v1211, %v1215
        %v1217 = vshrl.u32 %v1153, 16
        %v1219 = vrot.slane %v1217, 4
        %v1220 = vor.u32 %v1219, %v1215
        %v1221 = vrot.slane %v1220, 4
        %v1223 = vshll.u32 %v1184, 16
        %v1225 = vrot.slane %v1223, 5
        %v1226 = vsel %vm1202, %v1221, %v1225
        %v1228 = vshrl.u32 %v1154, 16
        %v1230 = vrot.slane %v1228, 4
        %v1231 = vshll.u32 %v1154, 16
        %v1233 = vrot.slane %v1231, 5
        %v1234 = vor.u32 %v1230, %v1233
        %v1235 = vrot.slane %v1234, 4
        %v1237 = vshll.u32 %v1155, 16
        %v1239 = vrot.slane %v1237, 5
        %v1240 = vsel %vm1202, %v1235, %v1239
        %v1241 = vshrl.u32 %v1155, 16
        %v1243 = vrot.slane %v1241, 4
        %v1244 = vor.u32 %v1243, %v1239
        %v1245 = vrot.slane %v1244, 4
        %v1247 = vshll.u32 %v1185, 16
        %v1249 = vrot.slane %v1247, 5
        %v1250 = vsel %vm1202, %v1245, %v1249
        %v1252 = vshrl.u32 %v1156, 16
        %v1254 = vrot.slane %v1252, 4
        %v1255 = vshll.u32 %v1156, 16
        %v1257 = vrot.slane %v1255, 5
        %v1258 = vor.u32 %v1254, %v1257
        %v1259 = vrot.slane %v1258, 4
        %v1261 = vshll.u32 %v1157, 16
        %v1263 = vrot.slane %v1261, 5
        %v1264 = vsel %vm1202, %v1259, %v1263
        %v1265 = vshrl.u32 %v1157, 16
        %v1267 = vrot.slane %v1265, 4
        %v1268 = vor.u32 %v1267, %v1263
        %v1269 = vrot.slane %v1268, 4
        %v1271 = vshll.u32 %v1186, 16
        %v1273 = vrot.slane %v1271, 5
        %v1274 = vsel %vm1202, %v1269, %v1273
        %v1276 = vshrl.u32 %v1158, 16
        %v1278 = vrot.slane %v1276, 4
        %v1279 = vshll.u32 %v1158, 16
        %v1281 = vrot.slane %v1279, 5
        %v1282 = vor.u32 %v1278, %v1281
        %v1283 = vrot.slane %v1282, 4
        %v1285 = vshll.u32 %v1159, 16
        %v1287 = vrot.slane %v1285, 5
        %v1288 = vsel %vm1202, %v1283, %v1287
        %v1289 = vshrl.u32 %v1159, 16
        %v1291 = vrot.slane %v1289, 4
        %v1292 = vor.u32 %v1291, %v1287
        %v1293 = vrot.slane %v1292, 4
        %v1295 = vshll.u32 %v1187, 16
        %v1297 = vrot.slane %v1295, 5
        %v1298 = vsel %vm1202, %v1293, %v1297
        %v1300 = vshrl.u32 %v1160, 16
        %v1302 = vrot.slane %v1300, 4
        %v1303 = vshll.u32 %v1160, 16
        %v1305 = vrot.slane %v1303, 5
        %v1306 = vor.u32 %v1302, %v1305
        %v1307 = vrot.slane %v1306, 4
        %v1309 = vshll.u32 %v1161, 16
        %v1311 = vrot.slane %v1309, 5
        %v1312 = vsel %vm1202, %v1307, %v1311
        %v1313 = vshrl.u32 %v1161, 16
        %v1315 = vrot.slane %v1313, 4
        %v1316 = vor.u32 %v1315, %v1311
        %v1317 = vrot.slane %v1316, 4
        %v1319 = vshll.u32 %v1188, 16
        %v1321 = vrot.slane %v1319, 5
        %v1322 = vsel %vm1202, %v1317, %v1321
        %v1324 = vshrl.u32 %v1162, 16
        %v1326 = vrot.slane %v1324, 4
        %v1327 = vshll.u32 %v1162, 16
        %v1329 = vrot.slane %v1327, 5
        %v1330 = vor.u32 %v1326, %v1329
        %v1331 = vrot.slane %v1330, 4
        %v1333 = vshll.u32 %v1163, 16
        %v1335 = vrot.slane %v1333, 5
        %v1336 = vsel %vm1202, %v1331, %v1335
        %v1337 = vshrl.u32 %v1163, 16
        %v1339 = vrot.slane %v1337, 4
        %v1340 = vor.u32 %v1339, %v1335
        %v1341 = vrot.slane %v1340, 4
        %v1343 = vshll.u32 %v1189, 16
        %v1345 = vrot.slane %v1343, 5
        %v1346 = vsel %vm1202, %v1341, %v1345
        %v1348 = vshrl.u32 %v1164, 16
        %v1350 = vrot.slane %v1348, 4
        %v1351 = vshll.u32 %v1164, 16
        %v1353 = vrot.slane %v1351, 5
        %v1354 = vor.u32 %v1350, %v1353
        %v1355 = vrot.slane %v1354, 4
        %v1357 = vshll.u32 %v1165, 16
        %v1359 = vrot.slane %v1357, 5
        %v1360 = vsel %vm1202, %v1355, %v1359
        %v1361 = vshrl.u32 %v1165, 16
        %v1363 = vrot.slane %v1361, 4
        %v1364 = vor.u32 %v1363, %v1359
        %v1365 = vrot.slane %v1364, 4
        %v1367 = vshll.u32 %v1190, 16
        %v1369 = vrot.slane %v1367, 5
        %v1370 = vsel %vm1202, %v1365, %v1369
        %v1372 = vshrl.u32 %v1166, 16
        %v1374 = vrot.slane %v1372, 4
        %v1375 = vshll.u32 %v1166, 16
        %v1377 = vrot.slane %v1375, 5
        %v1378 = vor.u32 %v1374, %v1377
        %v1379 = vrot.slane %v1378, 4
        %v1381 = vshll.u32 %v1167, 16
        %v1383 = vrot.slane %v1381, 5
        %v1384 = vsel %vm1202, %v1379, %v1383
        %v1385 = vshrl.u32 %v1167, 16
        %v1387 = vrot.slane %v1385, 4
        %v1388 = vor.u32 %v1387, %v1383
        %v1389 = vrot.slane %v1388, 4
        %v1391 = vshll.u32 %v1191, 16
        %v1393 = vrot.slane %v1391, 5
        %v1394 = vsel %vm1202, %v1389, %v1393
        %v1396 = vshrl.u32 %v1168, 16
        %v1398 = vrot.slane %v1396, 4
        %v1399 = vshll.u32 %v1168, 16
        %v1401 = vrot.slane %v1399, 5
        %v1402 = vor.u32 %v1398, %v1401
        %v1403 = vrot.slane %v1402, 4
        %v1405 = vshll.u32 %v1169, 16
        %v1407 = vrot.slane %v1405, 5
        %v1408 = vsel %vm1202, %v1403, %v1407
        %v1409 = vshrl.u32 %v1169, 16
        %v1411 = vrot.slane %v1409, 4
        %v1412 = vor.u32 %v1411, %v1407
        %v1413 = vrot.slane %v1412, 4
        %v1415 = vshll.u32 %v1192, 16
        %v1417 = vrot.slane %v1415, 5
        %v1418 = vsel %vm1202, %v1413, %v1417
        %v1420 = vshrl.u32 %v1170, 16
        %v1422 = vrot.slane %v1420, 4
        %v1423 = vshll.u32 %v1170, 16
        %v1425 = vrot.slane %v1423, 5
        %v1426 = vor.u32 %v1422, %v1425
        %v1427 = vrot.slane %v1426, 4
        %v1429 = vshll.u32 %v1171, 16
        %v1431 = vrot.slane %v1429, 5
        %v1432 = vsel %vm1202, %v1427, %v1431
        %v1433 = vshrl.u32 %v1171, 16
        %v1435 = vrot.slane %v1433, 4
        %v1436 = vor.u32 %v1435, %v1431
        %v1437 = vrot.slane %v1436, 4
        %v1439 = vshll.u32 %v1193, 16
        %v1441 = vrot.slane %v1439, 5
        %v1442 = vsel %vm1202, %v1437, %v1441
        %v1444 = vshrl.u32 %v1172, 16
        %v1446 = vrot.slane %v1444, 4
        %v1447 = vshll.u32 %v1172, 16
        %v1449 = vrot.slane %v1447, 5
        %v1450 = vor.u32 %v1446, %v1449
        %v1451 = vrot.slane %v1450, 4
        %v1453 = vshll.u32 %v1173, 16
        %v1455 = vrot.slane %v1453, 5
        %v1456 = vsel %vm1202, %v1451, %v1455
        %v1457 = vshrl.u32 %v1173, 16
        %v1459 = vrot.slane %v1457, 4
        %v1460 = vor.u32 %v1459, %v1455
        %v1461 = vrot.slane %v1460, 4
        %v1463 = vshll.u32 %v1194, 16
        %v1465 = vrot.slane %v1463, 5
        %v1466 = vsel %vm1202, %v1461, %v1465
        %v1468 = vshrl.u32 %v1174, 16
        %v1470 = vrot.slane %v1468, 4
        %v1471 = vshll.u32 %v1174, 16
        %v1473 = vrot.slane %v1471, 5
        %v1474 = vor.u32 %v1470, %v1473
        %v1475 = vrot.slane %v1474, 4
        %v1477 = vshll.u32 %v1175, 16
        %v1479 = vrot.slane %v1477, 5
        %v1480 = vsel %vm1202, %v1475, %v1479
        %v1481 = vshrl.u32 %v1175, 16
        %v1483 = vrot.slane %v1481, 4
        %v1484 = vor.u32 %v1483, %v1479
        %v1485 = vrot.slane %v1484, 4
        %v1487 = vshll.u32 %v1195, 16
        %v1489 = vrot.slane %v1487, 5
        %v1490 = vsel %vm1202, %v1485, %v1489
        %v1492 = vshrl.u32 %v1176, 16
        %v1494 = vrot.slane %v1492, 4
        %v1495 = vshll.u32 %v1176, 16
        %v1497 = vrot.slane %v1495, 5
        %v1498 = vor.u32 %v1494, %v1497
        %v1499 = vrot.slane %v1498, 4
        %v1501 = vshll.u32 %v1177, 16
        %v1503 = vrot.slane %v1501, 5
        %v1504 = vsel %vm1202, %v1499, %v1503
        %v1505 = vshrl.u32 %v1177, 16
        %v1507 = vrot.slane %v1505, 4
        %v1508 = vor.u32 %v1507, %v1503
        %v1509 = vrot.slane %v1508, 4
        %v1511 = vshll.u32 %v1196, 16
        %v1513 = vrot.slane %v1511, 5
        %v1514 = vsel %vm1202, %v1509, %v1513
        %v1516 = vshrl.u32 %v1178, 16
        %v1518 = vrot.slane %v1516, 4
        %v1519 = vshll.u32 %v1178, 16
        %v1521 = vrot.slane %v1519, 5
        %v1522 = vor.u32 %v1518, %v1521
        %v1523 = vrot.slane %v1522, 4
        %v1525 = vshll.u32 %v1179, 16
        %v1527 = vrot.slane %v1525, 5
        %v1528 = vsel %vm1202, %v1523, %v1527
        %v1529 = vshrl.u32 %v1179, 16
        %v1531 = vrot.slane %v1529, 4
        %v1532 = vor.u32 %v1531, %v1527
        %v1533 = vrot.slane %v1532, 4
        %v1535 = vshll.u32 %v1197, 16
        %v1537 = vrot.slane %v1535, 5
        %v1538 = vsel %vm1202, %v1533, %v1537
        %v1540 = vshrl.u32 %v1180, 16
        %v1542 = vrot.slane %v1540, 4
        %v1543 = vshll.u32 %v1180, 16
        %v1545 = vrot.slane %v1543, 5
        %v1546 = vor.u32 %v1542, %v1545
        %v1547 = vrot.slane %v1546, 4
        %v1549 = vshll.u32 %v1181, 16
        %v1551 = vrot.slane %v1549, 5
        %v1552 = vsel %vm1202, %v1547, %v1551
        %v1553 = vshrl.u32 %v1181, 16
        %v1555 = vrot.slane %v1553, 4
        %v1556 = vor.u32 %v1555, %v1551
        %v1557 = vrot.slane %v1556, 4
        %v1559 = vshll.u32 %v1198, 16
        %v1561 = vrot.slane %v1559, 5
        %v1562 = vsel %vm1202, %v1557, %v1561
        %v1564 = vshrl.u32 %v1182, 16
        %v1566 = vrot.slane %v1564, 4
        %v1567 = vshll.u32 %v1182, 16
        %v1569 = vrot.slane %v1567, 5
        %v1570 = vor.u32 %v1566, %v1569
        %v1571 = vrot.slane %v1570, 4
        %v1573 = vshll.u32 %v1183, 16
        %v1575 = vrot.slane %v1573, 5
        %v1576 = vsel %vm1202, %v1571, %v1575
        %v1577 = vshrl.u32 %v1183, 16
        %v1579 = vrot.slane %v1577, 4
        %v1580 = vor.u32 %v1579, %v1575
        %v1581 = vrot.slane %v1580, 4
        %v1583 = vshll.u32 %v1199, 16
        %v1585 = vrot.slane %v1583, 5
        %v1586 = vsel %vm1202, %v1581, %v1585
        %v1587 = vld [vmem:[#allocation2] sm:$0xe]
        %v1588 = vld [vmem:[#allocation2 + $0xc] sm:$0xe]
        %v1589 = vld [vmem:[#allocation2 + $0x18] sm:$0xe]
        %v1590 = vld [vmem:[#allocation2 + $0x24] sm:$0xe]
        %v1591 = vld [vmem:[#allocation2 + $0x30] sm:$0xe]
        %v1592 = vld [vmem:[#allocation2 + $0x3c] sm:$0xe]
        %v1593 = vld [vmem:[#allocation2 + $0x48] sm:$0xe]
        %v1594 = vld [vmem:[#allocation2 + $0x54] sm:$0xe]
        %v1595 = vld [vmem:[#allocation2 + $0x60] sm:$0xe]
        %v1596 = vld [vmem:[#allocation2 + $0x6c] sm:$0xe]
        %v1597 = vld [vmem:[#allocation2 + $0x78] sm:$0xe]
        %v1598 = vld [vmem:[#allocation2 + $0x84] sm:$0xe]
        %v1599 = vld [vmem:[#allocation2 + $0x90] sm:$0xe]
        %v1600 = vld [vmem:[#allocation2 + $0x9c] sm:$0xe]
        %v1601 = vld [vmem:[#allocation2 + $0xa8] sm:$0xe]
        %v1602 = vld [vmem:[#allocation2 + $0xb4] sm:$0xe]
        %vm1651 = vcmask 1042432
        %vm1652 = vcmask 1046532
        %vm1653 = vmor %vm1651, %vm1652
        %v1654 = vrot.slane %v1587, 5
        %v1655 = vrot.slane %v1654, 4
        %v1656 = vrot.slane %v1153, 5
        %v1657 = vsel %vm1653, %v1655, %v1656
        %v1658 = vrot.slane %v1656, 4
        %v1659 = vrot.slane %v1184, 5
        %v1660 = vsel %vm1653, %v1658, %v1659
        %v1661 = vrot.slane %v1588, 5
        %v1662 = vrot.slane %v1661, 4
        %v1663 = vrot.slane %v1155, 5
        %v1664 = vsel %vm1653, %v1662, %v1663
        %v1665 = vrot.slane %v1663, 4
        %v1666 = vrot.slane %v1185, 5
        %v1667 = vsel %vm1653, %v1665, %v1666
        %v1668 = vrot.slane %v1589, 5
        %v1669 = vrot.slane %v1668, 4
        %v1670 = vrot.slane %v1157, 5
        %v1671 = vsel %vm1653, %v1669, %v1670
        %v1672 = vrot.slane %v1670, 4
        %v1673 = vrot.slane %v1186, 5
        %v1674 = vsel %vm1653, %v1672, %v1673
        %v1675 = vrot.slane %v1590, 5
        %v1676 = vrot.slane %v1675, 4
        %v1677 = vrot.slane %v1159, 5
        %v1678 = vsel %vm1653, %v1676, %v1677
        %v1679 = vrot.slane %v1677, 4
        %v1680 = vrot.slane %v1187, 5
        %v1681 = vsel %vm1653, %v1679, %v1680
        %v1682 = vrot.slane %v1591, 5
        %v1683 = vrot.slane %v1682, 4
        %v1684 = vrot.slane %v1161, 5
        %v1685 = vsel %vm1653, %v1683, %v1684
        %v1686 = vrot.slane %v1684, 4
        %v1687 = vrot.slane %v1188, 5
        %v1688 = vsel %vm1653, %v1686, %v1687
        %v1689 = vrot.slane %v1592, 5
        %v1690 = vrot.slane %v1689, 4
        %v1691 = vrot.slane %v1163, 5
        %v1692 = vsel %vm1653, %v1690, %v1691
        %v1693 = vrot.slane %v1691, 4
        %v1694 = vrot.slane %v1189, 5
        %v1695 = vsel %vm1653, %v1693, %v1694
        %v1696 = vrot.slane %v1593, 5
        %v1697 = vrot.slane %v1696, 4
        %v1698 = vrot.slane %v1165, 5
        %v1699 = vsel %vm1653, %v1697, %v1698
        %v1700 = vrot.slane %v1698, 4
        %v1701 = vrot.slane %v1190, 5
        %v1702 = vsel %vm1653, %v1700, %v1701
        %v1703 = vrot.slane %v1594, 5
        %v1704 = vrot.slane %v1703, 4
        %v1705 = vrot.slane %v1167, 5
        %v1706 = vsel %vm1653, %v1704, %v1705
        %v1707 = vrot.slane %v1705, 4
        %v1708 = vrot.slane %v1191, 5
        %v1709 = vsel %vm1653, %v1707, %v1708
        %v1710 = vrot.slane %v1595, 5
        %v1711 = vrot.slane %v1710, 4
        %v1712 = vrot.slane %v1169, 5
        %v1713 = vsel %vm1653, %v1711, %v1712
        %v1714 = vrot.slane %v1712, 4
        %v1715 = vrot.slane %v1192, 5
        %v1716 = vsel %vm1653, %v1714, %v1715
        %v1717 = vrot.slane %v1596, 5
        %v1718 = vrot.slane %v1717, 4
        %v1719 = vrot.slane %v1171, 5
        %v1720 = vsel %vm1653, %v1718, %v1719
        %v1721 = vrot.slane %v1719, 4
        %v1722 = vrot.slane %v1193, 5
        %v1723 = vsel %vm1653, %v1721, %v1722
        %v1724 = vrot.slane %v1597, 5
        %v1725 = vrot.slane %v1724, 4
        %v1726 = vrot.slane %v1173, 5
        %v1727 = vsel %vm1653, %v1725, %v1726
        %v1728 = vrot.slane %v1726, 4
        %v1729 = vrot.slane %v1194, 5
        %v1730 = vsel %vm1653, %v1728, %v1729
        %v1731 = vrot.slane %v1598, 5
        %v1732 = vrot.slane %v1731, 4
        %v1733 = vrot.slane %v1175, 5
        %v1734 = vsel %vm1653, %v1732, %v1733
        %v1735 = vrot.slane %v1733, 4
        %v1736 = vrot.slane %v1195, 5
        %v1737 = vsel %vm1653, %v1735, %v1736
        %v1738 = vrot.slane %v1599, 5
        %v1739 = vrot.slane %v1738, 4
        %v1740 = vrot.slane %v1177, 5
        %v1741 = vsel %vm1653, %v1739, %v1740
        %v1742 = vrot.slane %v1740, 4
        %v1743 = vrot.slane %v1196, 5
        %v1744 = vsel %vm1653, %v1742, %v1743
        %v1745 = vrot.slane %v1600, 5
        %v1746 = vrot.slane %v1745, 4
        %v1747 = vrot.slane %v1179, 5
        %v1748 = vsel %vm1653, %v1746, %v1747
        %v1749 = vrot.slane %v1747, 4
        %v1750 = vrot.slane %v1197, 5
        %v1751 = vsel %vm1653, %v1749, %v1750
        %v1752 = vrot.slane %v1601, 5
        %v1753 = vrot.slane %v1752, 4
        %v1754 = vrot.slane %v1181, 5
        %v1755 = vsel %vm1653, %v1753, %v1754
        %v1756 = vrot.slane %v1754, 4
        %v1757 = vrot.slane %v1198, 5
        %v1758 = vsel %vm1653, %v1756, %v1757
        %v1759 = vrot.slane %v1602, 5
        %v1760 = vrot.slane %v1759, 4
        %v1761 = vrot.slane %v1183, 5
        %v1762 = vsel %vm1653, %v1760, %v1761
        %v1763 = vrot.slane %v1761, 4
        %v1764 = vrot.slane %v1199, 5
        %v1765 = vsel %vm1653, %v1763, %v1764
        %v1766 = vld [vmem:[%s1034] sm:$0xf]
        %v1767 = vld [vmem:[%s1034 + $0x4] sm:$0xf]
        %v1768 = vld [vmem:[%s1034 + $0xc] sm:$0xf]
        %v1769 = vld [vmem:[%s1034 + $0x10] sm:$0xf]
        %v1770 = vld [vmem:[%s1034 + $0x18] sm:$0xf]
        %v1771 = vld [vmem:[%s1034 + $0x1c] sm:$0xf]
        %v1772 = vld [vmem:[%s1034 + $0x24] sm:$0xf]
        %v1773 = vld [vmem:[%s1034 + $0x28] sm:$0xf]
        %v1774 = vld [vmem:[%s1034 + $0x30] sm:$0xf]
        %v1775 = vld [vmem:[%s1034 + $0x34] sm:$0xf]
        %v1776 = vld [vmem:[%s1034 + $0x3c] sm:$0xf]
        %v1777 = vld [vmem:[%s1034 + $0x40] sm:$0xf]
        %v1778 = vld [vmem:[%s1034 + $0x48] sm:$0xf]
        %v1779 = vld [vmem:[%s1034 + $0x4c] sm:$0xf]
        %v1780 = vld [vmem:[%s1034 + $0x54] sm:$0xf]
        %v1781 = vld [vmem:[%s1034 + $0x58] sm:$0xf]
        %v1782 = vld [vmem:[%s1034 + $0x60] sm:$0xf]
        %v1783 = vld [vmem:[%s1034 + $0x64] sm:$0xf]
        %v1784 = vld [vmem:[%s1034 + $0x6c] sm:$0xf]
        %v1785 = vld [vmem:[%s1034 + $0x70] sm:$0xf]
        %v1786 = vld [vmem:[%s1034 + $0x78] sm:$0xf]
        %v1787 = vld [vmem:[%s1034 + $0x7c] sm:$0xf]
        %v1788 = vld [vmem:[%s1034 + $0x84] sm:$0xf]
        %v1789 = vld [vmem:[%s1034 + $0x88] sm:$0xf]
        %v1790 = vld [vmem:[%s1034 + $0x90] sm:$0xf]
        %v1791 = vld [vmem:[%s1034 + $0x94] sm:$0xf]
        %v1792 = vld [vmem:[%s1034 + $0x9c] sm:$0xf]
        %v1793 = vld [vmem:[%s1034 + $0xa0] sm:$0xf]
        %v1794 = vld [vmem:[%s1034 + $0xa8] sm:$0xf]
        %v1795 = vld [vmem:[%s1034 + $0xac] sm:$0xf]
        %v1796 = vld [vmem:[%s1034 + $0xb4] sm:$0xf]
        %v1797 = vld [vmem:[%s1034 + $0xb8] sm:$0xf]
        %v1798 = vld [vmem:[%s1034 + $0x8] sm:$0x1]
        %v1799 = vld [vmem:[%s1034 + $0x14] sm:$0x1]
        %v1800 = vld [vmem:[%s1034 + $0x20] sm:$0x1]
        %v1801 = vld [vmem:[%s1034 + $0x2c] sm:$0x1]
        %v1802 = vld [vmem:[%s1034 + $0x38] sm:$0x1]
        %v1803 = vld [vmem:[%s1034 + $0x44] sm:$0x1]
        %v1804 = vld [vmem:[%s1034 + $0x50] sm:$0x1]
        %v1805 = vld [vmem:[%s1034 + $0x5c] sm:$0x1]
        %v1806 = vld [vmem:[%s1034 + $0x68] sm:$0x1]
        %v1807 = vld [vmem:[%s1034 + $0x74] sm:$0x1]
        %v1808 = vld [vmem:[%s1034 + $0x80] sm:$0x1]
        %v1809 = vld [vmem:[%s1034 + $0x8c] sm:$0x1]
        %v1810 = vld [vmem:[%s1034 + $0x98] sm:$0x1]
        %v1811 = vld [vmem:[%s1034 + $0xa4] sm:$0x1]
        %v1812 = vld [vmem:[%s1034 + $0xb0] sm:$0x1]
        %v1813 = vld [vmem:[%s1034 + $0xbc] sm:$0x1]
        %v1815 = vshrl.u32 %v1766, 16
        %v1817 = vrot.slane %v1815, 4
        %v1818 = vshll.u32 %v1766, 16
        %v1820 = vrot.slane %v1818, 5
        %v1821 = vor.u32 %v1817, %v1820
        %v1822 = vrot.slane %v1821, 4
        %v1824 = vshll.u32 %v1767, 16
        %v1826 = vrot.slane %v1824, 5
        %v1827 = vsel %vm1202, %v1822, %v1826
        %v1828 = vshrl.u32 %v1767, 16
        %v1830 = vrot.slane %v1828, 4
        %v1831 = vor.u32 %v1830, %v1826
        %v1832 = vrot.slane %v1831, 4
        %v1834 = vshll.u32 %v1798, 16
        %v1836 = vrot.slane %v1834, 5
        %v1837 = vsel %vm1202, %v1832, %v1836
        %v1839 = vshrl.u32 %v1768, 16
        %v1841 = vrot.slane %v1839, 4
        %v1842 = vshll.u32 %v1768, 16
        %v1844 = vrot.slane %v1842, 5
        %v1845 = vor.u32 %v1841, %v1844
        %v1846 = vrot.slane %v1845, 4
        %v1848 = vshll.u32 %v1769, 16
        %v1850 = vrot.slane %v1848, 5
        %v1851 = vsel %vm1202, %v1846, %v1850
        %v1852 = vshrl.u32 %v1769, 16
        %v1854 = vrot.slane %v1852, 4
        %v1855 = vor.u32 %v1854, %v1850
        %v1856 = vrot.slane %v1855, 4
        %v1858 = vshll.u32 %v1799, 16
        %v1860 = vrot.slane %v1858, 5
        %v1861 = vsel %vm1202, %v1856, %v1860
        %v1863 = vshrl.u32 %v1770, 16
        %v1865 = vrot.slane %v1863, 4
        %v1866 = vshll.u32 %v1770, 16
        %v1868 = vrot.slane %v1866, 5
        %v1869 = vor.u32 %v1865, %v1868
        %v1870 = vrot.slane %v1869, 4
        %v1872 = vshll.u32 %v1771, 16
        %v1874 = vrot.slane %v1872, 5
        %v1875 = vsel %vm1202, %v1870, %v1874
        %v1876 = vshrl.u32 %v1771, 16
        %v1878 = vrot.slane %v1876, 4
        %v1879 = vor.u32 %v1878, %v1874
        %v1880 = vrot.slane %v1879, 4
        %v1882 = vshll.u32 %v1800, 16
        %v1884 = vrot.slane %v1882, 5
        %v1885 = vsel %vm1202, %v1880, %v1884
        %v1887 = vshrl.u32 %v1772, 16
        %v1889 = vrot.slane %v1887, 4
        %v1890 = vshll.u32 %v1772, 16
        %v1892 = vrot.slane %v1890, 5
        %v1893 = vor.u32 %v1889, %v1892
        %v1894 = vrot.slane %v1893, 4
        %v1896 = vshll.u32 %v1773, 16
        %v1898 = vrot.slane %v1896, 5
        %v1899 = vsel %vm1202, %v1894, %v1898
        %v1900 = vshrl.u32 %v1773, 16
        %v1902 = vrot.slane %v1900, 4
        %v1903 = vor.u32 %v1902, %v1898
        %v1904 = vrot.slane %v1903, 4
        %v1906 = vshll.u32 %v1801, 16
        %v1908 = vrot.slane %v1906, 5
        %v1909 = vsel %vm1202, %v1904, %v1908
        %v1911 = vshrl.u32 %v1774, 16
        %v1913 = vrot.slane %v1911, 4
        %v1914 = vshll.u32 %v1774, 16
        %v1916 = vrot.slane %v1914, 5
        %v1917 = vor.u32 %v1913, %v1916
        %v1918 = vrot.slane %v1917, 4
        %v1920 = vshll.u32 %v1775, 16
        %v1922 = vrot.slane %v1920, 5
        %v1923 = vsel %vm1202, %v1918, %v1922
        %v1924 = vshrl.u32 %v1775, 16
        %v1926 = vrot.slane %v1924, 4
        %v1927 = vor.u32 %v1926, %v1922
        %v1928 = vrot.slane %v1927, 4
        %v1930 = vshll.u32 %v1802, 16
        %v1932 = vrot.slane %v1930, 5
        %v1933 = vsel %vm1202, %v1928, %v1932
        %v1935 = vshrl.u32 %v1776, 16
        %v1937 = vrot.slane %v1935, 4
        %v1938 = vshll.u32 %v1776, 16
        %v1940 = vrot.slane %v1938, 5
        %v1941 = vor.u32 %v1937, %v1940
        %v1942 = vrot.slane %v1941, 4
        %v1944 = vshll.u32 %v1777, 16
        %v1946 = vrot.slane %v1944, 5
        %v1947 = vsel %vm1202, %v1942, %v1946
        %v1948 = vshrl.u32 %v1777, 16
        %v1950 = vrot.slane %v1948, 4
        %v1951 = vor.u32 %v1950, %v1946
        %v1952 = vrot.slane %v1951, 4
        %v1954 = vshll.u32 %v1803, 16
        %v1956 = vrot.slane %v1954, 5
        %v1957 = vsel %vm1202, %v1952, %v1956
        %v1959 = vshrl.u32 %v1778, 16
        %v1961 = vrot.slane %v1959, 4
        %v1962 = vshll.u32 %v1778, 16
        %v1964 = vrot.slane %v1962, 5
        %v1965 = vor.u32 %v1961, %v1964
        %v1966 = vrot.slane %v1965, 4
        %v1968 = vshll.u32 %v1779, 16
        %v1970 = vrot.slane %v1968, 5
        %v1971 = vsel %vm1202, %v1966, %v1970
        %v1972 = vshrl.u32 %v1779, 16
        %v1974 = vrot.slane %v1972, 4
        %v1975 = vor.u32 %v1974, %v1970
        %v1976 = vrot.slane %v1975, 4
        %v1978 = vshll.u32 %v1804, 16
        %v1980 = vrot.slane %v1978, 5
        %v1981 = vsel %vm1202, %v1976, %v1980
        %v1983 = vshrl.u32 %v1780, 16
        %v1985 = vrot.slane %v1983, 4
        %v1986 = vshll.u32 %v1780, 16
        %v1988 = vrot.slane %v1986, 5
        %v1989 = vor.u32 %v1985, %v1988
        %v1990 = vrot.slane %v1989, 4
        %v1992 = vshll.u32 %v1781, 16
        %v1994 = vrot.slane %v1992, 5
        %v1995 = vsel %vm1202, %v1990, %v1994
        %v1996 = vshrl.u32 %v1781, 16
        %v1998 = vrot.slane %v1996, 4
        %v1999 = vor.u32 %v1998, %v1994
        %v2000 = vrot.slane %v1999, 4
        %v2002 = vshll.u32 %v1805, 16
        %v2004 = vrot.slane %v2002, 5
        %v2005 = vsel %vm1202, %v2000, %v2004
        %v2007 = vshrl.u32 %v1782, 16
        %v2009 = vrot.slane %v2007, 4
        %v2010 = vshll.u32 %v1782, 16
        %v2012 = vrot.slane %v2010, 5
        %v2013 = vor.u32 %v2009, %v2012
        %v2014 = vrot.slane %v2013, 4
        %v2016 = vshll.u32 %v1783, 16
        %v2018 = vrot.slane %v2016, 5
        %v2019 = vsel %vm1202, %v2014, %v2018
        %v2020 = vshrl.u32 %v1783, 16
        %v2022 = vrot.slane %v2020, 4
        %v2023 = vor.u32 %v2022, %v2018
        %v2024 = vrot.slane %v2023, 4
        %v2026 = vshll.u32 %v1806, 16
        %v2028 = vrot.slane %v2026, 5
        %v2029 = vsel %vm1202, %v2024, %v2028
        %v2031 = vshrl.u32 %v1784, 16
        %v2033 = vrot.slane %v2031, 4
        %v2034 = vshll.u32 %v1784, 16
        %v2036 = vrot.slane %v2034, 5
        %v2037 = vor.u32 %v2033, %v2036
        %v2038 = vrot.slane %v2037, 4
        %v2040 = vshll.u32 %v1785, 16
        %v2042 = vrot.slane %v2040, 5
        %v2043 = vsel %vm1202, %v2038, %v2042
        %v2044 = vshrl.u32 %v1785, 16
        %v2046 = vrot.slane %v2044, 4
        %v2047 = vor.u32 %v2046, %v2042
        %v2048 = vrot.slane %v2047, 4
        %v2050 = vshll.u32 %v1807, 16
        %v2052 = vrot.slane %v2050, 5
        %v2053 = vsel %vm1202, %v2048, %v2052
        %v2055 = vshrl.u32 %v1786, 16
        %v2057 = vrot.slane %v2055, 4
        %v2058 = vshll.u32 %v1786, 16
        %v2060 = vrot.slane %v2058, 5
        %v2061 = vor.u32 %v2057, %v2060
        %v2062 = vrot.slane %v2061, 4
        %v2064 = vshll.u32 %v1787, 16
        %v2066 = vrot.slane %v2064, 5
        %v2067 = vsel %vm1202, %v2062, %v2066
        %v2068 = vshrl.u32 %v1787, 16
        %v2070 = vrot.slane %v2068, 4
        %v2071 = vor.u32 %v2070, %v2066
        %v2072 = vrot.slane %v2071, 4
        %v2074 = vshll.u32 %v1808, 16
        %v2076 = vrot.slane %v2074, 5
        %v2077 = vsel %vm1202, %v2072, %v2076
        %v2079 = vshrl.u32 %v1788, 16
        %v2081 = vrot.slane %v2079, 4
        %v2082 = vshll.u32 %v1788, 16
        %v2084 = vrot.slane %v2082, 5
        %v2085 = vor.u32 %v2081, %v2084
        %v2086 = vrot.slane %v2085, 4
        %v2088 = vshll.u32 %v1789, 16
        %v2090 = vrot.slane %v2088, 5
        %v2091 = vsel %vm1202, %v2086, %v2090
        %v2092 = vshrl.u32 %v1789, 16
        %v2094 = vrot.slane %v2092, 4
        %v2095 = vor.u32 %v2094, %v2090
        %v2096 = vrot.slane %v2095, 4
        %v2098 = vshll.u32 %v1809, 16
        %v2100 = vrot.slane %v2098, 5
        %v2101 = vsel %vm1202, %v2096, %v2100
        %v2103 = vshrl.u32 %v1790, 16
        %v2105 = vrot.slane %v2103, 4
        %v2106 = vshll.u32 %v1790, 16
        %v2108 = vrot.slane %v2106, 5
        %v2109 = vor.u32 %v2105, %v2108
        %v2110 = vrot.slane %v2109, 4
        %v2112 = vshll.u32 %v1791, 16
        %v2114 = vrot.slane %v2112, 5
        %v2115 = vsel %vm1202, %v2110, %v2114
        %v2116 = vshrl.u32 %v1791, 16
        %v2118 = vrot.slane %v2116, 4
        %v2119 = vor.u32 %v2118, %v2114
        %v2120 = vrot.slane %v2119, 4
        %v2122 = vshll.u32 %v1810, 16
        %v2124 = vrot.slane %v2122, 5
        %v2125 = vsel %vm1202, %v2120, %v2124
        %v2127 = vshrl.u32 %v1792, 16
        %v2129 = vrot.slane %v2127, 4
        %v2130 = vshll.u32 %v1792, 16
        %v2132 = vrot.slane %v2130, 5
        %v2133 = vor.u32 %v2129, %v2132
        %v2134 = vrot.slane %v2133, 4
        %v2136 = vshll.u32 %v1793, 16
        %v2138 = vrot.slane %v2136, 5
        %v2139 = vsel %vm1202, %v2134, %v2138
        %v2140 = vshrl.u32 %v1793, 16
        %v2142 = vrot.slane %v2140, 4
        %v2143 = vor.u32 %v2142, %v2138
        %v2144 = vrot.slane %v2143, 4
        %v2146 = vshll.u32 %v1811, 16
        %v2148 = vrot.slane %v2146, 5
        %v2149 = vsel %vm1202, %v2144, %v2148
        %v2151 = vshrl.u32 %v1794, 16
        %v2153 = vrot.slane %v2151, 4
        %v2154 = vshll.u32 %v1794, 16
        %v2156 = vrot.slane %v2154, 5
        %v2157 = vor.u32 %v2153, %v2156
        %v2158 = vrot.slane %v2157, 4
        %v2160 = vshll.u32 %v1795, 16
        %v2162 = vrot.slane %v2160, 5
        %v2163 = vsel %vm1202, %v2158, %v2162
        %v2164 = vshrl.u32 %v1795, 16
        %v2166 = vrot.slane %v2164, 4
        %v2167 = vor.u32 %v2166, %v2162
        %v2168 = vrot.slane %v2167, 4
        %v2170 = vshll.u32 %v1812, 16
        %v2172 = vrot.slane %v2170, 5
        %v2173 = vsel %vm1202, %v2168, %v2172
        %v2175 = vshrl.u32 %v1796, 16
        %v2177 = vrot.slane %v2175, 4
        %v2178 = vshll.u32 %v1796, 16
        %v2180 = vrot.slane %v2178, 5
        %v2181 = vor.u32 %v2177, %v2180
        %v2182 = vrot.slane %v2181, 4
        %v2184 = vshll.u32 %v1797, 16
        %v2186 = vrot.slane %v2184, 5
        %v2187 = vsel %vm1202, %v2182, %v2186
        %v2188 = vshrl.u32 %v1797, 16
        %v2190 = vrot.slane %v2188, 4
        %v2191 = vor.u32 %v2190, %v2186
        %v2192 = vrot.slane %v2191, 4
        %v2194 = vshll.u32 %v1813, 16
        %v2196 = vrot.slane %v2194, 5
        %v2197 = vsel %vm1202, %v2192, %v2196
        %v2198 = vld [vmem:[%s1034] sm:$0xe]
        %v2199 = vld [vmem:[%s1034 + $0xc] sm:$0xe]
        %v2200 = vld [vmem:[%s1034 + $0x18] sm:$0xe]
        %v2201 = vld [vmem:[%s1034 + $0x24] sm:$0xe]
        %v2202 = vld [vmem:[%s1034 + $0x30] sm:$0xe]
        %v2203 = vld [vmem:[%s1034 + $0x3c] sm:$0xe]
        %v2204 = vld [vmem:[%s1034 + $0x48] sm:$0xe]
        %v2205 = vld [vmem:[%s1034 + $0x54] sm:$0xe]
        %v2206 = vld [vmem:[%s1034 + $0x60] sm:$0xe]
        %v2207 = vld [vmem:[%s1034 + $0x6c] sm:$0xe]
        %v2208 = vld [vmem:[%s1034 + $0x78] sm:$0xe]
        %v2209 = vld [vmem:[%s1034 + $0x84] sm:$0xe]
        %v2210 = vld [vmem:[%s1034 + $0x90] sm:$0xe]
        %v2211 = vld [vmem:[%s1034 + $0x9c] sm:$0xe]
        %v2212 = vld [vmem:[%s1034 + $0xa8] sm:$0xe]
        %v2213 = vld [vmem:[%s1034 + $0xb4] sm:$0xe]
        %v2262 = vrot.slane %v2198, 5
        %v2263 = vrot.slane %v2262, 4
        %v2264 = vrot.slane %v1767, 5
        %v2265 = vsel %vm1653, %v2263, %v2264
        %v2266 = vrot.slane %v2264, 4
        %v2267 = vrot.slane %v1798, 5
        %v2268 = vsel %vm1653, %v2266, %v2267
        %v2269 = vrot.slane %v2199, 5
        %v2270 = vrot.slane %v2269, 4
        %v2271 = vrot.slane %v1769, 5
        %v2272 = vsel %vm1653, %v2270, %v2271
        %v2273 = vrot.slane %v2271, 4
        %v2274 = vrot.slane %v1799, 5
        %v2275 = vsel %vm1653, %v2273, %v2274
        %v2276 = vrot.slane %v2200, 5
        %v2277 = vrot.slane %v2276, 4
        %v2278 = vrot.slane %v1771, 5
        %v2279 = vsel %vm1653, %v2277, %v2278
        %v2280 = vrot.slane %v2278, 4
        %v2281 = vrot.slane %v1800, 5
        %v2282 = vsel %vm1653, %v2280, %v2281
        %v2283 = vrot.slane %v2201, 5
        %v2284 = vrot.slane %v2283, 4
        %v2285 = vrot.slane %v1773, 5
        %v2286 = vsel %vm1653, %v2284, %v2285
        %v2287 = vrot.slane %v2285, 4
        %v2288 = vrot.slane %v1801, 5
        %v2289 = vsel %vm1653, %v2287, %v2288
        %v2290 = vrot.slane %v2202, 5
        %v2291 = vrot.slane %v2290, 4
        %v2292 = vrot.slane %v1775, 5
        %v2293 = vsel %vm1653, %v2291, %v2292
        %v2294 = vrot.slane %v2292, 4
        %v2295 = vrot.slane %v1802, 5
        %v2296 = vsel %vm1653, %v2294, %v2295
        %v2297 = vrot.slane %v2203, 5
        %v2298 = vrot.slane %v2297, 4
        %v2299 = vrot.slane %v1777, 5
        %v2300 = vsel %vm1653, %v2298, %v2299
        %v2301 = vrot.slane %v2299, 4
        %v2302 = vrot.slane %v1803, 5
        %v2303 = vsel %vm1653, %v2301, %v2302
        %v2304 = vrot.slane %v2204, 5
        %v2305 = vrot.slane %v2304, 4
        %v2306 = vrot.slane %v1779, 5
        %v2307 = vsel %vm1653, %v2305, %v2306
        %v2308 = vrot.slane %v2306, 4
        %v2309 = vrot.slane %v1804, 5
        %v2310 = vsel %vm1653, %v2308, %v2309
        %v2311 = vrot.slane %v2205, 5
        %v2312 = vrot.slane %v2311, 4
        %v2313 = vrot.slane %v1781, 5
        %v2314 = vsel %vm1653, %v2312, %v2313
        %v2315 = vrot.slane %v2313, 4
        %v2316 = vrot.slane %v1805, 5
        %v2317 = vsel %vm1653, %v2315, %v2316
        %v2318 = vrot.slane %v2206, 5
        %v2319 = vrot.slane %v2318, 4
        %v2320 = vrot.slane %v1783, 5
        %v2321 = vsel %vm1653, %v2319, %v2320
        %v2322 = vrot.slane %v2320, 4
        %v2323 = vrot.slane %v1806, 5
        %v2324 = vsel %vm1653, %v2322, %v2323
        %v2325 = vrot.slane %v2207, 5
        %v2326 = vrot.slane %v2325, 4
        %v2327 = vrot.slane %v1785, 5
        %v2328 = vsel %vm1653, %v2326, %v2327
        %v2329 = vrot.slane %v2327, 4
        %v2330 = vrot.slane %v1807, 5
        %v2331 = vsel %vm1653, %v2329, %v2330
        %v2332 = vrot.slane %v2208, 5
        %v2333 = vrot.slane %v2332, 4
        %v2334 = vrot.slane %v1787, 5
        %v2335 = vsel %vm1653, %v2333, %v2334
        %v2336 = vrot.slane %v2334, 4
        %v2337 = vrot.slane %v1808, 5
        %v2338 = vsel %vm1653, %v2336, %v2337
        %v2339 = vrot.slane %v2209, 5
        %v2340 = vrot.slane %v2339, 4
        %v2341 = vrot.slane %v1789, 5
        %v2342 = vsel %vm1653, %v2340, %v2341
        %v2343 = vrot.slane %v2341, 4
        %v2344 = vrot.slane %v1809, 5
        %v2345 = vsel %vm1653, %v2343, %v2344
        %v2346 = vrot.slane %v2210, 5
        %v2347 = vrot.slane %v2346, 4
        %v2348 = vrot.slane %v1791, 5
        %v2349 = vsel %vm1653, %v2347, %v2348
        %v2350 = vrot.slane %v2348, 4
        %v2351 = vrot.slane %v1810, 5
        %v2352 = vsel %vm1653, %v2350, %v2351
        %v2353 = vrot.slane %v2211, 5
        %v2354 = vrot.slane %v2353, 4
        %v2355 = vrot.slane %v1793, 5
        %v2356 = vsel %vm1653, %v2354, %v2355
        %v2357 = vrot.slane %v2355, 4
        %v2358 = vrot.slane %v1811, 5
        %v2359 = vsel %vm1653, %v2357, %v2358
        %v2360 = vrot.slane %v2212, 5
        %v2361 = vrot.slane %v2360, 4
        %v2362 = vrot.slane %v1795, 5
        %v2363 = vsel %vm1653, %v2361, %v2362
        %v2364 = vrot.slane %v2362, 4
        %v2365 = vrot.slane %v1812, 5
        %v2366 = vsel %vm1653, %v2364, %v2365
        %v2367 = vrot.slane %v2213, 5
        %v2368 = vrot.slane %v2367, 4
        %v2369 = vrot.slane %v1797, 5
        %v2370 = vsel %vm1653, %v2368, %v2369
        %v2371 = vrot.slane %v2369, 4
        %v2372 = vrot.slane %v1813, 5
        %v2373 = vsel %vm1653, %v2371, %v2372
        %s2374 = scalar_lea.vmem [#allocation2], 24
        %v2375 = vld [vmem:[%s2374] sm:$0xf]
        %v2376 = vld [vmem:[%s2374 + $0x4] sm:$0xf]
        %v2377 = vld [vmem:[%s2374 + $0xc] sm:$0xf]
        %v2378 = vld [vmem:[%s2374 + $0x10] sm:$0xf]
        %v2379 = vld [vmem:[%s2374 + $0x18] sm:$0xf]
        %v2380 = vld [vmem:[%s2374 + $0x1c] sm:$0xf]
        %v2381 = vld [vmem:[%s2374 + $0x24] sm:$0xf]
        %v2382 = vld [vmem:[%s2374 + $0x28] sm:$0xf]
        %v2383 = vld [vmem:[%s2374 + $0x30] sm:$0xf]
        %v2384 = vld [vmem:[%s2374 + $0x34] sm:$0xf]
        %v2385 = vld [vmem:[%s2374 + $0x3c] sm:$0xf]
        %v2386 = vld [vmem:[%s2374 + $0x40] sm:$0xf]
        %v2387 = vld [vmem:[%s2374 + $0x48] sm:$0xf]
        %v2388 = vld [vmem:[%s2374 + $0x4c] sm:$0xf]
        %v2389 = vld [vmem:[%s2374 + $0x54] sm:$0xf]
        %v2390 = vld [vmem:[%s2374 + $0x58] sm:$0xf]
        %v2391 = vld [vmem:[%s2374 + $0x60] sm:$0xf]
        %v2392 = vld [vmem:[%s2374 + $0x64] sm:$0xf]
        %v2393 = vld [vmem:[%s2374 + $0x6c] sm:$0xf]
        %v2394 = vld [vmem:[%s2374 + $0x70] sm:$0xf]
        %v2395 = vld [vmem:[%s2374 + $0x78] sm:$0xf]
        %v2396 = vld [vmem:[%s2374 + $0x7c] sm:$0xf]
        %v2397 = vld [vmem:[%s2374 + $0x84] sm:$0xf]
        %v2398 = vld [vmem:[%s2374 + $0x88] sm:$0xf]
        %v2399 = vld [vmem:[%s2374 + $0x90] sm:$0xf]
        %v2400 = vld [vmem:[%s2374 + $0x94] sm:$0xf]
        %v2401 = vld [vmem:[%s2374 + $0x9c] sm:$0xf]
        %v2402 = vld [vmem:[%s2374 + $0xa0] sm:$0xf]
        %v2403 = vld [vmem:[%s2374 + $0xa8] sm:$0xf]
        %v2404 = vld [vmem:[%s2374 + $0xac] sm:$0xf]
        %v2405 = vld [vmem:[%s2374 + $0xb4] sm:$0xf]
        %v2406 = vld [vmem:[%s2374 + $0xb8] sm:$0xf]
        %v2407 = vld [vmem:[%s2374 + $0x8] sm:$0x1]
        %v2408 = vld [vmem:[%s2374 + $0x14] sm:$0x1]
        %v2409 = vld [vmem:[%s2374 + $0x20] sm:$0x1]
        %v2410 = vld [vmem:[%s2374 + $0x2c] sm:$0x1]
        %v2411 = vld [vmem:[%s2374 + $0x38] sm:$0x1]
        %v2412 = vld [vmem:[%s2374 + $0x44] sm:$0x1]
        %v2413 = vld [vmem:[%s2374 + $0x50] sm:$0x1]
        %v2414 = vld [vmem:[%s2374 + $0x5c] sm:$0x1]
        %v2415 = vld [vmem:[%s2374 + $0x68] sm:$0x1]
        %v2416 = vld [vmem:[%s2374 + $0x74] sm:$0x1]
        %v2417 = vld [vmem:[%s2374 + $0x80] sm:$0x1]
        %v2418 = vld [vmem:[%s2374 + $0x8c] sm:$0x1]
        %v2419 = vld [vmem:[%s2374 + $0x98] sm:$0x1]
        %v2420 = vld [vmem:[%s2374 + $0xa4] sm:$0x1]
        %v2421 = vld [vmem:[%s2374 + $0xb0] sm:$0x1]
        %v2422 = vld [vmem:[%s2374 + $0xbc] sm:$0x1]
        %v2424 = vshrl.u32 %v2375, 16
        %v2426 = vrot.slane %v2424, 4
        %v2427 = vshll.u32 %v2375, 16
        %v2429 = vrot.slane %v2427, 5
        %v2430 = vor.u32 %v2426, %v2429
        %v2431 = vrot.slane %v2430, 4
        %v2433 = vshll.u32 %v2376, 16
        %v2435 = vrot.slane %v2433, 5
        %v2436 = vsel %vm1202, %v2431, %v2435
        %v2437 = vshrl.u32 %v2376, 16
        %v2439 = vrot.slane %v2437, 4
        %v2440 = vor.u32 %v2439, %v2435
        %v2441 = vrot.slane %v2440, 4
        %v2443 = vshll.u32 %v2407, 16
        %v2445 = vrot.slane %v2443, 5
        %v2446 = vsel %vm1202, %v2441, %v2445
        %v2448 = vshrl.u32 %v2377, 16
        %v2450 = vrot.slane %v2448, 4
        %v2451 = vshll.u32 %v2377, 16
        %v2453 = vrot.slane %v2451, 5
        %v2454 = vor.u32 %v2450, %v2453
        %v2455 = vrot.slane %v2454, 4
        %v2457 = vshll.u32 %v2378, 16
        %v2459 = vrot.slane %v2457, 5
        %v2460 = vsel %vm1202, %v2455, %v2459
        %v2461 = vshrl.u32 %v2378, 16
        %v2463 = vrot.slane %v2461, 4
        %v2464 = vor.u32 %v2463, %v2459
        %v2465 = vrot.slane %v2464, 4
        %v2467 = vshll.u32 %v2408, 16
        %v2469 = vrot.slane %v2467, 5
        %v2470 = vsel %vm1202, %v2465, %v2469
        %v2472 = vshrl.u32 %v2379, 16
        %v2474 = vrot.slane %v2472, 4
        %v2475 = vshll.u32 %v2379, 16
        %v2477 = vrot.slane %v2475, 5
        %v2478 = vor.u32 %v2474, %v2477
        %v2479 = vrot.slane %v2478, 4
        %v2481 = vshll.u32 %v2380, 16
        %v2483 = vrot.slane %v2481, 5
        %v2484 = vsel %vm1202, %v2479, %v2483
        %v2485 = vshrl.u32 %v2380, 16
        %v2487 = vrot.slane %v2485, 4
        %v2488 = vor.u32 %v2487, %v2483
        %v2489 = vrot.slane %v2488, 4
        %v2491 = vshll.u32 %v2409, 16
        %v2493 = vrot.slane %v2491, 5
        %v2494 = vsel %vm1202, %v2489, %v2493
        %v2496 = vshrl.u32 %v2381, 16
        %v2498 = vrot.slane %v2496, 4
        %v2499 = vshll.u32 %v2381, 16
        %v2501 = vrot.slane %v2499, 5
        %v2502 = vor.u32 %v2498, %v2501
        %v2503 = vrot.slane %v2502, 4
        %v2505 = vshll.u32 %v2382, 16
        %v2507 = vrot.slane %v2505, 5
        %v2508 = vsel %vm1202, %v2503, %v2507
        %v2509 = vshrl.u32 %v2382, 16
        %v2511 = vrot.slane %v2509, 4
        %v2512 = vor.u32 %v2511, %v2507
        %v2513 = vrot.slane %v2512, 4
        %v2515 = vshll.u32 %v2410, 16
        %v2517 = vrot.slane %v2515, 5
        %v2518 = vsel %vm1202, %v2513, %v2517
        %v2520 = vshrl.u32 %v2383, 16
        %v2522 = vrot.slane %v2520, 4
        %v2523 = vshll.u32 %v2383, 16
        %v2525 = vrot.slane %v2523, 5
        %v2526 = vor.u32 %v2522, %v2525
        %v2527 = vrot.slane %v2526, 4
        %v2529 = vshll.u32 %v2384, 16
        %v2531 = vrot.slane %v2529, 5
        %v2532 = vsel %vm1202, %v2527, %v2531
        %v2533 = vshrl.u32 %v2384, 16
        %v2535 = vrot.slane %v2533, 4
        %v2536 = vor.u32 %v2535, %v2531
        %v2537 = vrot.slane %v2536, 4
        %v2539 = vshll.u32 %v2411, 16
        %v2541 = vrot.slane %v2539, 5
        %v2542 = vsel %vm1202, %v2537, %v2541
        %v2544 = vshrl.u32 %v2385, 16
        %v2546 = vrot.slane %v2544, 4
        %v2547 = vshll.u32 %v2385, 16
        %v2549 = vrot.slane %v2547, 5
        %v2550 = vor.u32 %v2546, %v2549
        %v2551 = vrot.slane %v2550, 4
        %v2553 = vshll.u32 %v2386, 16
        %v2555 = vrot.slane %v2553, 5
        %v2556 = vsel %vm1202, %v2551, %v2555
        %v2557 = vshrl.u32 %v2386, 16
        %v2559 = vrot.slane %v2557, 4
        %v2560 = vor.u32 %v2559, %v2555
        %v2561 = vrot.slane %v2560, 4
        %v2563 = vshll.u32 %v2412, 16
        %v2565 = vrot.slane %v2563, 5
        %v2566 = vsel %vm1202, %v2561, %v2565
        %v2568 = vshrl.u32 %v2387, 16
        %v2570 = vrot.slane %v2568, 4
        %v2571 = vshll.u32 %v2387, 16
        %v2573 = vrot.slane %v2571, 5
        %v2574 = vor.u32 %v2570, %v2573
        %v2575 = vrot.slane %v2574, 4
        %v2577 = vshll.u32 %v2388, 16
        %v2579 = vrot.slane %v2577, 5
        %v2580 = vsel %vm1202, %v2575, %v2579
        %v2581 = vshrl.u32 %v2388, 16
        %v2583 = vrot.slane %v2581, 4
        %v2584 = vor.u32 %v2583, %v2579
        %v2585 = vrot.slane %v2584, 4
        %v2587 = vshll.u32 %v2413, 16
        %v2589 = vrot.slane %v2587, 5
        %v2590 = vsel %vm1202, %v2585, %v2589
        %v2592 = vshrl.u32 %v2389, 16
        %v2594 = vrot.slane %v2592, 4
        %v2595 = vshll.u32 %v2389, 16
        %v2597 = vrot.slane %v2595, 5
        %v2598 = vor.u32 %v2594, %v2597
        %v2599 = vrot.slane %v2598, 4
        %v2601 = vshll.u32 %v2390, 16
        %v2603 = vrot.slane %v2601, 5
        %v2604 = vsel %vm1202, %v2599, %v2603
        %v2605 = vshrl.u32 %v2390, 16
        %v2607 = vrot.slane %v2605, 4
        %v2608 = vor.u32 %v2607, %v2603
        %v2609 = vrot.slane %v2608, 4
        %v2611 = vshll.u32 %v2414, 16
        %v2613 = vrot.slane %v2611, 5
        %v2614 = vsel %vm1202, %v2609, %v2613
        %v2616 = vshrl.u32 %v2391, 16
        %v2618 = vrot.slane %v2616, 4
        %v2619 = vshll.u32 %v2391, 16
        %v2621 = vrot.slane %v2619, 5
        %v2622 = vor.u32 %v2618, %v2621
        %v2623 = vrot.slane %v2622, 4
        %v2625 = vshll.u32 %v2392, 16
        %v2627 = vrot.slane %v2625, 5
        %v2628 = vsel %vm1202, %v2623, %v2627
        %v2629 = vshrl.u32 %v2392, 16
        %v2631 = vrot.slane %v2629, 4
        %v2632 = vor.u32 %v2631, %v2627
        %v2633 = vrot.slane %v2632, 4
        %v2635 = vshll.u32 %v2415, 16
        %v2637 = vrot.slane %v2635, 5
        %v2638 = vsel %vm1202, %v2633, %v2637
        %v2640 = vshrl.u32 %v2393, 16
        %v2642 = vrot.slane %v2640, 4
        %v2643 = vshll.u32 %v2393, 16
        %v2645 = vrot.slane %v2643, 5
        %v2646 = vor.u32 %v2642, %v2645
        %v2647 = vrot.slane %v2646, 4
        %v2649 = vshll.u32 %v2394, 16
        %v2651 = vrot.slane %v2649, 5
        %v2652 = vsel %vm1202, %v2647, %v2651
        %v2653 = vshrl.u32 %v2394, 16
        %v2655 = vrot.slane %v2653, 4
        %v2656 = vor.u32 %v2655, %v2651
        %v2657 = vrot.slane %v2656, 4
        %v2659 = vshll.u32 %v2416, 16
        %v2661 = vrot.slane %v2659, 5
        %v2662 = vsel %vm1202, %v2657, %v2661
        %v2664 = vshrl.u32 %v2395, 16
        %v2666 = vrot.slane %v2664, 4
        %v2667 = vshll.u32 %v2395, 16
        %v2669 = vrot.slane %v2667, 5
        %v2670 = vor.u32 %v2666, %v2669
        %v2671 = vrot.slane %v2670, 4
        %v2673 = vshll.u32 %v2396, 16
        %v2675 = vrot.slane %v2673, 5
        %v2676 = vsel %vm1202, %v2671, %v2675
        %v2677 = vshrl.u32 %v2396, 16
        %v2679 = vrot.slane %v2677, 4
        %v2680 = vor.u32 %v2679, %v2675
        %v2681 = vrot.slane %v2680, 4
        %v2683 = vshll.u32 %v2417, 16
        %v2685 = vrot.slane %v2683, 5
        %v2686 = vsel %vm1202, %v2681, %v2685
        %v2688 = vshrl.u32 %v2397, 16
        %v2690 = vrot.slane %v2688, 4
        %v2691 = vshll.u32 %v2397, 16
        %v2693 = vrot.slane %v2691, 5
        %v2694 = vor.u32 %v2690, %v2693
        %v2695 = vrot.slane %v2694, 4
        %v2697 = vshll.u32 %v2398, 16
        %v2699 = vrot.slane %v2697, 5
        %v2700 = vsel %vm1202, %v2695, %v2699
        %v2701 = vshrl.u32 %v2398, 16
        %v2703 = vrot.slane %v2701, 4
        %v2704 = vor.u32 %v2703, %v2699
        %v2705 = vrot.slane %v2704, 4
        %v2707 = vshll.u32 %v2418, 16
        %v2709 = vrot.slane %v2707, 5
        %v2710 = vsel %vm1202, %v2705, %v2709
        %v2712 = vshrl.u32 %v2399, 16
        %v2714 = vrot.slane %v2712, 4
        %v2715 = vshll.u32 %v2399, 16
        %v2717 = vrot.slane %v2715, 5
        %v2718 = vor.u32 %v2714, %v2717
        %v2719 = vrot.slane %v2718, 4
        %v2721 = vshll.u32 %v2400, 16
        %v2723 = vrot.slane %v2721, 5
        %v2724 = vsel %vm1202, %v2719, %v2723
        %v2725 = vshrl.u32 %v2400, 16
        %v2727 = vrot.slane %v2725, 4
        %v2728 = vor.u32 %v2727, %v2723
        %v2729 = vrot.slane %v2728, 4
        %v2731 = vshll.u32 %v2419, 16
        %v2733 = vrot.slane %v2731, 5
        %v2734 = vsel %vm1202, %v2729, %v2733
        %v2736 = vshrl.u32 %v2401, 16
        %v2738 = vrot.slane %v2736, 4
        %v2739 = vshll.u32 %v2401, 16
        %v2741 = vrot.slane %v2739, 5
        %v2742 = vor.u32 %v2738, %v2741
        %v2743 = vrot.slane %v2742, 4
        %v2745 = vshll.u32 %v2402, 16
        %v2747 = vrot.slane %v2745, 5
        %v2748 = vsel %vm1202, %v2743, %v2747
        %v2749 = vshrl.u32 %v2402, 16
        %v2751 = vrot.slane %v2749, 4
        %v2752 = vor.u32 %v2751, %v2747
        %v2753 = vrot.slane %v2752, 4
        %v2755 = vshll.u32 %v2420, 16
        %v2757 = vrot.slane %v2755, 5
        %v2758 = vsel %vm1202, %v2753, %v2757
        %v2760 = vshrl.u32 %v2403, 16
        %v2762 = vrot.slane %v2760, 4
        %v2763 = vshll.u32 %v2403, 16
        %v2765 = vrot.slane %v2763, 5
        %v2766 = vor.u32 %v2762, %v2765
        %v2767 = vrot.slane %v2766, 4
        %v2769 = vshll.u32 %v2404, 16
        %v2771 = vrot.slane %v2769, 5
        %v2772 = vsel %vm1202, %v2767, %v2771
        %v2773 = vshrl.u32 %v2404, 16
        %v2775 = vrot.slane %v2773, 4
        %v2776 = vor.u32 %v2775, %v2771
        %v2777 = vrot.slane %v2776, 4
        %v2779 = vshll.u32 %v2421, 16
        %v2781 = vrot.slane %v2779, 5
        %v2782 = vsel %vm1202, %v2777, %v2781
        %v2784 = vshrl.u32 %v2405, 16
        %v2786 = vrot.slane %v2784, 4
        %v2787 = vshll.u32 %v2405, 16
        %v2789 = vrot.slane %v2787, 5
        %v2790 = vor.u32 %v2786, %v2789
        %v2791 = vrot.slane %v2790, 4
        %v2793 = vshll.u32 %v2406, 16
        %v2795 = vrot.slane %v2793, 5
        %v2796 = vsel %vm1202, %v2791, %v2795
        %v2797 = vshrl.u32 %v2406, 16
        %v2799 = vrot.slane %v2797, 4
        %v2800 = vor.u32 %v2799, %v2795
        %v2801 = vrot.slane %v2800, 4
        %v2803 = vshll.u32 %v2422, 16
        %v2805 = vrot.slane %v2803, 5
        %v2806 = vsel %vm1202, %v2801, %v2805
        %v2807 = vld [vmem:[%s2374] sm:$0xe]
        %v2808 = vld [vmem:[%s2374 + $0xc] sm:$0xe]
        %v2809 = vld [vmem:[%s2374 + $0x18] sm:$0xe]
        %v2810 = vld [vmem:[%s2374 + $0x24] sm:$0xe]
        %v2811 = vld [vmem:[%s2374 + $0x30] sm:$0xe]
        %v2812 = vld [vmem:[%s2374 + $0x3c] sm:$0xe]
        %v2813 = vld [vmem:[%s2374 + $0x48] sm:$0xe]
        %v2814 = vld [vmem:[%s2374 + $0x54] sm:$0xe]
        %v2815 = vld [vmem:[%s2374 + $0x60] sm:$0xe]
        %v2816 = vld [vmem:[%s2374 + $0x6c] sm:$0xe]
        %v2817 = vld [vmem:[%s2374 + $0x78] sm:$0xe]
        %v2818 = vld [vmem:[%s2374 + $0x84] sm:$0xe]
        %v2819 = vld [vmem:[%s2374 + $0x90] sm:$0xe]
        %v2820 = vld [vmem:[%s2374 + $0x9c] sm:$0xe]
        %v2821 = vld [vmem:[%s2374 + $0xa8] sm:$0xe]
        %v2822 = vld [vmem:[%s2374 + $0xb4] sm:$0xe]
        %v2871 = vrot.slane %v2807, 5
        %v2872 = vrot.slane %v2871, 4
        %v2873 = vrot.slane %v2376, 5
        %v2874 = vsel %vm1653, %v2872, %v2873
        %v2875 = vrot.slane %v2873, 4
        %v2876 = vrot.slane %v2407, 5
        %v2877 = vsel %vm1653, %v2875, %v2876
        %v2878 = vrot.slane %v2808, 5
        %v2879 = vrot.slane %v2878, 4
        %v2880 = vrot.slane %v2378, 5
        %v2881 = vsel %vm1653, %v2879, %v2880
        %v2882 = vrot.slane %v2880, 4
        %v2883 = vrot.slane %v2408, 5
        %v2884 = vsel %vm1653, %v2882, %v2883
        %v2885 = vrot.slane %v2809, 5
        %v2886 = vrot.slane %v2885, 4
        %v2887 = vrot.slane %v2380, 5
        %v2888 = vsel %vm1653, %v2886, %v2887
        %v2889 = vrot.slane %v2887, 4
        %v2890 = vrot.slane %v2409, 5
        %v2891 = vsel %vm1653, %v2889, %v2890
        %v2892 = vrot.slane %v2810, 5
        %v2893 = vrot.slane %v2892, 4
        %v2894 = vrot.slane %v2382, 5
        %v2895 = vsel %vm1653, %v2893, %v2894
        %v2896 = vrot.slane %v2894, 4
        %v2897 = vrot.slane %v2410, 5
        %v2898 = vsel %vm1653, %v2896, %v2897
        %v2899 = vrot.slane %v2811, 5
        %v2900 = vrot.slane %v2899, 4
        %v2901 = vrot.slane %v2384, 5
        %v2902 = vsel %vm1653, %v2900, %v2901
        %v2903 = vrot.slane %v2901, 4
        %v2904 = vrot.slane %v2411, 5
        %v2905 = vsel %vm1653, %v2903, %v2904
        %v2906 = vrot.slane %v2812, 5
        %v2907 = vrot.slane %v2906, 4
        %v2908 = vrot.slane %v2386, 5
        %v2909 = vsel %vm1653, %v2907, %v2908
        %v2910 = vrot.slane %v2908, 4
        %v2911 = vrot.slane %v2412, 5
        %v2912 = vsel %vm1653, %v2910, %v2911
        %v2913 = vrot.slane %v2813, 5
        %v2914 = vrot.slane %v2913, 4
        %v2915 = vrot.slane %v2388, 5
        %v2916 = vsel %vm1653, %v2914, %v2915
        %v2917 = vrot.slane %v2915, 4
        %v2918 = vrot.slane %v2413, 5
        %v2919 = vsel %vm1653, %v2917, %v2918
        %v2920 = vrot.slane %v2814, 5
        %v2921 = vrot.slane %v2920, 4
        %v2922 = vrot.slane %v2390, 5
        %v2923 = vsel %vm1653, %v2921, %v2922
        %v2924 = vrot.slane %v2922, 4
        %v2925 = vrot.slane %v2414, 5
        %v2926 = vsel %vm1653, %v2924, %v2925
        %v2927 = vrot.slane %v2815, 5
        %v2928 = vrot.slane %v2927, 4
        %v2929 = vrot.slane %v2392, 5
        %v2930 = vsel %vm1653, %v2928, %v2929
        %v2931 = vrot.slane %v2929, 4
        %v2932 = vrot.slane %v2415, 5
        %v2933 = vsel %vm1653, %v2931, %v2932
        %v2934 = vrot.slane %v2816, 5
        %v2935 = vrot.slane %v2934, 4
        %v2936 = vrot.slane %v2394, 5
        %v2937 = vsel %vm1653, %v2935, %v2936
        %v2938 = vrot.slane %v2936, 4
        %v2939 = vrot.slane %v2416, 5
        %v2940 = vsel %vm1653, %v2938, %v2939
        %v2941 = vrot.slane %v2817, 5
        %v2942 = vrot.slane %v2941, 4
        %v2943 = vrot.slane %v2396, 5
        %v2944 = vsel %vm1653, %v2942, %v2943
        %v2945 = vrot.slane %v2943, 4
        %v2946 = vrot.slane %v2417, 5
        %v2947 = vsel %vm1653, %v2945, %v2946
        %v2948 = vrot.slane %v2818, 5
        %v2949 = vrot.slane %v2948, 4
        %v2950 = vrot.slane %v2398, 5
        %v2951 = vsel %vm1653, %v2949, %v2950
        %v2952 = vrot.slane %v2950, 4
        %v2953 = vrot.slane %v2418, 5
        %v2954 = vsel %vm1653, %v2952, %v2953
        %v2955 = vrot.slane %v2819, 5
        %v2956 = vrot.slane %v2955, 4
        %v2957 = vrot.slane %v2400, 5
        %v2958 = vsel %vm1653, %v2956, %v2957
        %v2959 = vrot.slane %v2957, 4
        %v2960 = vrot.slane %v2419, 5
        %v2961 = vsel %vm1653, %v2959, %v2960
        %v2962 = vrot.slane %v2820, 5
        %v2963 = vrot.slane %v2962, 4
        %v2964 = vrot.slane %v2402, 5
        %v2965 = vsel %vm1653, %v2963, %v2964
        %v2966 = vrot.slane %v2964, 4
        %v2967 = vrot.slane %v2420, 5
        %v2968 = vsel %vm1653, %v2966, %v2967
        %v2969 = vrot.slane %v2821, 5
        %v2970 = vrot.slane %v2969, 4
        %v2971 = vrot.slane %v2404, 5
        %v2972 = vsel %vm1653, %v2970, %v2971
        %v2973 = vrot.slane %v2971, 4
        %v2974 = vrot.slane %v2421, 5
        %v2975 = vsel %vm1653, %v2973, %v2974
        %v2976 = vrot.slane %v2822, 5
        %v2977 = vrot.slane %v2976, 4
        %v2978 = vrot.slane %v2406, 5
        %v2979 = vsel %vm1653, %v2977, %v2978
        %v2980 = vrot.slane %v2978, 4
        %v2981 = vrot.slane %v2422, 5
        %v2982 = vsel %vm1653, %v2980, %v2981
        %v2999 = vunpack.c.l.b16 %v1152
        %v3000 = vunpack.c.l.b16 %v1153
        %v3001 = vunpack.c.l.b16 %v1154
        %v3002 = vunpack.c.l.b16 %v1155
        %v3003 = vunpack.c.l.b16 %v1156
        %v3004 = vunpack.c.l.b16 %v1157
        %v3005 = vunpack.c.l.b16 %v1158
        %v3006 = vunpack.c.l.b16 %v1159
        %v3007 = vunpack.c.l.b16 %v1160
        %v3008 = vunpack.c.l.b16 %v1161
        %v3009 = vunpack.c.l.b16 %v1162
        %v3010 = vunpack.c.l.b16 %v1163
        %v3011 = vunpack.c.l.b16 %v1164
        %v3012 = vunpack.c.l.b16 %v1165
        %v3013 = vunpack.c.l.b16 %v1166
        %v3014 = vunpack.c.l.b16 %v1167
        %v3015 = vunpack.c.l.b16 %v1168
        %v3016 = vunpack.c.l.b16 %v1169
        %v3017 = vunpack.c.l.b16 %v1170
        %v3018 = vunpack.c.l.b16 %v1171
        %v3019 = vunpack.c.l.b16 %v1172
        %v3020 = vunpack.c.l.b16 %v1173
        %v3021 = vunpack.c.l.b16 %v1174
        %v3022 = vunpack.c.l.b16 %v1175
        %v3023 = vunpack.c.l.b16 %v1176
        %v3024 = vunpack.c.l.b16 %v1177
        %v3025 = vunpack.c.l.b16 %v1178
        %v3026 = vunpack.c.l.b16 %v1179
        %v3027 = vunpack.c.l.b16 %v1180
        %v3028 = vunpack.c.l.b16 %v1181
        %v3029 = vunpack.c.l.b16 %v1182
        %v3030 = vunpack.c.l.b16 %v1183
        %v3031 = vpack.c.b16 %v3000, %v2999
        %v3032 = vpack.c.b16 %v3002, %v3001
        %v3033 = vpack.c.b16 %v3004, %v3003
        %v3034 = vpack.c.b16 %v3006, %v3005
        %v3035 = vpack.c.b16 %v3008, %v3007
        %v3036 = vpack.c.b16 %v3010, %v3009
        %v3037 = vpack.c.b16 %v3012, %v3011
        %v3038 = vpack.c.b16 %v3014, %v3013
        %v3039 = vpack.c.b16 %v3016, %v3015
        %v3040 = vpack.c.b16 %v3018, %v3017
        %v3041 = vpack.c.b16 %v3020, %v3019
        %v3042 = vpack.c.b16 %v3022, %v3021
        %v3043 = vpack.c.b16 %v3024, %v3023
        %v3044 = vpack.c.b16 %v3026, %v3025
        %v3045 = vpack.c.b16 %v3028, %v3027
        %v3046 = vpack.c.b16 %v3030, %v3029
        %v3047 = vunpack.c.l.b16 %v1216
        %v3048 = vunpack.c.l.b16 %v1226
        %v3049 = vunpack.c.l.b16 %v1240
        %v3050 = vunpack.c.l.b16 %v1250
        %v3051 = vunpack.c.l.b16 %v1264
        %v3052 = vunpack.c.l.b16 %v1274
        %v3053 = vunpack.c.l.b16 %v1288
        %v3054 = vunpack.c.l.b16 %v1298
        %v3055 = vunpack.c.l.b16 %v1312
        %v3056 = vunpack.c.l.b16 %v1322
        %v3057 = vunpack.c.l.b16 %v1336
        %v3058 = vunpack.c.l.b16 %v1346
        %v3059 = vunpack.c.l.b16 %v1360
        %v3060 = vunpack.c.l.b16 %v1370
        %v3061 = vunpack.c.l.b16 %v1384
        %v3062 = vunpack.c.l.b16 %v1394
        %v3063 = vunpack.c.l.b16 %v1408
        %v3064 = vunpack.c.l.b16 %v1418
        %v3065 = vunpack.c.l.b16 %v1432
        %v3066 = vunpack.c.l.b16 %v1442
        %v3067 = vunpack.c.l.b16 %v1456
        %v3068 = vunpack.c.l.b16 %v1466
        %v3069 = vunpack.c.l.b16 %v1480
        %v3070 = vunpack.c.l.b16 %v1490
        %v3071 = vunpack.c.l.b16 %v1504
        %v3072 = vunpack.c.l.b16 %v1514
        %v3073 = vunpack.c.l.b16 %v1528
        %v3074 = vunpack.c.l.b16 %v1538
        %v3075 = vunpack.c.l.b16 %v1552
        %v3076 = vunpack.c.l.b16 %v1562
        %v3077 = vunpack.c.l.b16 %v1576
        %v3078 = vunpack.c.l.b16 %v1586
        %v3079 = vpack.c.b16 %v3048, %v3047
        %v3080 = vpack.c.b16 %v3050, %v3049
        %v3081 = vpack.c.b16 %v3052, %v3051
        %v3082 = vpack.c.b16 %v3054, %v3053
        %v3083 = vpack.c.b16 %v3056, %v3055
        %v3084 = vpack.c.b16 %v3058, %v3057
        %v3085 = vpack.c.b16 %v3060, %v3059
        %v3086 = vpack.c.b16 %v3062, %v3061
        %v3087 = vpack.c.b16 %v3064, %v3063
        %v3088 = vpack.c.b16 %v3066, %v3065
        %v3089 = vpack.c.b16 %v3068, %v3067
        %v3090 = vpack.c.b16 %v3070, %v3069
        %v3091 = vpack.c.b16 %v3072, %v3071
        %v3092 = vpack.c.b16 %v3074, %v3073
        %v3093 = vpack.c.b16 %v3076, %v3075
        %v3094 = vpack.c.b16 %v3078, %v3077
        %3095 = vrot.lane.b32.xlu0 %v3079, 4
        %v3096 = vpop.permute.xlu0 %3095
        %3097 = vrot.lane.b32.xlu0 %v3080, 4
        %v3098 = vpop.permute.xlu0 %3097
        %3099 = vrot.lane.b32.xlu0 %v3081, 4
        %v3100 = vpop.permute.xlu0 %3099
        %3101 = vrot.lane.b32.xlu0 %v3082, 4
        %v3102 = vpop.permute.xlu0 %3101
        %3103 = vrot.lane.b32.xlu0 %v3083, 4
        %v3104 = vpop.permute.xlu0 %3103
        %3105 = vrot.lane.b32.xlu0 %v3084, 4
        %v3106 = vpop.permute.xlu0 %3105
        %3107 = vrot.lane.b32.xlu0 %v3085, 4
        %v3108 = vpop.permute.xlu0 %3107
        %3109 = vrot.lane.b32.xlu0 %v3086, 4
        %v3110 = vpop.permute.xlu0 %3109
        %3111 = vrot.lane.b32.xlu0 %v3087, 4
        %v3112 = vpop.permute.xlu0 %3111
        %3113 = vrot.lane.b32.xlu0 %v3088, 4
        %v3114 = vpop.permute.xlu0 %3113
        %3115 = vrot.lane.b32.xlu0 %v3089, 4
        %v3116 = vpop.permute.xlu0 %3115
        %3117 = vrot.lane.b32.xlu0 %v3090, 4
        %v3118 = vpop.permute.xlu0 %3117
        %3119 = vrot.lane.b32.xlu0 %v3091, 4
        %v3120 = vpop.permute.xlu0 %3119
        %3121 = vrot.lane.b32.xlu0 %v3092, 4
        %v3122 = vpop.permute.xlu0 %3121
        %3123 = vrot.lane.b32.xlu0 %v3093, 4
        %v3124 = vpop.permute.xlu0 %3123
        %3125 = vrot.lane.b32.xlu0 %v3094, 4
        %v3126 = vpop.permute.xlu0 %3125
        %v3127 = vunpack.c.l.b16 %v1657
        %v3128 = vunpack.c.l.b16 %v1660
        %v3129 = vunpack.c.l.b16 %v1664
        %v3130 = vunpack.c.l.b16 %v1667
        %v3131 = vunpack.c.l.b16 %v1671
        %v3132 = vunpack.c.l.b16 %v1674
        %v3133 = vunpack.c.l.b16 %v1678
        %v3134 = vunpack.c.l.b16 %v1681
        %v3135 = vunpack.c.l.b16 %v1685
        %v3136 = vunpack.c.l.b16 %v1688
        %v3137 = vunpack.c.l.b16 %v1692
        %v3138 = vunpack.c.l.b16 %v1695
        %v3139 = vunpack.c.l.b16 %v1699
        %v3140 = vunpack.c.l.b16 %v1702
        %v3141 = vunpack.c.l.b16 %v1706
        %v3142 = vunpack.c.l.b16 %v1709
        %v3143 = vunpack.c.l.b16 %v1713
        %v3144 = vunpack.c.l.b16 %v1716
        %v3145 = vunpack.c.l.b16 %v1720
        %v3146 = vunpack.c.l.b16 %v1723
        %v3147 = vunpack.c.l.b16 %v1727
        %v3148 = vunpack.c.l.b16 %v1730
        %v3149 = vunpack.c.l.b16 %v1734
        %v3150 = vunpack.c.l.b16 %v1737
        %v3151 = vunpack.c.l.b16 %v1741
        %v3152 = vunpack.c.l.b16 %v1744
        %v3153 = vunpack.c.l.b16 %v1748
        %v3154 = vunpack.c.l.b16 %v1751
        %v3155 = vunpack.c.l.b16 %v1755
        %v3156 = vunpack.c.l.b16 %v1758
        %v3157 = vunpack.c.l.b16 %v1762
        %v3158 = vunpack.c.l.b16 %v1765
        %v3159 = vpack.c.b16 %v3128, %v3127
        %v3160 = vpack.c.b16 %v3130, %v3129
        %v3161 = vpack.c.b16 %v3132, %v3131
        %v3162 = vpack.c.b16 %v3134, %v3133
        %v3163 = vpack.c.b16 %v3136, %v3135
        %v3164 = vpack.c.b16 %v3138, %v3137
        %v3165 = vpack.c.b16 %v3140, %v3139
        %v3166 = vpack.c.b16 %v3142, %v3141
        %v3167 = vpack.c.b16 %v3144, %v3143
        %v3168 = vpack.c.b16 %v3146, %v3145
        %v3169 = vpack.c.b16 %v3148, %v3147
        %v3170 = vpack.c.b16 %v3150, %v3149
        %v3171 = vpack.c.b16 %v3152, %v3151
        %v3172 = vpack.c.b16 %v3154, %v3153
        %v3173 = vpack.c.b16 %v3156, %v3155
        %v3174 = vpack.c.b16 %v3158, %v3157
        %3175 = vrot.lane.b32.xlu0 %v3159, 8
        %v3176 = vpop.permute.xlu0 %3175
        %3177 = vrot.lane.b32.xlu0 %v3160, 8
        %v3178 = vpop.permute.xlu0 %3177
        %3179 = vrot.lane.b32.xlu0 %v3161, 8
        %v3180 = vpop.permute.xlu0 %3179
        %3181 = vrot.lane.b32.xlu0 %v3162, 8
        %v3182 = vpop.permute.xlu0 %3181
        %3183 = vrot.lane.b32.xlu0 %v3163, 8
        %v3184 = vpop.permute.xlu0 %3183
        %3185 = vrot.lane.b32.xlu0 %v3164, 8
        %v3186 = vpop.permute.xlu0 %3185
        %3187 = vrot.lane.b32.xlu0 %v3165, 8
        %v3188 = vpop.permute.xlu0 %3187
        %3189 = vrot.lane.b32.xlu0 %v3166, 8
        %v3190 = vpop.permute.xlu0 %3189
        %3191 = vrot.lane.b32.xlu0 %v3167, 8
        %v3192 = vpop.permute.xlu0 %3191
        %3193 = vrot.lane.b32.xlu0 %v3168, 8
        %v3194 = vpop.permute.xlu0 %3193
        %3195 = vrot.lane.b32.xlu0 %v3169, 8
        %v3196 = vpop.permute.xlu0 %3195
        %3197 = vrot.lane.b32.xlu0 %v3170, 8
        %v3198 = vpop.permute.xlu0 %3197
        %3199 = vrot.lane.b32.xlu0 %v3171, 8
        %v3200 = vpop.permute.xlu0 %3199
        %3201 = vrot.lane.b32.xlu0 %v3172, 8
        %v3202 = vpop.permute.xlu0 %3201
        %3203 = vrot.lane.b32.xlu0 %v3173, 8
        %v3204 = vpop.permute.xlu0 %3203
        %3205 = vrot.lane.b32.xlu0 %v3174, 8
        %v3206 = vpop.permute.xlu0 %3205
        %v3223 = vunpack.c.l.b16 %v1766
        %v3224 = vunpack.c.l.b16 %v1767
        %v3225 = vunpack.c.l.b16 %v1768
        %v3226 = vunpack.c.l.b16 %v1769
        %v3227 = vunpack.c.l.b16 %v1770
        %v3228 = vunpack.c.l.b16 %v1771
        %v3229 = vunpack.c.l.b16 %v1772
        %v3230 = vunpack.c.l.b16 %v1773
        %v3231 = vunpack.c.l.b16 %v1774
        %v3232 = vunpack.c.l.b16 %v1775
        %v3233 = vunpack.c.l.b16 %v1776
        %v3234 = vunpack.c.l.b16 %v1777
        %v3235 = vunpack.c.l.b16 %v1778
        %v3236 = vunpack.c.l.b16 %v1779
        %v3237 = vunpack.c.l.b16 %v1780
        %v3238 = vunpack.c.l.b16 %v1781
        %v3239 = vunpack.c.l.b16 %v1782
        %v3240 = vunpack.c.l.b16 %v1783
        %v3241 = vunpack.c.l.b16 %v1784
        %v3242 = vunpack.c.l.b16 %v1785
        %v3243 = vunpack.c.l.b16 %v1786
        %v3244 = vunpack.c.l.b16 %v1787
        %v3245 = vunpack.c.l.b16 %v1788
        %v3246 = vunpack.c.l.b16 %v1789
        %v3247 = vunpack.c.l.b16 %v1790
        %v3248 = vunpack.c.l.b16 %v1791
        %v3249 = vunpack.c.l.b16 %v1792
        %v3250 = vunpack.c.l.b16 %v1793
        %v3251 = vunpack.c.l.b16 %v1794
        %v3252 = vunpack.c.l.b16 %v1795
        %v3253 = vunpack.c.l.b16 %v1796
        %v3254 = vunpack.c.l.b16 %v1797
        %v3255 = vpack.c.b16 %v3224, %v3223
        %v3256 = vpack.c.b16 %v3226, %v3225
        %v3257 = vpack.c.b16 %v3228, %v3227
        %v3258 = vpack.c.b16 %v3230, %v3229
        %v3259 = vpack.c.b16 %v3232, %v3231
        %v3260 = vpack.c.b16 %v3234, %v3233
        %v3261 = vpack.c.b16 %v3236, %v3235
        %v3262 = vpack.c.b16 %v3238, %v3237
        %v3263 = vpack.c.b16 %v3240, %v3239
        %v3264 = vpack.c.b16 %v3242, %v3241
        %v3265 = vpack.c.b16 %v3244, %v3243
        %v3266 = vpack.c.b16 %v3246, %v3245
        %v3267 = vpack.c.b16 %v3248, %v3247
        %v3268 = vpack.c.b16 %v3250, %v3249
        %v3269 = vpack.c.b16 %v3252, %v3251
        %v3270 = vpack.c.b16 %v3254, %v3253
        %3271 = vrot.lane.b32.xlu0 %v3255, 12
        %v3272 = vpop.permute.xlu0 %3271
        %3273 = vrot.lane.b32.xlu0 %v3256, 12
        %v3274 = vpop.permute.xlu0 %3273
        %3275 = vrot.lane.b32.xlu0 %v3257, 12
        %v3276 = vpop.permute.xlu0 %3275
        %3277 = vrot.lane.b32.xlu0 %v3258, 12
        %v3278 = vpop.permute.xlu0 %3277
        %3279 = vrot.lane.b32.xlu0 %v3259, 12
        %v3280 = vpop.permute.xlu0 %3279
        %3281 = vrot.lane.b32.xlu0 %v3260, 12
        %v3282 = vpop.permute.xlu0 %3281
        %3283 = vrot.lane.b32.xlu0 %v3261, 12
        %v3284 = vpop.permute.xlu0 %3283
        %3285 = vrot.lane.b32.xlu0 %v3262, 12
        %v3286 = vpop.permute.xlu0 %3285
        %3287 = vrot.lane.b32.xlu0 %v3263, 12
        %v3288 = vpop.permute.xlu0 %3287
        %3289 = vrot.lane.b32.xlu0 %v3264, 12
        %v3290 = vpop.permute.xlu0 %3289
        %3291 = vrot.lane.b32.xlu0 %v3265, 12
        %v3292 = vpop.permute.xlu0 %3291
        %3293 = vrot.lane.b32.xlu0 %v3266, 12
        %v3294 = vpop.permute.xlu0 %3293
        %3295 = vrot.lane.b32.xlu0 %v3267, 12
        %v3296 = vpop.permute.xlu0 %3295
        %3297 = vrot.lane.b32.xlu0 %v3268, 12
        %v3298 = vpop.permute.xlu0 %3297
        %3299 = vrot.lane.b32.xlu0 %v3269, 12
        %v3300 = vpop.permute.xlu0 %3299
        %3301 = vrot.lane.b32.xlu0 %v3270, 12
        %v3302 = vpop.permute.xlu0 %3301
        %v3303 = vunpack.c.l.b16 %v1827
        %v3304 = vunpack.c.l.b16 %v1837
        %v3305 = vunpack.c.l.b16 %v1851
        %v3306 = vunpack.c.l.b16 %v1861
        %v3307 = vunpack.c.l.b16 %v1875
        %v3308 = vunpack.c.l.b16 %v1885
        %v3309 = vunpack.c.l.b16 %v1899
        %v3310 = vunpack.c.l.b16 %v1909
        %v3311 = vunpack.c.l.b16 %v1923
        %v3312 = vunpack.c.l.b16 %v1933
        %v3313 = vunpack.c.l.b16 %v1947
        %v3314 = vunpack.c.l.b16 %v1957
        %v3315 = vunpack.c.l.b16 %v1971
        %v3316 = vunpack.c.l.b16 %v1981
        %v3317 = vunpack.c.l.b16 %v1995
        %v3318 = vunpack.c.l.b16 %v2005
        %v3319 = vunpack.c.l.b16 %v2019
        %v3320 = vunpack.c.l.b16 %v2029
        %v3321 = vunpack.c.l.b16 %v2043
        %v3322 = vunpack.c.l.b16 %v2053
        %v3323 = vunpack.c.l.b16 %v2067
        %v3324 = vunpack.c.l.b16 %v2077
        %v3325 = vunpack.c.l.b16 %v2091
        %v3326 = vunpack.c.l.b16 %v2101
        %v3327 = vunpack.c.l.b16 %v2115
        %v3328 = vunpack.c.l.b16 %v2125
        %v3329 = vunpack.c.l.b16 %v2139
        %v3330 = vunpack.c.l.b16 %v2149
        %v3331 = vunpack.c.l.b16 %v2163
        %v3332 = vunpack.c.l.b16 %v2173
        %v3333 = vunpack.c.l.b16 %v2187
        %v3334 = vunpack.c.l.b16 %v2197
        %v3335 = vpack.c.b16 %v3304, %v3303
        %v3336 = vpack.c.b16 %v3306, %v3305
        %v3337 = vpack.c.b16 %v3308, %v3307
        %v3338 = vpack.c.b16 %v3310, %v3309
        %v3339 = vpack.c.b16 %v3312, %v3311
        %v3340 = vpack.c.b16 %v3314, %v3313
        %v3341 = vpack.c.b16 %v3316, %v3315
        %v3342 = vpack.c.b16 %v3318, %v3317
        %v3343 = vpack.c.b16 %v3320, %v3319
        %v3344 = vpack.c.b16 %v3322, %v3321
        %v3345 = vpack.c.b16 %v3324, %v3323
        %v3346 = vpack.c.b16 %v3326, %v3325
        %v3347 = vpack.c.b16 %v3328, %v3327
        %v3348 = vpack.c.b16 %v3330, %v3329
        %v3349 = vpack.c.b16 %v3332, %v3331
        %v3350 = vpack.c.b16 %v3334, %v3333
        %3351 = vrot.lane.b32.xlu0 %v3335, 16
        %v3352 = vpop.permute.xlu0 %3351
        %3353 = vrot.lane.b32.xlu0 %v3336, 16
        %v3354 = vpop.permute.xlu0 %3353
        %3355 = vrot.lane.b32.xlu0 %v3337, 16
        %v3356 = vpop.permute.xlu0 %3355
        %3357 = vrot.lane.b32.xlu0 %v3338, 16
        %v3358 = vpop.permute.xlu0 %3357
        %3359 = vrot.lane.b32.xlu0 %v3339, 16
        %v3360 = vpop.permute.xlu0 %3359
        %3361 = vrot.lane.b32.xlu0 %v3340, 16
        %v3362 = vpop.permute.xlu0 %3361
        %3363 = vrot.lane.b32.xlu0 %v3341, 16
        %v3364 = vpop.permute.xlu0 %3363
        %3365 = vrot.lane.b32.xlu0 %v3342, 16
        %v3366 = vpop.permute.xlu0 %3365
        %3367 = vrot.lane.b32.xlu0 %v3343, 16
        %v3368 = vpop.permute.xlu0 %3367
        %3369 = vrot.lane.b32.xlu0 %v3344, 16
        %v3370 = vpop.permute.xlu0 %3369
        %3371 = vrot.lane.b32.xlu0 %v3345, 16
        %v3372 = vpop.permute.xlu0 %3371
        %3373 = vrot.lane.b32.xlu0 %v3346, 16
        %v3374 = vpop.permute.xlu0 %3373
        %3375 = vrot.lane.b32.xlu0 %v3347, 16
        %v3376 = vpop.permute.xlu0 %3375
        %3377 = vrot.lane.b32.xlu0 %v3348, 16
        %v3378 = vpop.permute.xlu0 %3377
        %3379 = vrot.lane.b32.xlu0 %v3349, 16
        %v3380 = vpop.permute.xlu0 %3379
        %3381 = vrot.lane.b32.xlu0 %v3350, 16
        %v3382 = vpop.permute.xlu0 %3381
        %v3383 = vunpack.c.l.b16 %v2265
        %v3384 = vunpack.c.l.b16 %v2268
        %v3385 = vunpack.c.l.b16 %v2272
        %v3386 = vunpack.c.l.b16 %v2275
        %v3387 = vunpack.c.l.b16 %v2279
        %v3388 = vunpack.c.l.b16 %v2282
        %v3389 = vunpack.c.l.b16 %v2286
        %v3390 = vunpack.c.l.b16 %v2289
        %v3391 = vunpack.c.l.b16 %v2293
        %v3392 = vunpack.c.l.b16 %v2296
        %v3393 = vunpack.c.l.b16 %v2300
        %v3394 = vunpack.c.l.b16 %v2303
        %v3395 = vunpack.c.l.b16 %v2307
        %v3396 = vunpack.c.l.b16 %v2310
        %v3397 = vunpack.c.l.b16 %v2314
        %v3398 = vunpack.c.l.b16 %v2317
        %v3399 = vunpack.c.l.b16 %v2321
        %v3400 = vunpack.c.l.b16 %v2324
        %v3401 = vunpack.c.l.b16 %v2328
        %v3402 = vunpack.c.l.b16 %v2331
        %v3403 = vunpack.c.l.b16 %v2335
        %v3404 = vunpack.c.l.b16 %v2338
        %v3405 = vunpack.c.l.b16 %v2342
        %v3406 = vunpack.c.l.b16 %v2345
        %v3407 = vunpack.c.l.b16 %v2349
        %v3408 = vunpack.c.l.b16 %v2352
        %v3409 = vunpack.c.l.b16 %v2356
        %v3410 = vunpack.c.l.b16 %v2359
        %v3411 = vunpack.c.l.b16 %v2363
        %v3412 = vunpack.c.l.b16 %v2366
        %v3413 = vunpack.c.l.b16 %v2370
        %v3414 = vunpack.c.l.b16 %v2373
        %v3415 = vpack.c.b16 %v3384, %v3383
        %v3416 = vpack.c.b16 %v3386, %v3385
        %v3417 = vpack.c.b16 %v3388, %v3387
        %v3418 = vpack.c.b16 %v3390, %v3389
        %v3419 = vpack.c.b16 %v3392, %v3391
        %v3420 = vpack.c.b16 %v3394, %v3393
        %v3421 = vpack.c.b16 %v3396, %v3395
        %v3422 = vpack.c.b16 %v3398, %v3397
        %v3423 = vpack.c.b16 %v3400, %v3399
        %v3424 = vpack.c.b16 %v3402, %v3401
        %v3425 = vpack.c.b16 %v3404, %v3403
        %v3426 = vpack.c.b16 %v3406, %v3405
        %v3427 = vpack.c.b16 %v3408, %v3407
        %v3428 = vpack.c.b16 %v3410, %v3409
        %v3429 = vpack.c.b16 %v3412, %v3411
        %v3430 = vpack.c.b16 %v3414, %v3413
        %3431 = vrot.lane.b32.xlu0 %v3415, 20
        %v3432 = vpop.permute.xlu0 %3431
        %3433 = vrot.lane.b32.xlu0 %v3416, 20
        %v3434 = vpop.permute.xlu0 %3433
        %3435 = vrot.lane.b32.xlu0 %v3417, 20
        %v3436 = vpop.permute.xlu0 %3435
        %3437 = vrot.lane.b32.xlu0 %v3418, 20
        %v3438 = vpop.permute.xlu0 %3437
        %3439 = vrot.lane.b32.xlu0 %v3419, 20
        %v3440 = vpop.permute.xlu0 %3439
        %3441 = vrot.lane.b32.xlu0 %v3420, 20
        %v3442 = vpop.permute.xlu0 %3441
        %3443 = vrot.lane.b32.xlu0 %v3421, 20
        %v3444 = vpop.permute.xlu0 %3443
        %3445 = vrot.lane.b32.xlu0 %v3422, 20
        %v3446 = vpop.permute.xlu0 %3445
        %3447 = vrot.lane.b32.xlu0 %v3423, 20
        %v3448 = vpop.permute.xlu0 %3447
        %3449 = vrot.lane.b32.xlu0 %v3424, 20
        %v3450 = vpop.permute.xlu0 %3449
        %3451 = vrot.lane.b32.xlu0 %v3425, 20
        %v3452 = vpop.permute.xlu0 %3451
        %3453 = vrot.lane.b32.xlu0 %v3426, 20
        %v3454 = vpop.permute.xlu0 %3453
        %3455 = vrot.lane.b32.xlu0 %v3427, 20
        %v3456 = vpop.permute.xlu0 %3455
        %3457 = vrot.lane.b32.xlu0 %v3428, 20
        %v3458 = vpop.permute.xlu0 %3457
        %3459 = vrot.lane.b32.xlu0 %v3429, 20
        %v3460 = vpop.permute.xlu0 %3459
        %3461 = vrot.lane.b32.xlu0 %v3430, 20
        %v3462 = vpop.permute.xlu0 %3461
        %v3479 = vunpack.c.l.b16 %v2375
        %v3480 = vunpack.c.l.b16 %v2376
        %v3481 = vunpack.c.l.b16 %v2377
        %v3482 = vunpack.c.l.b16 %v2378
        %v3483 = vunpack.c.l.b16 %v2379
        %v3484 = vunpack.c.l.b16 %v2380
        %v3485 = vunpack.c.l.b16 %v2381
        %v3486 = vunpack.c.l.b16 %v2382
        %v3487 = vunpack.c.l.b16 %v2383
        %v3488 = vunpack.c.l.b16 %v2384
        %v3489 = vunpack.c.l.b16 %v2385
        %v3490 = vunpack.c.l.b16 %v2386
        %v3491 = vunpack.c.l.b16 %v2387
        %v3492 = vunpack.c.l.b16 %v2388
        %v3493 = vunpack.c.l.b16 %v2389
        %v3494 = vunpack.c.l.b16 %v2390
        %v3495 = vunpack.c.l.b16 %v2391
        %v3496 = vunpack.c.l.b16 %v2392
        %v3497 = vunpack.c.l.b16 %v2393
        %v3498 = vunpack.c.l.b16 %v2394
        %v3499 = vunpack.c.l.b16 %v2395
        %v3500 = vunpack.c.l.b16 %v2396
        %v3501 = vunpack.c.l.b16 %v2397
        %v3502 = vunpack.c.l.b16 %v2398
        %v3503 = vunpack.c.l.b16 %v2399
        %v3504 = vunpack.c.l.b16 %v2400
        %v3505 = vunpack.c.l.b16 %v2401
        %v3506 = vunpack.c.l.b16 %v2402
        %v3507 = vunpack.c.l.b16 %v2403
        %v3508 = vunpack.c.l.b16 %v2404
        %v3509 = vunpack.c.l.b16 %v2405
        %v3510 = vunpack.c.l.b16 %v2406
        %v3511 = vpack.c.b16 %v3480, %v3479
        %v3512 = vpack.c.b16 %v3482, %v3481
        %v3513 = vpack.c.b16 %v3484, %v3483
        %v3514 = vpack.c.b16 %v3486, %v3485
        %v3515 = vpack.c.b16 %v3488, %v3487
        %v3516 = vpack.c.b16 %v3490, %v3489
        %v3517 = vpack.c.b16 %v3492, %v3491
        %v3518 = vpack.c.b16 %v3494, %v3493
        %v3519 = vpack.c.b16 %v3496, %v3495
        %v3520 = vpack.c.b16 %v3498, %v3497
        %v3521 = vpack.c.b16 %v3500, %v3499
        %v3522 = vpack.c.b16 %v3502, %v3501
        %v3523 = vpack.c.b16 %v3504, %v3503
        %v3524 = vpack.c.b16 %v3506, %v3505
        %v3525 = vpack.c.b16 %v3508, %v3507
        %v3526 = vpack.c.b16 %v3510, %v3509
        %3527 = vrot.lane.b32.xlu0 %v3511, 24
        %v3528 = vpop.permute.xlu0 %3527
        %3529 = vrot.lane.b32.xlu0 %v3512, 24
        %v3530 = vpop.permute.xlu0 %3529
        %3531 = vrot.lane.b32.xlu0 %v3513, 24
        %v3532 = vpop.permute.xlu0 %3531
        %3533 = vrot.lane.b32.xlu0 %v3514, 24
        %v3534 = vpop.permute.xlu0 %3533
        %3535 = vrot.lane.b32.xlu0 %v3515, 24
        %v3536 = vpop.permute.xlu0 %3535
        %3537 = vrot.lane.b32.xlu0 %v3516, 24
        %v3538 = vpop.permute.xlu0 %3537
        %3539 = vrot.lane.b32.xlu0 %v3517, 24
        %v3540 = vpop.permute.xlu0 %3539
        %3541 = vrot.lane.b32.xlu0 %v3518, 24
        %v3542 = vpop.permute.xlu0 %3541
        %3543 = vrot.lane.b32.xlu0 %v3519, 24
        %v3544 = vpop.permute.xlu0 %3543
        %3545 = vrot.lane.b32.xlu0 %v3520, 24
        %v3546 = vpop.permute.xlu0 %3545
        %3547 = vrot.lane.b32.xlu0 %v3521, 24
        %v3548 = vpop.permute.xlu0 %3547
        %3549 = vrot.lane.b32.xlu0 %v3522, 24
        %v3550 = vpop.permute.xlu0 %3549
        %3551 = vrot.lane.b32.xlu0 %v3523, 24
        %v3552 = vpop.permute.xlu0 %3551
        %3553 = vrot.lane.b32.xlu0 %v3524, 24
        %v3554 = vpop.permute.xlu0 %3553
        %3555 = vrot.lane.b32.xlu0 %v3525, 24
        %v3556 = vpop.permute.xlu0 %3555
        %3557 = vrot.lane.b32.xlu0 %v3526, 24
        %v3558 = vpop.permute.xlu0 %3557
        %v3559 = vunpack.c.l.b16 %v2436
        %v3560 = vunpack.c.l.b16 %v2446
        %v3561 = vunpack.c.l.b16 %v2460
        %v3562 = vunpack.c.l.b16 %v2470
        %v3563 = vunpack.c.l.b16 %v2484
        %v3564 = vunpack.c.l.b16 %v2494
        %v3565 = vunpack.c.l.b16 %v2508
        %v3566 = vunpack.c.l.b16 %v2518
        %v3567 = vunpack.c.l.b16 %v2532
        %v3568 = vunpack.c.l.b16 %v2542
        %v3569 = vunpack.c.l.b16 %v2556
        %v3570 = vunpack.c.l.b16 %v2566
        %v3571 = vunpack.c.l.b16 %v2580
        %v3572 = vunpack.c.l.b16 %v2590
        %v3573 = vunpack.c.l.b16 %v2604
        %v3574 = vunpack.c.l.b16 %v2614
        %v3575 = vunpack.c.l.b16 %v2628
        %v3576 = vunpack.c.l.b16 %v2638
        %v3577 = vunpack.c.l.b16 %v2652
        %v3578 = vunpack.c.l.b16 %v2662
        %v3579 = vunpack.c.l.b16 %v2676
        %v3580 = vunpack.c.l.b16 %v2686
        %v3581 = vunpack.c.l.b16 %v2700
        %v3582 = vunpack.c.l.b16 %v2710
        %v3583 = vunpack.c.l.b16 %v2724
        %v3584 = vunpack.c.l.b16 %v2734
        %v3585 = vunpack.c.l.b16 %v2748
        %v3586 = vunpack.c.l.b16 %v2758
        %v3587 = vunpack.c.l.b16 %v2772
        %v3588 = vunpack.c.l.b16 %v2782
        %v3589 = vunpack.c.l.b16 %v2796
        %v3590 = vunpack.c.l.b16 %v2806
        %v3591 = vpack.c.b16 %v3560, %v3559
        %v3592 = vpack.c.b16 %v3562, %v3561
        %v3593 = vpack.c.b16 %v3564, %v3563
        %v3594 = vpack.c.b16 %v3566, %v3565
        %v3595 = vpack.c.b16 %v3568, %v3567
        %v3596 = vpack.c.b16 %v3570, %v3569
        %v3597 = vpack.c.b16 %v3572, %v3571
        %v3598 = vpack.c.b16 %v3574, %v3573
        %v3599 = vpack.c.b16 %v3576, %v3575
        %v3600 = vpack.c.b16 %v3578, %v3577
        %v3601 = vpack.c.b16 %v3580, %v3579
        %v3602 = vpack.c.b16 %v3582, %v3581
        %v3603 = vpack.c.b16 %v3584, %v3583
        %v3604 = vpack.c.b16 %v3586, %v3585
        %v3605 = vpack.c.b16 %v3588, %v3587
        %v3606 = vpack.c.b16 %v3590, %v3589
        %3607 = vrot.lane.b32.xlu0 %v3591, 28
        %v3608 = vpop.permute.xlu0 %3607
        %3609 = vrot.lane.b32.xlu0 %v3592, 28
        %v3610 = vpop.permute.xlu0 %3609
        %3611 = vrot.lane.b32.xlu0 %v3593, 28
        %v3612 = vpop.permute.xlu0 %3611
        %3613 = vrot.lane.b32.xlu0 %v3594, 28
        %v3614 = vpop.permute.xlu0 %3613
        %3615 = vrot.lane.b32.xlu0 %v3595, 28
        %v3616 = vpop.permute.xlu0 %3615
        %3617 = vrot.lane.b32.xlu0 %v3596, 28
        %v3618 = vpop.permute.xlu0 %3617
        %3619 = vrot.lane.b32.xlu0 %v3597, 28
        %v3620 = vpop.permute.xlu0 %3619
        %3621 = vrot.lane.b32.xlu0 %v3598, 28
        %v3622 = vpop.permute.xlu0 %3621
        %3623 = vrot.lane.b32.xlu0 %v3599, 28
        %v3624 = vpop.permute.xlu0 %3623
        %3625 = vrot.lane.b32.xlu0 %v3600, 28
        %v3626 = vpop.permute.xlu0 %3625
        %3627 = vrot.lane.b32.xlu0 %v3601, 28
        %v3628 = vpop.permute.xlu0 %3627
        %3629 = vrot.lane.b32.xlu0 %v3602, 28
        %v3630 = vpop.permute.xlu0 %3629
        %3631 = vrot.lane.b32.xlu0 %v3603, 28
        %v3632 = vpop.permute.xlu0 %3631
        %3633 = vrot.lane.b32.xlu0 %v3604, 28
        %v3634 = vpop.permute.xlu0 %3633
        %3635 = vrot.lane.b32.xlu0 %v3605, 28
        %v3636 = vpop.permute.xlu0 %3635
        %3637 = vrot.lane.b32.xlu0 %v3606, 28
        %v3638 = vpop.permute.xlu0 %3637
        %v3639 = vunpack.c.l.b16 %v2874
        %v3640 = vunpack.c.l.b16 %v2877
        %v3641 = vunpack.c.l.b16 %v2881
        %v3642 = vunpack.c.l.b16 %v2884
        %v3643 = vunpack.c.l.b16 %v2888
        %v3644 = vunpack.c.l.b16 %v2891
        %v3645 = vunpack.c.l.b16 %v2895
        %v3646 = vunpack.c.l.b16 %v2898
        %v3647 = vunpack.c.l.b16 %v2902
        %v3648 = vunpack.c.l.b16 %v2905
        %v3649 = vunpack.c.l.b16 %v2909
        %v3650 = vunpack.c.l.b16 %v2912
        %v3651 = vunpack.c.l.b16 %v2916
        %v3652 = vunpack.c.l.b16 %v2919
        %v3653 = vunpack.c.l.b16 %v2923
        %v3654 = vunpack.c.l.b16 %v2926
        %v3655 = vunpack.c.l.b16 %v2930
        %v3656 = vunpack.c.l.b16 %v2933
        %v3657 = vunpack.c.l.b16 %v2937
        %v3658 = vunpack.c.l.b16 %v2940
        %v3659 = vunpack.c.l.b16 %v2944
        %v3660 = vunpack.c.l.b16 %v2947
        %v3661 = vunpack.c.l.b16 %v2951
        %v3662 = vunpack.c.l.b16 %v2954
        %v3663 = vunpack.c.l.b16 %v2958
        %v3664 = vunpack.c.l.b16 %v2961
        %v3665 = vunpack.c.l.b16 %v2965
        %v3666 = vunpack.c.l.b16 %v2968
        %v3667 = vunpack.c.l.b16 %v2972
        %v3668 = vunpack.c.l.b16 %v2975
        %v3669 = vunpack.c.l.b16 %v2979
        %v3670 = vunpack.c.l.b16 %v2982
        %v3671 = vpack.c.b16 %v3640, %v3639
        %v3672 = vpack.c.b16 %v3642, %v3641
        %v3673 = vpack.c.b16 %v3644, %v3643
        %v3674 = vpack.c.b16 %v3646, %v3645
        %v3675 = vpack.c.b16 %v3648, %v3647
        %v3676 = vpack.c.b16 %v3650, %v3649
        %v3677 = vpack.c.b16 %v3652, %v3651
        %v3678 = vpack.c.b16 %v3654, %v3653
        %v3679 = vpack.c.b16 %v3656, %v3655
        %v3680 = vpack.c.b16 %v3658, %v3657
        %v3681 = vpack.c.b16 %v3660, %v3659
        %v3682 = vpack.c.b16 %v3662, %v3661
        %v3683 = vpack.c.b16 %v3664, %v3663
        %v3684 = vpack.c.b16 %v3666, %v3665
        %v3685 = vpack.c.b16 %v3668, %v3667
        %v3686 = vpack.c.b16 %v3670, %v3669
        %3687 = vrot.lane.b32.xlu0 %v3671, 32
        %v3688 = vpop.permute.xlu0 %3687
        %3689 = vrot.lane.b32.xlu0 %v3672, 32
        %v3690 = vpop.permute.xlu0 %3689
        %3691 = vrot.lane.b32.xlu0 %v3673, 32
        %v3692 = vpop.permute.xlu0 %3691
        %3693 = vrot.lane.b32.xlu0 %v3674, 32
        %v3694 = vpop.permute.xlu0 %3693
        %3695 = vrot.lane.b32.xlu0 %v3675, 32
        %v3696 = vpop.permute.xlu0 %3695
        %3697 = vrot.lane.b32.xlu0 %v3676, 32
        %v3698 = vpop.permute.xlu0 %3697
        %3699 = vrot.lane.b32.xlu0 %v3677, 32
        %v3700 = vpop.permute.xlu0 %3699
        %3701 = vrot.lane.b32.xlu0 %v3678, 32
        %v3702 = vpop.permute.xlu0 %3701
        %3703 = vrot.lane.b32.xlu0 %v3679, 32
        %v3704 = vpop.permute.xlu0 %3703
        %3705 = vrot.lane.b32.xlu0 %v3680, 32
        %v3706 = vpop.permute.xlu0 %3705
        %3707 = vrot.lane.b32.xlu0 %v3681, 32
        %v3708 = vpop.permute.xlu0 %3707
        %3709 = vrot.lane.b32.xlu0 %v3682, 32
        %v3710 = vpop.permute.xlu0 %3709
        %3711 = vrot.lane.b32.xlu0 %v3683, 32
        %v3712 = vpop.permute.xlu0 %3711
        %3713 = vrot.lane.b32.xlu0 %v3684, 32
        %v3714 = vpop.permute.xlu0 %3713
        %3715 = vrot.lane.b32.xlu0 %v3685, 32
        %v3716 = vpop.permute.xlu0 %3715
        %3717 = vrot.lane.b32.xlu0 %v3686, 32
        %v3718 = vpop.permute.xlu0 %3717
        %vm3719 = vcmask 31744
        %v3722 = vsel %vm3719, %v3031, %v3096
        %v3725 = vsel %vm3719, %v3032, %v3098
        %v3728 = vsel %vm3719, %v3033, %v3100
        %v3731 = vsel %vm3719, %v3034, %v3102
        %v3734 = vsel %vm3719, %v3035, %v3104
        %v3737 = vsel %vm3719, %v3036, %v3106
        %v3740 = vsel %vm3719, %v3037, %v3108
        %v3743 = vsel %vm3719, %v3038, %v3110
        %v3746 = vsel %vm3719, %v3039, %v3112
        %v3749 = vsel %vm3719, %v3040, %v3114
        %v3752 = vsel %vm3719, %v3041, %v3116
        %v3755 = vsel %vm3719, %v3042, %v3118
        %v3758 = vsel %vm3719, %v3043, %v3120
        %v3761 = vsel %vm3719, %v3044, %v3122
        %v3764 = vsel %vm3719, %v3045, %v3124
        %v3767 = vsel %vm3719, %v3046, %v3126
        %v3769 = vsel %vm449, %v3722, %v3176
        %v3771 = vsel %vm449, %v3725, %v3178
        %v3773 = vsel %vm449, %v3728, %v3180
        %v3775 = vsel %vm449, %v3731, %v3182
        %v3777 = vsel %vm449, %v3734, %v3184
        %v3779 = vsel %vm449, %v3737, %v3186
        %v3781 = vsel %vm449, %v3740, %v3188
        %v3783 = vsel %vm449, %v3743, %v3190
        %v3785 = vsel %vm449, %v3746, %v3192
        %v3787 = vsel %vm449, %v3749, %v3194
        %v3789 = vsel %vm449, %v3752, %v3196
        %v3791 = vsel %vm449, %v3755, %v3198
        %v3793 = vsel %vm449, %v3758, %v3200
        %v3795 = vsel %vm449, %v3761, %v3202
        %v3797 = vsel %vm449, %v3764, %v3204
        %v3799 = vsel %vm449, %v3767, %v3206
        %vm3800 = vcmask 97280
        %v3802 = vsel %vm3800, %v3769, %v3272
        %v3804 = vsel %vm3800, %v3771, %v3274
        %v3806 = vsel %vm3800, %v3773, %v3276
        %v3808 = vsel %vm3800, %v3775, %v3278
        %v3810 = vsel %vm3800, %v3777, %v3280
        %v3812 = vsel %vm3800, %v3779, %v3282
        %v3814 = vsel %vm3800, %v3781, %v3284
        %v3816 = vsel %vm3800, %v3783, %v3286
        %v3818 = vsel %vm3800, %v3785, %v3288
        %v3820 = vsel %vm3800, %v3787, %v3290
        %v3822 = vsel %vm3800, %v3789, %v3292
        %v3824 = vsel %vm3800, %v3791, %v3294
        %v3826 = vsel %vm3800, %v3793, %v3296
        %v3828 = vsel %vm3800, %v3795, %v3298
        %v3830 = vsel %vm3800, %v3797, %v3300
        %v3832 = vsel %vm3800, %v3799, %v3302
        %vm3833 = vcmask 130048
        %v3835 = vsel %vm3833, %v3802, %v3352
        %v3837 = vsel %vm3833, %v3804, %v3354
        %v3839 = vsel %vm3833, %v3806, %v3356
        %v3841 = vsel %vm3833, %v3808, %v3358
        %v3843 = vsel %vm3833, %v3810, %v3360
        %v3845 = vsel %vm3833, %v3812, %v3362
        %v3847 = vsel %vm3833, %v3814, %v3364
        %v3849 = vsel %vm3833, %v3816, %v3366
        %v3851 = vsel %vm3833, %v3818, %v3368
        %v3853 = vsel %vm3833, %v3820, %v3370
        %v3855 = vsel %vm3833, %v3822, %v3372
        %v3857 = vsel %vm3833, %v3824, %v3374
        %v3859 = vsel %vm3833, %v3826, %v3376
        %v3861 = vsel %vm3833, %v3828, %v3378
        %v3863 = vsel %vm3833, %v3830, %v3380
        %v3865 = vsel %vm3833, %v3832, %v3382
        %vm3866 = vcmask 162816
        %v3868 = vsel %vm3866, %v3835, %v3432
        %v3870 = vsel %vm3866, %v3837, %v3434
        %v3872 = vsel %vm3866, %v3839, %v3436
        %v3874 = vsel %vm3866, %v3841, %v3438
        %v3876 = vsel %vm3866, %v3843, %v3440
        %v3878 = vsel %vm3866, %v3845, %v3442
        %v3880 = vsel %vm3866, %v3847, %v3444
        %v3882 = vsel %vm3866, %v3849, %v3446
        %v3884 = vsel %vm3866, %v3851, %v3448
        %v3886 = vsel %vm3866, %v3853, %v3450
        %v3888 = vsel %vm3866, %v3855, %v3452
        %v3890 = vsel %vm3866, %v3857, %v3454
        %v3892 = vsel %vm3866, %v3859, %v3456
        %v3894 = vsel %vm3866, %v3861, %v3458
        %v3896 = vsel %vm3866, %v3863, %v3460
        %v3898 = vsel %vm3866, %v3865, %v3462
        %vm3899 = vcmask 195584
        %v3901 = vsel %vm3899, %v3868, %v3528
        %v3903 = vsel %vm3899, %v3870, %v3530
        %v3905 = vsel %vm3899, %v3872, %v3532
        %v3907 = vsel %vm3899, %v3874, %v3534
        %v3909 = vsel %vm3899, %v3876, %v3536
        %v3911 = vsel %vm3899, %v3878, %v3538
        %v3913 = vsel %vm3899, %v3880, %v3540
        %v3915 = vsel %vm3899, %v3882, %v3542
        %v3917 = vsel %vm3899, %v3884, %v3544
        %v3919 = vsel %vm3899, %v3886, %v3546
        %v3921 = vsel %vm3899, %v3888, %v3548
        %v3923 = vsel %vm3899, %v3890, %v3550
        %v3925 = vsel %vm3899, %v3892, %v3552
        %v3927 = vsel %vm3899, %v3894, %v3554
        %v3929 = vsel %vm3899, %v3896, %v3556
        %v3931 = vsel %vm3899, %v3898, %v3558
        %vm3932 = vcmask 228352
        %v3934 = vsel %vm3932, %v3901, %v3608
        %v3936 = vsel %vm3932, %v3903, %v3610
        %v3938 = vsel %vm3932, %v3905, %v3612
        %v3940 = vsel %vm3932, %v3907, %v3614
        %v3942 = vsel %vm3932, %v3909, %v3616
        %v3944 = vsel %vm3932, %v3911, %v3618
        %v3946 = vsel %vm3932, %v3913, %v3620
        %v3948 = vsel %vm3932, %v3915, %v3622
        %v3950 = vsel %vm3932, %v3917, %v3624
        %v3952 = vsel %vm3932, %v3919, %v3626
        %v3954 = vsel %vm3932, %v3921, %v3628
        %v3956 = vsel %vm3932, %v3923, %v3630
        %v3958 = vsel %vm3932, %v3925, %v3632
        %v3960 = vsel %vm3932, %v3927, %v3634
        %v3962 = vsel %vm3932, %v3929, %v3636
        %v3964 = vsel %vm3932, %v3931, %v3638
        %vm3965 = vcmask 261120
        %v3967 = vsel %vm3965, %v3934, %v3688
        %v3969 = vsel %vm3965, %v3936, %v3690
        %v3971 = vsel %vm3965, %v3938, %v3692
        %v3973 = vsel %vm3965, %v3940, %v3694
        %v3975 = vsel %vm3965, %v3942, %v3696
        %v3977 = vsel %vm3965, %v3944, %v3698
        %v3979 = vsel %vm3965, %v3946, %v3700
        %v3981 = vsel %vm3965, %v3948, %v3702
        %v3983 = vsel %vm3965, %v3950, %v3704
        %v3985 = vsel %vm3965, %v3952, %v3706
        %v3987 = vsel %vm3965, %v3954, %v3708
        %v3989 = vsel %vm3965, %v3956, %v3710
        %v3991 = vsel %vm3965, %v3958, %v3712
        %v3993 = vsel %vm3965, %v3960, %v3714
        %v3995 = vsel %vm3965, %v3962, %v3716
        %v3997 = vsel %vm3965, %v3964, %v3718
        %v3998 = vld [vmem:[%s3] sm:$0xf]
        %v3999 = vld [vmem:[%s3 + $0x4] sm:$0xf]
        %v4000 = vld [vmem:[%s3 + $0x8] sm:$0xf]
        %v4001 = vld [vmem:[%s3 + $0xc] sm:$0xf]
        %v4002 = vld [vmem:[%s3 + $0x10] sm:$0x3]
        %v4003 = vld [vmem:[%s4] sm:$0x1]
        %v4005 = vperm.slane %v4003, 0
        %v4012 = vunpack.c.l.b16 %v3998
        %v4013 = vunpack.c.l.b16 %v3999
        %v4014 = vunpack.c.l.b16 %v4000
        %v4015 = vunpack.c.l.b16 %v4001
        %v4016 = vunpack.c.l.b16 %v4002
        %v4017 = vpack.c.b16 %v4013, %v4012
        %v4018 = vpack.c.b16 %v4015, %v4014
        %v4019 = vpack.c.b16 %v4016, %v4016
        %vm4022 = vcmask 293888
        %v4023 = vsel %vm4022, %v3967, 0
        %v4025 = vsel %vm4022, %v3969, 0
        %v4027 = vsel %vm4022, %v3971, 0
        %v4029 = vsel %vm4022, %v3973, 0
        %v4031 = vsel %vm4022, %v3975, 0
        %v4033 = vsel %vm4022, %v3977, 0
        %v4035 = vsel %vm4022, %v3979, 0
        %v4037 = vsel %vm4022, %v3981, 0
        %v4039 = vsel %vm4022, %v3983, 0
        %v4041 = vsel %vm4022, %v3985, 0
        %v4043 = vsel %vm4022, %v3987, 0
        %v4045 = vsel %vm4022, %v3989, 0
        %v4047 = vsel %vm4022, %v3991, 0
        %v4049 = vsel %vm4022, %v3993, 0
        %v4051 = vsel %vm4022, %v3995, 0
        %v4053 = vsel %vm4022, %v3997, 0
        %vm4055 = vcmask 1041408
        %v4057 = vsel %vm4055, %v4019, 0
        %4059 = vmatpush.bf16.msra.mxu0 0
        %4060 = vmatpush.bf16.msra.mxu0 0
        %4061 = vmatpush.bf16.msra.mxu0 0
        %4062 = vmatpush.bf16.msra.mxu0 0
        %4063 = vmatpush.bf16.msra.mxu0 0
        %4064 = vmatpush.bf16.msra.mxu0 %v4057
        %4065 = vmatpush.bf16.msra.mxu0 %v4018
        %4066 = vmatpush.bf16.msra.mxu0 %v4017
        %4067 = vmatmul.bf16.gmra.mxu0 %v4023
        %v4068 = vpop.f32.mrf.mxu0
        %v4069 = vadd.f32 %v4005, %v4068
        %v4070 = vpop.f32.mrf.mxu0
        %v4071 = vadd.f32 %v4005, %v4070
        %4072 = vmatmul.bf16.gmra.mxu0 %v4025
        %v4073 = vpop.f32.mrf.mxu0
        %v4074 = vadd.f32 %v4005, %v4073
        %v4075 = vpop.f32.mrf.mxu0
        %v4076 = vadd.f32 %v4005, %v4075
        %4077 = vmatmul.bf16.gmra.mxu0 %v4027
        %v4078 = vpop.f32.mrf.mxu0
        %v4079 = vadd.f32 %v4005, %v4078
        %v4080 = vpop.f32.mrf.mxu0
        %v4081 = vadd.f32 %v4005, %v4080
        %4082 = vmatmul.bf16.gmra.mxu0 %v4029
        %v4083 = vpop.f32.mrf.mxu0
        %v4084 = vadd.f32 %v4005, %v4083
        %v4085 = vpop.f32.mrf.mxu0
        %v4086 = vadd.f32 %v4005, %v4085
        %4087 = vmatmul.bf16.gmra.mxu0 %v4031
        %v4088 = vpop.f32.mrf.mxu0
        %v4089 = vadd.f32 %v4005, %v4088
        %v4090 = vpop.f32.mrf.mxu0
        %v4091 = vadd.f32 %v4005, %v4090
        %4092 = vmatmul.bf16.gmra.mxu0 %v4033
        %v4093 = vpop.f32.mrf.mxu0
        %v4094 = vadd.f32 %v4005, %v4093
        %v4095 = vpop.f32.mrf.mxu0
        %v4096 = vadd.f32 %v4005, %v4095
        %4097 = vmatmul.bf16.gmra.mxu0 %v4035
        %v4098 = vpop.f32.mrf.mxu0
        %v4099 = vadd.f32 %v4005, %v4098
        %v4100 = vpop.f32.mrf.mxu0
        %v4101 = vadd.f32 %v4005, %v4100
        %4102 = vmatmul.bf16.gmra.mxu0 %v4037
        %v4103 = vpop.f32.mrf.mxu0
        %v4104 = vadd.f32 %v4005, %v4103
        %v4105 = vpop.f32.mrf.mxu0
        %v4106 = vadd.f32 %v4005, %v4105
        %4107 = vmatmul.bf16.gmra.mxu0 %v4039
        %v4108 = vpop.f32.mrf.mxu0
        %v4109 = vadd.f32 %v4005, %v4108
        %v4110 = vpop.f32.mrf.mxu0
        %v4111 = vadd.f32 %v4005, %v4110
        %4112 = vmatmul.bf16.gmra.mxu0 %v4041
        %v4113 = vpop.f32.mrf.mxu0
        %v4114 = vadd.f32 %v4005, %v4113
        %v4115 = vpop.f32.mrf.mxu0
        %v4116 = vadd.f32 %v4005, %v4115
        %4117 = vmatmul.bf16.gmra.mxu0 %v4043
        %v4118 = vpop.f32.mrf.mxu0
        %v4119 = vadd.f32 %v4005, %v4118
        %v4120 = vpop.f32.mrf.mxu0
        %v4121 = vadd.f32 %v4005, %v4120
        %4122 = vmatmul.bf16.gmra.mxu0 %v4045
        %v4123 = vpop.f32.mrf.mxu0
        %v4124 = vadd.f32 %v4005, %v4123
        %v4125 = vpop.f32.mrf.mxu0
        %v4126 = vadd.f32 %v4005, %v4125
        %4127 = vmatmul.bf16.gmra.mxu0 %v4047
        %v4128 = vpop.f32.mrf.mxu0
        %v4129 = vadd.f32 %v4005, %v4128
        %v4130 = vpop.f32.mrf.mxu0
        %v4131 = vadd.f32 %v4005, %v4130
        %4132 = vmatmul.bf16.gmra.mxu0 %v4049
        %v4133 = vpop.f32.mrf.mxu0
        %v4134 = vadd.f32 %v4005, %v4133
        %v4135 = vpop.f32.mrf.mxu0
        %v4136 = vadd.f32 %v4005, %v4135
        %4137 = vmatmul.bf16.gmra.mxu0 %v4051
        %v4138 = vpop.f32.mrf.mxu0
        %v4139 = vadd.f32 %v4005, %v4138
        %v4140 = vpop.f32.mrf.mxu0
        %v4141 = vadd.f32 %v4005, %v4140
        %4142 = vmatmul.bf16.gmra.mxu0 %v4053
        %v4143 = vpop.f32.mrf.mxu0
        %v4144 = vadd.f32 %v4005, %v4143
        %v4145 = vpop.f32.mrf.mxu0
        %v4146 = vadd.f32 %v4005, %v4145
        %4147 = vdwg.mxu0
        %v4148 = vmax.f32 %v4069, 0.0
        %v4149 = vmax.f32 %v4071, 0.0
        %v4150 = vmax.f32 %v4074, 0.0
        %v4151 = vmax.f32 %v4076, 0.0
        %v4152 = vmax.f32 %v4079, 0.0
        %v4153 = vmax.f32 %v4081, 0.0
        %v4154 = vmax.f32 %v4084, 0.0
        %v4155 = vmax.f32 %v4086, 0.0
        %v4156 = vmax.f32 %v4089, 0.0
        %v4157 = vmax.f32 %v4091, 0.0
        %v4158 = vmax.f32 %v4094, 0.0
        %v4159 = vmax.f32 %v4096, 0.0
        %v4160 = vmax.f32 %v4099, 0.0
        %v4161 = vmax.f32 %v4101, 0.0
        %v4162 = vmax.f32 %v4104, 0.0
        %v4163 = vmax.f32 %v4106, 0.0
        %v4164 = vmax.f32 %v4109, 0.0
        %v4165 = vmax.f32 %v4111, 0.0
        %v4166 = vmax.f32 %v4114, 0.0
        %v4167 = vmax.f32 %v4116, 0.0
        %v4168 = vmax.f32 %v4119, 0.0
        %v4169 = vmax.f32 %v4121, 0.0
        %v4170 = vmax.f32 %v4124, 0.0
        %v4171 = vmax.f32 %v4126, 0.0
        %v4172 = vmax.f32 %v4129, 0.0
        %v4173 = vmax.f32 %v4131, 0.0
        %v4174 = vmax.f32 %v4134, 0.0
        %v4175 = vmax.f32 %v4136, 0.0
        %v4176 = vmax.f32 %v4139, 0.0
        %v4177 = vmax.f32 %v4141, 0.0
        %v4178 = vmax.f32 %v4144, 0.0
        %v4179 = vmax.f32 %v4146, 0.0
        %v4180 = vpack.c.bf16 %v4149, %v4148
        %v4181 = vpack.c.bf16 %v4151, %v4150
        %v4182 = vpack.c.bf16 %v4153, %v4152
        %v4183 = vpack.c.bf16 %v4155, %v4154
        %v4184 = vpack.c.bf16 %v4157, %v4156
        %v4185 = vpack.c.bf16 %v4159, %v4158
        %v4186 = vpack.c.bf16 %v4161, %v4160
        %v4187 = vpack.c.bf16 %v4163, %v4162
        %v4188 = vpack.c.bf16 %v4165, %v4164
        %v4189 = vpack.c.bf16 %v4167, %v4166
        %v4190 = vpack.c.bf16 %v4169, %v4168
        %v4191 = vpack.c.bf16 %v4171, %v4170
        %v4192 = vpack.c.bf16 %v4173, %v4172
        %v4193 = vpack.c.bf16 %v4175, %v4174
        %v4194 = vpack.c.bf16 %v4177, %v4176
        %v4195 = vpack.c.bf16 %v4179, %v4178
        %v4196 = vld [vmem:[%s5] sm:$0x3]
        %v4197 = vld [vmem:[%s6] sm:$0x1]
        %v4199 = vperm.slane %v4197, 0
        %v4202 = vsel %vm3719, %v4180, 0
        %v4205 = vsel %vm3719, %v4181, 0
        %v4208 = vsel %vm3719, %v4182, 0
        %v4211 = vsel %vm3719, %v4183, 0
        %v4214 = vsel %vm3719, %v4184, 0
        %v4217 = vsel %vm3719, %v4185, 0
        %v4220 = vsel %vm3719, %v4186, 0
        %v4223 = vsel %vm3719, %v4187, 0
        %v4226 = vsel %vm3719, %v4188, 0
        %v4229 = vsel %vm3719, %v4189, 0
        %v4232 = vsel %vm3719, %v4190, 0
        %v4235 = vsel %vm3719, %v4191, 0
        %v4238 = vsel %vm3719, %v4192, 0
        %v4241 = vsel %vm3719, %v4193, 0
        %v4244 = vsel %vm3719, %v4194, 0
        %v4247 = vsel %vm3719, %v4195, 0
        %v4250 = vsel %vm4055, %v4196, 0
        %4252 = vmatpush.bf16.msra.mxu0 0
        %4253 = vmatpush.bf16.msra.mxu0 0
        %4254 = vmatpush.bf16.msra.mxu0 0
        %4255 = vmatpush.bf16.msra.mxu0 0
        %4256 = vmatpush.bf16.msra.mxu0 0
        %4257 = vmatpush.bf16.msra.mxu0 0
        %4258 = vmatpush.bf16.msra.mxu0 0
        %4259 = vmatpush.bf16.msra.mxu0 %v4250
        %4260 = vmatmul.bf16.gmra.mxu0 %v4202
        %v4261 = vpop.f32.mrf.mxu0
        %v4262 = vadd.f32 %v4199, %v4261
        %v4263 = vpop.f32.mrf.mxu0
        %v4264 = vadd.f32 %v4199, %v4263
        %4265 = vmatmul.bf16.gmra.mxu0 %v4205
        %v4266 = vpop.f32.mrf.mxu0
        %v4267 = vadd.f32 %v4199, %v4266
        %v4268 = vpop.f32.mrf.mxu0
        %v4269 = vadd.f32 %v4199, %v4268
        %4270 = vmatmul.bf16.gmra.mxu0 %v4208
        %v4271 = vpop.f32.mrf.mxu0
        %v4272 = vadd.f32 %v4199, %v4271
        %v4273 = vpop.f32.mrf.mxu0
        %v4274 = vadd.f32 %v4199, %v4273
        %4275 = vmatmul.bf16.gmra.mxu0 %v4211
        %v4276 = vpop.f32.mrf.mxu0
        %v4277 = vadd.f32 %v4199, %v4276
        %v4278 = vpop.f32.mrf.mxu0
        %v4279 = vadd.f32 %v4199, %v4278
        %4280 = vmatmul.bf16.gmra.mxu0 %v4214
        %v4281 = vpop.f32.mrf.mxu0
        %v4282 = vadd.f32 %v4199, %v4281
        %v4283 = vpop.f32.mrf.mxu0
        %v4284 = vadd.f32 %v4199, %v4283
        %4285 = vmatmul.bf16.gmra.mxu0 %v4217
        %v4286 = vpop.f32.mrf.mxu0
        %v4287 = vadd.f32 %v4199, %v4286
        %v4288 = vpop.f32.mrf.mxu0
        %v4289 = vadd.f32 %v4199, %v4288
        %4290 = vmatmul.bf16.gmra.mxu0 %v4220
        %v4291 = vpop.f32.mrf.mxu0
        %v4292 = vadd.f32 %v4199, %v4291
        %v4293 = vpop.f32.mrf.mxu0
        %v4294 = vadd.f32 %v4199, %v4293
        %4295 = vmatmul.bf16.gmra.mxu0 %v4223
        %v4296 = vpop.f32.mrf.mxu0
        %v4297 = vadd.f32 %v4199, %v4296
        %v4298 = vpop.f32.mrf.mxu0
        %v4299 = vadd.f32 %v4199, %v4298
        %4300 = vmatmul.bf16.gmra.mxu0 %v4226
        %v4301 = vpop.f32.mrf.mxu0
        %v4302 = vadd.f32 %v4199, %v4301
        %v4303 = vpop.f32.mrf.mxu0
        %v4304 = vadd.f32 %v4199, %v4303
        %4305 = vmatmul.bf16.gmra.mxu0 %v4229
        %v4306 = vpop.f32.mrf.mxu0
        %v4307 = vadd.f32 %v4199, %v4306
        %v4308 = vpop.f32.mrf.mxu0
        %v4309 = vadd.f32 %v4199, %v4308
        %4310 = vmatmul.bf16.gmra.mxu0 %v4232
        %v4311 = vpop.f32.mrf.mxu0
        %v4312 = vadd.f32 %v4199, %v4311
        %v4313 = vpop.f32.mrf.mxu0
        %v4314 = vadd.f32 %v4199, %v4313
        %4315 = vmatmul.bf16.gmra.mxu0 %v4235
        %v4316 = vpop.f32.mrf.mxu0
        %v4317 = vadd.f32 %v4199, %v4316
        %v4318 = vpop.f32.mrf.mxu0
        %v4319 = vadd.f32 %v4199, %v4318
        %4320 = vmatmul.bf16.gmra.mxu0 %v4238
        %v4321 = vpop.f32.mrf.mxu0
        %v4322 = vadd.f32 %v4199, %v4321
        %v4323 = vpop.f32.mrf.mxu0
        %v4324 = vadd.f32 %v4199, %v4323
        %4325 = vmatmul.bf16.gmra.mxu0 %v4241
        %v4326 = vpop.f32.mrf.mxu0
        %v4327 = vadd.f32 %v4199, %v4326
        %v4328 = vpop.f32.mrf.mxu0
        %v4329 = vadd.f32 %v4199, %v4328
        %4330 = vmatmul.bf16.gmra.mxu0 %v4244
        %v4331 = vpop.f32.mrf.mxu0
        %v4332 = vadd.f32 %v4199, %v4331
        %v4333 = vpop.f32.mrf.mxu0
        %v4334 = vadd.f32 %v4199, %v4333
        %4335 = vmatmul.bf16.gmra.mxu0 %v4247
        %v4336 = vpop.f32.mrf.mxu0
        %v4337 = vadd.f32 %v4199, %v4336
        %v4338 = vpop.f32.mrf.mxu0
        %v4339 = vadd.f32 %v4199, %v4338
        %4340 = vdwg.mxu0
        %v4341 = vld [vmem:[%s7] sm:$0xf]
        %v4342 = vld [vmem:[%s8] sm:$0x1]
        %v4344 = vperm.slane %v4342, 0
        %v4347 = vsel %vm498, %v4341, 0
        %4349 = vmatpush.bf16.msra.mxu0 0
        %4350 = vmatpush.bf16.msra.mxu0 0
        %4351 = vmatpush.bf16.msra.mxu0 0
        %4352 = vmatpush.bf16.msra.mxu0 0
        %4353 = vmatpush.bf16.msra.mxu0 0
        %4354 = vmatpush.bf16.msra.mxu0 0
        %4355 = vmatpush.bf16.msra.mxu0 0
        %4356 = vmatpush.bf16.msra.mxu0 %v4347
        %4357 = vmatmul.bf16.gmra.mxu0 %v451
        %v4358 = vpop.f32.mrf.mxu0
        %v4359 = vadd.f32 %v4344, %v4358
        %v4360 = vpop.f32.mrf.mxu0
        %v4361 = vadd.f32 %v4344, %v4360
        %4362 = vmatmul.bf16.gmra.mxu0 %v454
        %v4363 = vpop.f32.mrf.mxu0
        %v4364 = vadd.f32 %v4344, %v4363
        %v4365 = vpop.f32.mrf.mxu0
        %v4366 = vadd.f32 %v4344, %v4365
        %4367 = vmatmul.bf16.gmra.mxu0 %v457
        %v4368 = vpop.f32.mrf.mxu0
        %v4369 = vadd.f32 %v4344, %v4368
        %v4370 = vpop.f32.mrf.mxu0
        %v4371 = vadd.f32 %v4344, %v4370
        %4372 = vmatmul.bf16.gmra.mxu0 %v460
        %v4373 = vpop.f32.mrf.mxu0
        %v4374 = vadd.f32 %v4344, %v4373
        %v4375 = vpop.f32.mrf.mxu0
        %v4376 = vadd.f32 %v4344, %v4375
        %4377 = vmatmul.bf16.gmra.mxu0 %v463
        %v4378 = vpop.f32.mrf.mxu0
        %v4379 = vadd.f32 %v4344, %v4378
        %v4380 = vpop.f32.mrf.mxu0
        %v4381 = vadd.f32 %v4344, %v4380
        %4382 = vmatmul.bf16.gmra.mxu0 %v466
        %v4383 = vpop.f32.mrf.mxu0
        %v4384 = vadd.f32 %v4344, %v4383
        %v4385 = vpop.f32.mrf.mxu0
        %v4386 = vadd.f32 %v4344, %v4385
        %4387 = vmatmul.bf16.gmra.mxu0 %v469
        %v4388 = vpop.f32.mrf.mxu0
        %v4389 = vadd.f32 %v4344, %v4388
        %v4390 = vpop.f32.mrf.mxu0
        %v4391 = vadd.f32 %v4344, %v4390
        %4392 = vmatmul.bf16.gmra.mxu0 %v472
        %v4393 = vpop.f32.mrf.mxu0
        %v4394 = vadd.f32 %v4344, %v4393
        %v4395 = vpop.f32.mrf.mxu0
        %v4396 = vadd.f32 %v4344, %v4395
        %4397 = vmatmul.bf16.gmra.mxu0 %v475
        %v4398 = vpop.f32.mrf.mxu0
        %v4399 = vadd.f32 %v4344, %v4398
        %v4400 = vpop.f32.mrf.mxu0
        %v4401 = vadd.f32 %v4344, %v4400
        %4402 = vmatmul.bf16.gmra.mxu0 %v478
        %v4403 = vpop.f32.mrf.mxu0
        %v4404 = vadd.f32 %v4344, %v4403
        %v4405 = vpop.f32.mrf.mxu0
        %v4406 = vadd.f32 %v4344, %v4405
        %4407 = vmatmul.bf16.gmra.mxu0 %v481
        %v4408 = vpop.f32.mrf.mxu0
        %v4409 = vadd.f32 %v4344, %v4408
        %v4410 = vpop.f32.mrf.mxu0
        %v4411 = vadd.f32 %v4344, %v4410
        %4412 = vmatmul.bf16.gmra.mxu0 %v484
        %v4413 = vpop.f32.mrf.mxu0
        %v4414 = vadd.f32 %v4344, %v4413
        %v4415 = vpop.f32.mrf.mxu0
        %v4416 = vadd.f32 %v4344, %v4415
        %4417 = vmatmul.bf16.gmra.mxu0 %v487
        %v4418 = vpop.f32.mrf.mxu0
        %v4419 = vadd.f32 %v4344, %v4418
        %v4420 = vpop.f32.mrf.mxu0
        %v4421 = vadd.f32 %v4344, %v4420
        %4422 = vmatmul.bf16.gmra.mxu0 %v490
        %v4423 = vpop.f32.mrf.mxu0
        %v4424 = vadd.f32 %v4344, %v4423
        %v4425 = vpop.f32.mrf.mxu0
        %v4426 = vadd.f32 %v4344, %v4425
        %4427 = vmatmul.bf16.gmra.mxu0 %v493
        %v4428 = vpop.f32.mrf.mxu0
        %v4429 = vadd.f32 %v4344, %v4428
        %v4430 = vpop.f32.mrf.mxu0
        %v4431 = vadd.f32 %v4344, %v4430
        %4432 = vmatmul.bf16.gmra.mxu0 %v496
        %v4433 = vpop.f32.mrf.mxu0
        %v4434 = vadd.f32 %v4344, %v4433
        %v4435 = vpop.f32.mrf.mxu0
        %v4436 = vadd.f32 %v4344, %v4435
        %4437 = vdwg.mxu0
        %v4438 = vadd.f32 %v4262, %v4359
        %v4439 = vadd.f32 %v4264, %v4361
        %v4440 = vadd.f32 %v4267, %v4364
        %v4441 = vadd.f32 %v4269, %v4366
        %v4442 = vadd.f32 %v4272, %v4369
        %v4443 = vadd.f32 %v4274, %v4371
        %v4444 = vadd.f32 %v4277, %v4374
        %v4445 = vadd.f32 %v4279, %v4376
        %v4446 = vadd.f32 %v4282, %v4379
        %v4447 = vadd.f32 %v4284, %v4381
        %v4448 = vadd.f32 %v4287, %v4384
        %v4449 = vadd.f32 %v4289, %v4386
        %v4450 = vadd.f32 %v4292, %v4389
        %v4451 = vadd.f32 %v4294, %v4391
        %v4452 = vadd.f32 %v4297, %v4394
        %v4453 = vadd.f32 %v4299, %v4396
        %v4454 = vadd.f32 %v4302, %v4399
        %v4455 = vadd.f32 %v4304, %v4401
        %v4456 = vadd.f32 %v4307, %v4404
        %v4457 = vadd.f32 %v4309, %v4406
        %v4458 = vadd.f32 %v4312, %v4409
        %v4459 = vadd.f32 %v4314, %v4411
        %v4460 = vadd.f32 %v4317, %v4414
        %v4461 = vadd.f32 %v4319, %v4416
        %v4462 = vadd.f32 %v4322, %v4419
        %v4463 = vadd.f32 %v4324, %v4421
        %v4464 = vadd.f32 %v4327, %v4424
        %v4465 = vadd.f32 %v4329, %v4426
        %v4466 = vadd.f32 %v4332, %v4429
        %v4467 = vadd.f32 %v4334, %v4431
        %v4468 = vadd.f32 %v4337, %v4434
        %v4469 = vadd.f32 %v4339, %v4436
        %v4470 = vmax.f32 %v4438, 0.0
        %v4471 = vmax.f32 %v4439, 0.0
        %v4472 = vmax.f32 %v4440, 0.0
        %v4473 = vmax.f32 %v4441, 0.0
        %v4474 = vmax.f32 %v4442, 0.0
        %v4475 = vmax.f32 %v4443, 0.0
        %v4476 = vmax.f32 %v4444, 0.0
        %v4477 = vmax.f32 %v4445, 0.0
        %v4478 = vmax.f32 %v4446, 0.0
        %v4479 = vmax.f32 %v4447, 0.0
        %v4480 = vmax.f32 %v4448, 0.0
        %v4481 = vmax.f32 %v4449, 0.0
        %v4482 = vmax.f32 %v4450, 0.0
        %v4483 = vmax.f32 %v4451, 0.0
        %v4484 = vmax.f32 %v4452, 0.0
        %v4485 = vmax.f32 %v4453, 0.0
        %v4486 = vmax.f32 %v4454, 0.0
        %v4487 = vmax.f32 %v4455, 0.0
        %v4488 = vmax.f32 %v4456, 0.0
        %v4489 = vmax.f32 %v4457, 0.0
        %v4490 = vmax.f32 %v4458, 0.0
        %v4491 = vmax.f32 %v4459, 0.0
        %v4492 = vmax.f32 %v4460, 0.0
        %v4493 = vmax.f32 %v4461, 0.0
        %v4494 = vmax.f32 %v4462, 0.0
        %v4495 = vmax.f32 %v4463, 0.0
        %v4496 = vmax.f32 %v4464, 0.0
        %v4497 = vmax.f32 %v4465, 0.0
        %v4498 = vmax.f32 %v4466, 0.0
        %v4499 = vmax.f32 %v4467, 0.0
        %v4500 = vmax.f32 %v4468, 0.0
        %v4501 = vmax.f32 %v4469, 0.0
        %4502 = vst [vmem:[%s325] sm:$0xff] %v4470
        %4503 = vst [vmem:[%s325 + $0x8] sm:$0xff] %v4471
        %4504 = vst [vmem:[%s325 + $0x10] sm:$0xff] %v4472
        %4505 = vst [vmem:[%s325 + $0x18] sm:$0xff] %v4473
        %4506 = vst [vmem:[%s325 + $0x20] sm:$0xff] %v4474
        %4507 = vst [vmem:[%s325 + $0x28] sm:$0xff] %v4475
        %4508 = vst [vmem:[%s325 + $0x30] sm:$0xff] %v4476
        %4509 = vst [vmem:[%s325 + $0x38] sm:$0xff] %v4477
        %4510 = vst [vmem:[%s325 + $0x40] sm:$0xff] %v4478
        %4511 = vst [vmem:[%s325 + $0x48] sm:$0xff] %v4479
        %4512 = vst [vmem:[%s325 + $0x50] sm:$0xff] %v4480
        %4513 = vst [vmem:[%s325 + $0x58] sm:$0xff] %v4481
        %4514 = vst [vmem:[%s325 + $0x60] sm:$0xff] %v4482
        %4515 = vst [vmem:[%s325 + $0x68] sm:$0xff] %v4483
        %4516 = vst [vmem:[%s325 + $0x70] sm:$0xff] %v4484
        %4517 = vst [vmem:[%s325 + $0x78] sm:$0xff] %v4485
        %4518 = vst [vmem:[%s325 + $0x80] sm:$0xff] %v4486
        %4519 = vst [vmem:[%s325 + $0x88] sm:$0xff] %v4487
        %4520 = vst [vmem:[%s325 + $0x90] sm:$0xff] %v4488
        %4521 = vst [vmem:[%s325 + $0x98] sm:$0xff] %v4489
        %4522 = vst [vmem:[%s325 + $0xa0] sm:$0xff] %v4490
        %4523 = vst [vmem:[%s325 + $0xa8] sm:$0xff] %v4491
        %4524 = vst [vmem:[%s325 + $0xb0] sm:$0xff] %v4492
        %4525 = vst [vmem:[%s325 + $0xb8] sm:$0xff] %v4493
        %4526 = vst [vmem:[%s325 + $0xc0] sm:$0xff] %v4494
        %4527 = vst [vmem:[%s325 + $0xc8] sm:$0xff] %v4495
        %4528 = vst [vmem:[%s325 + $0xd0] sm:$0xff] %v4496
        %4529 = vst [vmem:[%s325 + $0xd8] sm:$0xff] %v4497
        %4530 = vst [vmem:[%s325 + $0xe0] sm:$0xff] %v4498
        %4531 = vst [vmem:[%s325 + $0xe8] sm:$0xff] %v4499
        %4532 = vst [vmem:[%s325 + $0xf0] sm:$0xff] %v4500
        %4533 = vst [vmem:[%s325 + $0xf8] sm:$0xff] %v4501
        %s4534 = sand.u32 %s225, 1
        %s4535 = scalar_lea.sflag [#allocation4], %s4534
        %s4536 = sand.u32 %s225, 1
        %s4537 = smul.addr %s4536, 256
        %s4538 = scalar_lea.vmem [#allocation3], %s4537
        // Predicated region
        $region57: #{tpu_custom_call.1} parent=55 // pred_check
          %p4539 = pneg %p235
        $region58: #{tpu_custom_call.1} parent=55 // pred_check_branch
          %4541 = sbr.rel (%p4539) target = $region60
        $region59: #{tpu_custom_call.1} parent=55 // pred_region
          %4543 = vsyncadd %s4535, 0
          %s4544 = smul.addr %s23, 32
          %s4545 = smul.addr %s4544, 8
          %s4546 = scalar_lea.hbm %s9, %s4545
          %s4547 = sshll.u32 %s4538, 4
          %s4548 = int_to_ptr.vmem [resolvable:$true] %s4547
          %s4549 = sshll.u32 %s4546, 4
          %s4550 = int_to_ptr.hbm [resolvable:$true] %s4549
          %4555 = dma.vmem_to_hbm [thread:$0]  %s4548, 4096, %s4550, %s4535, 128, 128, 8
        $region60: #{tpu_custom_call.1} parent=55 // pred_fallthru
          _
      $region56: #{tpu_custom_call.1} parent=5 // pred_fallthru
        _
      %p4556 = scmp.le.s32.totalorder 2, %s18
      // Predicated region
      $region61: #{tpu_custom_call.1} parent=5 // pred_check
        %p4557 = pneg %p4556
      $region62: #{tpu_custom_call.1} parent=5 // pred_check_branch
        %4559 = sbr.rel (%p4557) target = $region64
      $region63: #{tpu_custom_call.1} parent=5 // pred_region
        %s4560 = ssub.s32 %s18, 2
        // Predicated region
        $region65: #{tpu_custom_call.1} parent=63 // pred_check
          %p4561 = pneg %p241
        $region66: #{tpu_custom_call.1} parent=63 // pred_check_branch
          %4563 = sbr.rel (%p4561) target = $region68
        $region67: #{tpu_custom_call.1} parent=63 // pred_region
          %s4564 = sand.u32 %s226, 1
          %s4565 = scalar_lea.sflag [#allocation4], %s4564
          %s4566 = sand.u32 %s226, 1
          %s4567 = smul.addr %s4566, 256
          %s4568 = scalar_lea.vmem [#allocation3], %s4567
          %4570 = dma.done %s4565, 4096
        $region68: #{tpu_custom_call.1} parent=63 // pred_fallthru
          _
      $region64: #{tpu_custom_call.1} parent=5 // pred_fallthru
        _
    $region6: #{tpu_custom_call.1} parent=1 // loop_footer
      %s22 = sadd.s32 1, %s18
    $region7: #{tpu_custom_call.1} parent=1 // loop_footer_branch
      %17 = sbr.rel target = $region3
    $region8: #{tpu_custom_call.1} parent=1 // loop_exit
      _
    %4571 = vsyncpa [#allocation4], 1
    %s4572 = scalar_lea.sflag [#allocation4], 1
    %4573 = vsyncpa %s4572, 1

</llo_original>
